<compile_context>
chip_gen: v5e
topology: v5e:2x2
jax: 0.10.0
libtpu: 0.0.40
codegen_flags: <defaults>
</compile_context>

<pallas_src>
import functools

import jax
import jax.numpy as jnp
from jax.experimental import pallas as pl
from jax.experimental.pallas import tpu as pltpu

FP16_HUGE = 2.0 ** 15
LN_EPS = 1e-5


def _layer_norm(x, gamma, beta):
    mu = jnp.mean(x, axis=-1, keepdims=True)
    var = jnp.mean(jnp.square(x - mu), axis=-1, keepdims=True)
    xn = (x - mu) * jax.lax.rsqrt(var + LN_EPS)
    return xn * gamma[None, None, :] + beta[None, None, :]


def _nb_kernel(pair_ref, gamma_ref, beta_ref, w2d_ref, nb_ref):
    """nonbatched_bias = linear_2d(LayerNorm(pair_act)), head-leading bf16 layout.

    pair_ref: [1, TR, N, D] (bf16)    nb_ref: [1, H, TR, N] (bf16)
    """
    num_head = w2d_ref.shape[0]
    x = pair_ref[0].astype(jnp.float32)                       # [TR, N, D]
    xn = _layer_norm(x, gamma_ref[0], beta_ref[0])
    # TODO(synk): this VPU multiply + lane reduction could move to the MXU
    # ([H,D] x [TR*N,D]^T), but the required [H,TR*N]->[H,TR,N] minor-dim
    # reshape is an unproven Mosaic relayout at small N; pass 1 stays within
    # ~1.4x of its HBM floor as-is, so the proven form is kept.
    for h in range(num_head):                                 # static unroll (H small)
        w_h = w2d_ref[h]                                      # fp32, leading-axis index
        nb_ref[0, h] = jnp.sum(xn * w_h[None, None, :], axis=-1).astype(nb_ref.dtype)


def _tri_attn_kernel(pair_ref, mask_ref, nb_ref,
                     gamma_ref, beta_ref, wqkvg_ref, bg_ref, wo_ref, bo_ref,
                     out_ref, wa_ref, *, num_head):
    """LayerNorm -> fused q/k/v/g projection -> per-row multi-head attention
    (deferred softmax normalization) -> gating -> single K=D output projection
    -> query mask. Operates on one [TR, N, D] row tile of one batch element."""
    TR, N, D = pair_ref.shape[1], pair_ref.shape[2], pair_ref.shape[3]
    H = num_head
    dk = D // H

    x = pair_ref[0].astype(jnp.float32)                       # [TR, N, D]
    mask = mask_ref[0].astype(jnp.float32)                    # [TR, N]

    xn = _layer_norm(x, gamma_ref[0], beta_ref[0])            # fp32

    # ---- fused projection: one lane-dense bf16 MXU matmul, fp32 accumulation.
    # Columns of wqkvg are [q*key_scale | k | v | g], each D wide (head-major).
    xf = xn.reshape(TR * N, D).astype(jnp.bfloat16)
    proj = jnp.dot(xf, wqkvg_ref[...], preferred_element_type=jnp.float32)

    q = proj[:, 0 * D:1 * D]
    k = proj[:, 1 * D:2 * D]
    v = proj[:, 2 * D:3 * D]
    g = jax.nn.sigmoid(proj[:, 3 * D:4 * D] + bg_ref[0][None, :])   # [TR*N, D] fp32

    # Key-mask bias kept [TR, 1, N]; broadcasts along the q (sublane) axis
    # inside the logits add -- never materialized as [TR, N, N].
    bias = (FP16_HUGE * (mask - 1.0))[:, None, :]

    for h in range(H):                                        # static unroll over heads
        # TODO(synk): fully head-batched einsums would drop these dk-wide lane
        # slices, but need a [TR,N,H,dk]->[TR,H,N,dk] in-kernel relayout whose
        # Mosaic lowering is unproven; the single-batch einsum pattern is kept.
        sl = slice(h * dk, (h + 1) * dk)
        q_h = q[:, sl].reshape(TR, N, dk).astype(jnp.bfloat16)
        k_h = k[:, sl].reshape(TR, N, dk).astype(jnp.bfloat16)
        v_h = v[:, sl].reshape(TR, N, dk).astype(jnp.bfloat16)

        logits = jnp.einsum('rqc,rkc->rqk', q_h, k_h,
                            preferred_element_type=jnp.float32)        # [TR, N, N]
        logits = logits + bias + nb_ref[0, h].astype(jnp.float32)

        # softmax with deferred normalization: fp32 stats, unnormalized p into
        # the PV matmul, EUP approx reciprocal applied to the [TR,N,dk] result.
        m = jnp.max(logits, axis=-1, keepdims=True)
        p = jnp.exp(logits - m)
        s = jnp.sum(p, axis=-1, keepdims=True)

        ctx = jnp.einsum('rqk,rkc->rqc', p.astype(jnp.bfloat16), v_h,
                         preferred_element_type=jnp.float32)            # [TR, N, dk]
        ctx = ctx * pl.reciprocal(s, approx=True)
        wa_ref[:, sl] = ctx.reshape(TR * N, dk)               # head-major scratch

    # gating + single K=D output projection (full MXU contraction depth).
    wa = (wa_ref[...] * g).astype(jnp.bfloat16)               # [TR*N, D]
    out = jnp.dot(wa, wo_ref[...], preferred_element_type=jnp.float32)
    out = out + bo_ref[0][None, :]
    out = out.reshape(TR, N, D) * mask[:, :, None]
    out_ref[0] = out.astype(out_ref.dtype)


def _vmem_capacity_bytes():
    """Physical per-core VMEM capacity; conservative (v7x-sized) fallback."""
    try:
        info = pltpu.get_tpu_info()
        cap = getattr(info, "vmem_capacity_bytes", None)
        if cap:
            return int(cap)
    except Exception:
        pass
    return 64 * 2 ** 20


def _vmem_bytes_estimate(tr, n, d, h):
    """Rough per-grid-step VMEM working set of the attention pass."""
    io = 2 * (tr * n * d * 2          # pair tile (bf16), double-buffered
              + tr * n * 4            # mask tile
              + tr * n * d * 4)       # output tile (fp32)
    nb_resident = h * n * n * 2       # single-buffered bf16 nonbatched bias
    acts = 14 * tr * n * d * 4        # xn, proj(4D), g, wa scratch, out temps
    attn = 3 * tr * n * n * 4         # logits / p / bf16 p live per head
    wts = 2 * (4 * d * d + d * d) * 2 + 8 * d * 4
    return int(io + nb_resident + acts + attn + wts)


def _choose_row_tile(n, d, h, budget_bytes):
    # bf16 nb output blocks need the second-minor (row-tile) dim to be a
    # multiple of 16, or the full axis.
    cands = [t for t in range(n, 0, -1)
             if n % t == 0 and (t % 16 == 0 or t == n)]
    for t in cands:
        if _vmem_bytes_estimate(t, n, d, h) <= budget_bytes:
            return t
    return cands[-1]


def triangle_attention(pair_act, pair_mask, params, *, num_head,
                       per_column=False, row_tile=None):
    """TriangleAttention forward (gating=True, out_single=False, no sub-batching)."""
    if per_column:
        pair_act = jnp.swapaxes(pair_act, -2, -3)
        pair_mask = jnp.swapaxes(pair_mask, -1, -2)

    B, N, _, D = pair_act.shape
    H = num_head
    dk = D // H
    key_scale = dk ** -0.5
    out_dtype = pair_act.dtype

    cap = _vmem_capacity_bytes()
    budget = int(0.70 * cap)                              # generation-aware tile budget
    TR = row_tile if row_tile is not None else _choose_row_tile(N, D, H, budget)
    assert N % TR == 0 and (TR % 16 == 0 or TR == N), (N, TR)

    f32, bf16 = jnp.float32, jnp.bfloat16

    # bf16 activations at the kernel boundary (halves the dominant HBM reads);
    # LayerNorm / softmax statistics stay fp32 inside the kernels.
    pair_in = pair_act.astype(bf16)
    mask_in = pair_mask.astype(f32)

    gamma = params['ln_gamma'].reshape(1, D).astype(f32)
    beta = params['ln_beta'].reshape(1, D).astype(f32)
    bg = params['bg'].reshape(1, D).astype(f32)
    bo = params['bo'].reshape(1, D).astype(f32)
    w2d = params['w2d'].astype(f32)                                        # [H, D]

    # Pre-transposed + fused projection weight (key_scale folded into q block).
    wqkvg = jnp.concatenate(
        [params['wq'].T * key_scale, params['wk'].T,
         params['wv'].T, params['wg'].T], axis=1).astype(bf16)             # [D, 4D]
    wo_t = params['wo'].T.astype(bf16)                                     # [D, D]

    grid = (B, N // TR)
    par = ("parallel", "parallel")

    est = _vmem_bytes_estimate(TR, N, D, H)
    vmem_limit = int(min(0.95 * cap, max(32 * 2 ** 20, 1.3 * est)))

    def const(shape):
        nd = len(shape)
        return pl.BlockSpec(shape, lambda b, r, _nd=nd: (0,) * _nd)

    # --- pass 1: nonbatched bias [B, H, N, N] (bf16, head-leading). It depends
    #     on the FULL pair tensor indexed by (q, k), so it cannot be computed
    #     inside a row tile; LayerNorm is recomputed in pass 2 instead of paying
    #     an extra [B,N,N,D] HBM round trip for xn.
    nb = pl.pallas_call(
        _nb_kernel,
        grid=grid,
        in_specs=[
            pl.BlockSpec((1, TR, N, D), lambda b, r: (b, r, 0, 0)),
            const(gamma.shape), const(beta.shape), const(w2d.shape),
        ],
        out_specs=pl.BlockSpec((1, H, TR, N), lambda b, r: (b, 0, r, 0)),
        out_shape=jax.ShapeDtypeStruct((B, H, N, N), bf16),
        compiler_params=pltpu.CompilerParams(
            dimension_semantics=par, vmem_limit_bytes=vmem_limit),
    )(pair_in, gamma, beta, w2d)

    # --- pass 2: fused attention over row tiles ---
    # TODO(synk): for very large N (or B=1) a third parallel q-tile grid axis
    # would shrink the [TR,N,N] softmax temporaries further on v7x.
    def run_attention(nb_pipeline_mode):
        if nb_pipeline_mode is None:
            nb_spec = pl.BlockSpec((1, H, N, N), lambda b, r: (b, 0, 0, 0))
        else:
            nb_spec = pl.BlockSpec((1, H, N, N), lambda b, r: (b, 0, 0, 0),
                                   pipeline_mode=nb_pipeline_mode)
        return pl.pallas_call(
            functools.partial(_tri_attn_kernel, num_head=H),
            grid=grid,
            in_specs=[
                pl.BlockSpec((1, TR, N, D), lambda b, r: (b, r, 0, 0)),   # pair tile
                pl.BlockSpec((1, TR, N), lambda b, r: (b, r, 0)),         # mask tile
                nb_spec,                                                  # nb (per batch)
                const(gamma.shape), const(beta.shape), const(wqkvg.shape),
                const(bg.shape), const(wo_t.shape), const(bo.shape),
            ],
            out_specs=pl.BlockSpec((1, TR, N, D), lambda b, r: (b, r, 0, 0)),
            out_shape=jax.ShapeDtypeStruct((B, N, N, D), out_dtype),
            scratch_shapes=[pltpu.VMEM((TR * N, D), f32)],                # gated context
            compiler_params=pltpu.CompilerParams(
                dimension_semantics=par, vmem_limit_bytes=vmem_limit),
        )(pair_in, mask_in, nb, gamma, beta, wqkvg, bg, wo_t, bo)

    try:
        # nb block index only changes with the batch axis: keep it single-buffered.
        out = run_attention(pl.Buffered(1))
    except Exception:
        # TODO(synk): fallback if this JAX build rejects Buffered(1); only costs
        # 2x the resident nb VMEM, semantics are identical.
        out = run_attention(None)

    if per_column:
        out = jnp.swapaxes(out, -2, -3)
    return out


# TODO(synk): config.out_single head, sharded_layer sub-batching and the
# is_template_stack inference loop are omitted (all disabled in this config).


def triangle_attention_reference(pair_act, pair_mask, params, *, num_head):
    """Pure-JAX fp32 reference mirroring the PyTorch forward (per_row)."""
    x = pair_act.astype(jnp.float32)
    mu = x.mean(-1, keepdims=True)
    var = ((x - mu) ** 2).mean(-1, keepdims=True)
    xn = (x - mu) / jnp.sqrt(var + LN_EPS) * params['ln_gamma'] + params['ln_beta']

    B, N, _, D = x.shape
    dk = D // num_head
    nb = jnp.einsum('bqkd,hd->bhqk', xn, params['w2d'])
    bias = FP16_HUGE * (pair_mask.astype(jnp.float32) - 1.0)

    q = jnp.einsum('brqd,ed->brqe', xn, params['wq']) * dk ** -0.5
    k = jnp.einsum('brkd,ed->brke', xn, params['wk'])
    v = jnp.einsum('brkd,ed->brke', xn, params['wv'])
    g = jax.nn.sigmoid(jnp.einsum('brqd,ed->brqe', xn, params['wg']) + params['bg'])

    q = q.reshape(B, N, N, num_head, dk)
    k = k.reshape(B, N, N, num_head, dk)
    v = v.reshape(B, N, N, num_head, dk)
    g = g.reshape(B, N, N, num_head, dk)

    logits = (jnp.einsum('brqhc,brkhc->brhqk', q, k)
              + bias[:, :, None, None, :] + nb[:, None, :, :, :])
    w = jax.nn.softmax(logits, axis=-1)
    wa = jnp.einsum('brhqk,brkhc->brqhc', w, v) * g
    wa = wa.reshape(B, N, N, num_head * dk)
    out = jnp.einsum('brqe,oe->brqo', wa, params['wo']) + params['bo']
    return out * pair_mask[..., None]


def make_params(key, num_channels, num_head):
    D, H = num_channels, num_head
    ks = jax.random.split(key, 10)
    scale = 0.1
    return {
        'ln_gamma': 1.0 + 0.05 * jax.random.normal(ks[0], (D,), jnp.float32),
        'ln_beta': 0.05 * jax.random.normal(ks[1], (D,), jnp.float32),
        'w2d': scale * jax.random.normal(ks[2], (H, D), jnp.float32),   # linear_2d
        'wq': scale * jax.random.normal(ks[3], (D, D), jnp.float32),    # [out, in]
        'wk': scale * jax.random.normal(ks[4], (D, D), jnp.float32),
        'wv': scale * jax.random.normal(ks[5], (D, D), jnp.float32),
        'wg': scale * jax.random.normal(ks[6], (D, D), jnp.float32),
        'bg': jnp.ones((D,), jnp.float32),                              # gating bias init = 1
        'wo': scale * jax.random.normal(ks[7], (D, D), jnp.float32),
        'bo': 0.05 * jax.random.normal(ks[8], (D,), jnp.float32),
    }


if __name__ == "__main__":
    B, N, D, H = 2, 32, 32, 4
    key = jax.random.PRNGKey(0)
    k_act, k_mask, k_par = jax.random.split(key, 3)

    pair_act = jax.random.normal(k_act, (B, N, N, D), jnp.float32)
    pair_mask = (jax.random.uniform(k_mask, (B, N, N)) > 0.2).astype(jnp.float32)
    params = make_params(k_par, D, H)

    # row_tile=16 exercises the tiled (B, N//TR) grid path (bf16 nb tiles need
    # the row tile to be a multiple of 16, or the full row axis).
    out = triangle_attention(pair_act, pair_mask, params, num_head=H, row_tile=16)
    out = jax.block_until_ready(out)

    ref = triangle_attention_reference(pair_act, pair_mask, params, num_head=H)
    ref = jax.block_until_ready(ref)

    assert out.shape == (B, N, N, D)
    max_err = float(jnp.max(jnp.abs(out - ref)))
    assert jnp.allclose(out, ref, atol=2e-2, rtol=2e-2), max_err
    print("KERNEL_OK")
</pallas_src>

<mosaic_0001>
module attributes {stable_mosaic.version = 11 : i64} {
  func.func @_nb_kernel(%arg0: i32, %arg1: i32, %arg2: memref<1x16x32x32xbf16, #tpu.memory_space<vmem>>, %arg3: memref<1x32xf32, #tpu.memory_space<vmem>>, %arg4: memref<1x32xf32, #tpu.memory_space<vmem>>, %arg5: memref<4x32xf32, #tpu.memory_space<vmem>>, %arg6: memref<1x4x16x32xbf16, #tpu.memory_space<vmem>>) attributes {dimension_semantics = [#tpu.dimension_semantics<parallel>, #tpu.dimension_semantics<parallel>], iteration_bounds = array<i64: 2, 2>, scalar_prefetch = 0 : i64, scratch_operands = 0 : i64, tpu.core_type = #tpu.core_type<tc>, window_params = [{transform_indices = @transform_0, window_bounds = array<i64: 1, 16, 32, 32>}, {pipeline_mode = #tpu.pipeline_mode<synchronous>, transform_indices = @transform_1, window_bounds = array<i64: 1, 32>}, {pipeline_mode = #tpu.pipeline_mode<synchronous>, transform_indices = @transform_2, window_bounds = array<i64: 1, 32>}, {pipeline_mode = #tpu.pipeline_mode<synchronous>, transform_indices = @transform_3, window_bounds = array<i64: 4, 32>}, {transform_indices = @transform_4, window_bounds = array<i64: 1, 4, 16, 32>}]} {
    %c0 = arith.constant 0 : index
    %c0_0 = arith.constant 0 : index
    %c0_1 = arith.constant 0 : index
    %c0_2 = arith.constant 0 : index
    %0 = vector.load %arg2[%c0, %c0_0, %c0_1, %c0_2] : memref<1x16x32x32xbf16, #tpu.memory_space<vmem>>, vector<1x16x32x32xbf16>
    %1 = vector.shape_cast %0 : vector<1x16x32x32xbf16> to vector<16x32x32xbf16>
    %2 = arith.extf %1 : vector<16x32x32xbf16> to vector<16x32x32xf32>
    %c0_3 = arith.constant 0 : index
    %c0_4 = arith.constant 0 : index
    %3 = vector.load %arg3[%c0_3, %c0_4] : memref<1x32xf32, #tpu.memory_space<vmem>>, vector<1x32xf32>
    %4 = vector.shape_cast %3 : vector<1x32xf32> to vector<32xf32>
    %c0_5 = arith.constant 0 : index
    %c0_6 = arith.constant 0 : index
    %5 = vector.load %arg4[%c0_5, %c0_6] : memref<1x32xf32, #tpu.memory_space<vmem>>, vector<1x32xf32>
    %6 = vector.shape_cast %5 : vector<1x32xf32> to vector<32xf32>
    %cst = arith.constant dense<0.000000e+00> : vector<16x32xf32>
    %7 = vector.multi_reduction <add>, %2, %cst [2] : vector<16x32x32xf32> to vector<16x32xf32>
    %8 = vector.shape_cast %7 : vector<16x32xf32> to vector<16x32x1xf32>
    %cst_7 = arith.constant 3.200000e+01 : f32
    %9 = vector.broadcast %cst_7 : f32 to vector<16x32x1xf32>
    %10 = arith.divf %8, %9 : vector<16x32x1xf32>
    %11 = vector.broadcast %10 : vector<16x32x1xf32> to vector<16x32x32xf32>
    %12 = arith.subf %2, %11 : vector<16x32x32xf32>
    %13 = arith.mulf %12, %12 : vector<16x32x32xf32>
    %cst_8 = arith.constant dense<0.000000e+00> : vector<16x32xf32>
    %14 = vector.multi_reduction <add>, %13, %cst_8 [2] : vector<16x32x32xf32> to vector<16x32xf32>
    %15 = vector.shape_cast %14 : vector<16x32xf32> to vector<16x32x1xf32>
    %cst_9 = arith.constant 3.200000e+01 : f32
    %16 = vector.broadcast %cst_9 : f32 to vector<16x32x1xf32>
    %17 = arith.divf %15, %16 : vector<16x32x1xf32>
    %18 = vector.broadcast %10 : vector<16x32x1xf32> to vector<16x32x32xf32>
    %19 = arith.subf %2, %18 : vector<16x32x32xf32>
    %cst_10 = arith.constant 9.99999974E-6 : f32
    %20 = vector.broadcast %cst_10 : f32 to vector<16x32x1xf32>
    %21 = arith.addf %17, %20 : vector<16x32x1xf32>
    %22 = math.rsqrt %21 : vector<16x32x1xf32>
    %23 = vector.broadcast %22 : vector<16x32x1xf32> to vector<16x32x32xf32>
    %24 = arith.mulf %19, %23 : vector<16x32x32xf32>
    %25 = vector.shape_cast %4 : vector<32xf32> to vector<1x1x32xf32>
    %26 = vector.broadcast %25 : vector<1x1x32xf32> to vector<16x32x32xf32>
    %27 = arith.mulf %24, %26 : vector<16x32x32xf32>
    %28 = vector.shape_cast %6 : vector<32xf32> to vector<1x1x32xf32>
    %29 = vector.broadcast %28 : vector<1x1x32xf32> to vector<16x32x32xf32>
    %30 = arith.addf %27, %29 : vector<16x32x32xf32>
    %c0_11 = arith.constant 0 : index
    %c0_12 = arith.constant 0 : index
    %31 = vector.load %arg5[%c0_11, %c0_12] : memref<4x32xf32, #tpu.memory_space<vmem>>, vector<1x32xf32>
    %32 = vector.shape_cast %31 : vector<1x32xf32> to vector<32xf32>
    %33 = vector.shape_cast %32 : vector<32xf32> to vector<1x1x32xf32>
    %34 = vector.broadcast %33 : vector<1x1x32xf32> to vector<16x32x32xf32>
    %35 = arith.mulf %30, %34 : vector<16x32x32xf32>
    %cst_13 = arith.constant dense<0.000000e+00> : vector<16x32xf32>
    %36 = vector.multi_reduction <add>, %35, %cst_13 [2] : vector<16x32x32xf32> to vector<16x32xf32>
    %37 = arith.truncf %36 : vector<16x32xf32> to vector<16x32xbf16>
    %c0_14 = arith.constant 0 : index
    %c0_15 = arith.constant 0 : index
    %c0_16 = arith.constant 0 : index
    %c0_17 = arith.constant 0 : index
    %38 = vector.load %arg6[%c0_14, %c0_15, %c0_16, %c0_17] : memref<1x4x16x32xbf16, #tpu.memory_space<vmem>>, vector<1x1x16x32xbf16>
    %39 = vector.shape_cast %38 : vector<1x1x16x32xbf16> to vector<16x32xbf16>
    %40 = vector.shape_cast %37 : vector<16x32xbf16> to vector<1x1x16x32xbf16>
    tpu.vector_store %arg6[%c0_14, %c0_15, %c0_16, %c0_17], %40 {strides = array<i32>} : memref<1x4x16x32xbf16, #tpu.memory_space<vmem>>, vector<1x1x16x32xbf16>,
    %c1 = arith.constant 1 : index
    %c0_18 = arith.constant 0 : index
    %41 = vector.load %arg5[%c1, %c0_18] : memref<4x32xf32, #tpu.memory_space<vmem>>, vector<1x32xf32>
    %42 = vector.shape_cast %41 : vector<1x32xf32> to vector<32xf32>
    %43 = vector.shape_cast %42 : vector<32xf32> to vector<1x1x32xf32>
    %44 = vector.broadcast %43 : vector<1x1x32xf32> to vector<16x32x32xf32>
    %45 = arith.mulf %30, %44 : vector<16x32x32xf32>
    %cst_19 = arith.constant dense<0.000000e+00> : vector<16x32xf32>
    %46 = vector.multi_reduction <add>, %45, %cst_19 [2] : vector<16x32x32xf32> to vector<16x32xf32>
    %47 = arith.truncf %46 : vector<16x32xf32> to vector<16x32xbf16>
    %c0_20 = arith.constant 0 : index
    %c1_21 = arith.constant 1 : index
    %c0_22 = arith.constant 0 : index
    %c0_23 = arith.constant 0 : index
    %48 = vector.load %arg6[%c0_20, %c1_21, %c0_22, %c0_23] : memref<1x4x16x32xbf16, #tpu.memory_space<vmem>>, vector<1x1x16x32xbf16>
    %49 = vector.shape_cast %48 : vector<1x1x16x32xbf16> to vector<16x32xbf16>
    %50 = vector.shape_cast %47 : vector<16x32xbf16> to vector<1x1x16x32xbf16>
    tpu.vector_store %arg6[%c0_20, %c1_21, %c0_22, %c0_23], %50 {strides = array<i32>} : memref<1x4x16x32xbf16, #tpu.memory_space<vmem>>, vector<1x1x16x32xbf16>,
    %c2 = arith.constant 2 : index
    %c0_24 = arith.constant 0 : index
    %51 = vector.load %arg5[%c2, %c0_24] : memref<4x32xf32, #tpu.memory_space<vmem>>, vector<1x32xf32>
    %52 = vector.shape_cast %51 : vector<1x32xf32> to vector<32xf32>
    %53 = vector.shape_cast %52 : vector<32xf32> to vector<1x1x32xf32>
    %54 = vector.broadcast %53 : vector<1x1x32xf32> to vector<16x32x32xf32>
    %55 = arith.mulf %30, %54 : vector<16x32x32xf32>
    %cst_25 = arith.constant dense<0.000000e+00> : vector<16x32xf32>
    %56 = vector.multi_reduction <add>, %55, %cst_25 [2] : vector<16x32x32xf32> to vector<16x32xf32>
    %57 = arith.truncf %56 : vector<16x32xf32> to vector<16x32xbf16>
    %c0_26 = arith.constant 0 : index
    %c2_27 = arith.constant 2 : index
    %c0_28 = arith.constant 0 : index
    %c0_29 = arith.constant 0 : index
    %58 = vector.load %arg6[%c0_26, %c2_27, %c0_28, %c0_29] : memref<1x4x16x32xbf16, #tpu.memory_space<vmem>>, vector<1x1x16x32xbf16>
    %59 = vector.shape_cast %58 : vector<1x1x16x32xbf16> to vector<16x32xbf16>
    %60 = vector.shape_cast %57 : vector<16x32xbf16> to vector<1x1x16x32xbf16>
    tpu.vector_store %arg6[%c0_26, %c2_27, %c0_28, %c0_29], %60 {strides = array<i32>} : memref<1x4x16x32xbf16, #tpu.memory_space<vmem>>, vector<1x1x16x32xbf16>,
    %c3 = arith.constant 3 : index
    %c0_30 = arith.constant 0 : index
    %61 = vector.load %arg5[%c3, %c0_30] : memref<4x32xf32, #tpu.memory_space<vmem>>, vector<1x32xf32>
    %62 = vector.shape_cast %61 : vector<1x32xf32> to vector<32xf32>
    %63 = vector.shape_cast %62 : vector<32xf32> to vector<1x1x32xf32>
    %64 = vector.broadcast %63 : vector<1x1x32xf32> to vector<16x32x32xf32>
    %65 = arith.mulf %30, %64 : vector<16x32x32xf32>
    %cst_31 = arith.constant dense<0.000000e+00> : vector<16x32xf32>
    %66 = vector.multi_reduction <add>, %65, %cst_31 [2] : vector<16x32x32xf32> to vector<16x32xf32>
    %67 = arith.truncf %66 : vector<16x32xf32> to vector<16x32xbf16>
    %c0_32 = arith.constant 0 : index
    %c3_33 = arith.constant 3 : index
    %c0_34 = arith.constant 0 : index
    %c0_35 = arith.constant 0 : index
    %68 = vector.load %arg6[%c0_32, %c3_33, %c0_34, %c0_35] : memref<1x4x16x32xbf16, #tpu.memory_space<vmem>>, vector<1x1x16x32xbf16>
    %69 = vector.shape_cast %68 : vector<1x1x16x32xbf16> to vector<16x32xbf16>
    %70 = vector.shape_cast %67 : vector<16x32xbf16> to vector<1x1x16x32xbf16>
    tpu.vector_store %arg6[%c0_32, %c3_33, %c0_34, %c0_35], %70 {strides = array<i32>} : memref<1x4x16x32xbf16, #tpu.memory_space<vmem>>, vector<1x1x16x32xbf16>,
    return
  }
  func.func @transform_0(%arg0: i32, %arg1: i32) -> (i32, i32, i32, i32) {
    %c0_i32 = arith.constant 0 : i32
    %c0_i32_0 = arith.constant 0 : i32
    %c0_i32_1 = arith.constant 0 : i32
    return %arg0, %arg1, %c0_i32, %c0_i32_0 : i32, i32, i32, i32
  }
  func.func @transform_1(%arg0: i32, %arg1: i32) -> (i32, i32) {
    %c0_i32 = arith.constant 0 : i32
    %c0_i32_0 = arith.constant 0 : i32
    %c0_i32_1 = arith.constant 0 : i32
    return %c0_i32, %c0_i32_0 : i32, i32
  }
  func.func @transform_2(%arg0: i32, %arg1: i32) -> (i32, i32) {
    %c0_i32 = arith.constant 0 : i32
    %c0_i32_0 = arith.constant 0 : i32
    %c0_i32_1 = arith.constant 0 : i32
    return %c0_i32, %c0_i32_0 : i32, i32
  }
  func.func @transform_3(%arg0: i32, %arg1: i32) -> (i32, i32) {
    %c0_i32 = arith.constant 0 : i32
    %c0_i32_0 = arith.constant 0 : i32
    %c0_i32_1 = arith.constant 0 : i32
    return %c0_i32, %c0_i32_0 : i32, i32
  }
  func.func @transform_4(%arg0: i32, %arg1: i32) -> (i32, i32, i32, i32) {
    %c0_i32 = arith.constant 0 : i32
    %c0_i32_0 = arith.constant 0 : i32
    %c0_i32_1 = arith.constant 0 : i32
    return %arg0, %c0_i32, %arg1, %c0_i32_0 : i32, i32, i32, i32
  }
}

</mosaic_0001>

<llo_original>
// kernel: tpu_custom_call.1
$region0: #{tpu_custom_call.1}
  #allocation0 [shape = 'u32[]', space=smem, size = 0x4, offset = 0x4, fixed_abs, tag = 'smem constant byte address 0x4 - core index']
  #allocation1 [shape = 'u32[72,128]{1,0:T(1,128)}', space=vmem, size = 0x9000, scoped, tag = 'internal scratch']
  #allocation9 [shape = 's32[]', space=sflag, size = 0x4, offset = 0, fixed_abs, tag = 'sflag constant byte address 0x0 - dummy sync flag']
  %s0 = inlined_call_operand.hbm [shape: bf16[2,32,32,32], index: 0, kind: input, shape index: {}]
  %s1 = inlined_call_operand.hbm [shape: f32[1,32], index: 1, kind: input, shape index: {}]
  %s2 = inlined_call_operand.vmem [shape: f32[1,32], index: 2, kind: input, shape index: {}]
  %s3 = inlined_call_operand.hbm [shape: f32[4,32], index: 3, kind: input, shape index: {}]
  %s4 = inlined_call_operand.hbm [shape: bf16[2,4,32,32], index: 4, kind: output, shape index: {}]
  %s5 = sld [smem:[#allocation0]]
  $region61: #{tpu_custom_call.1} parent=0
    _
  %s7 = ssub.s32 1, %s5
  %s8 = scalar_select 0, %s7, %s5
  $region1: #{tpu_custom_call.1} parent=0
    #allocation2 [shape = 'u8[262144]{0}', space=vmem, size = 0x40000, scoped, tag = 'input window, operand 0']
    #allocation3 [shape = 's32[2]{0}', space=sflag, size = 0x8, scoped, tag = 'scoped memory for tpu_custom_call.1']
    #allocation4 [shape = 's32[2]{0}', space=sflag, size = 0x8, scoped, tag = 'scoped memory for tpu_custom_call.1']
    #allocation5 [shape = 'u8[512]{0}', space=vmem, size = 0x400, scoped, tag = 'input window, operand 1, single buffered']
    #allocation6 [shape = 's32[1]{0}', space=sflag, size = 0x4, scoped, tag = 'scoped memory for tpu_custom_call.1']
    #allocation7 [shape = 'u8[2048]{0}', space=vmem, size = 0x800, scoped, tag = 'input window, operand 3, single buffered']
    #allocation8 [shape = 'u8[32768]{0}', space=vmem, size = 0x8000, scoped, tag = 'output window, operand 0']
    %9 = vsyncpa [#allocation3], 0
    %s10 = scalar_lea.sflag [#allocation3], 1
    %11 = vsyncpa %s10, 0
    %12 = vsyncpa [#allocation6], 0
    %13 = vsyncpa [#allocation4], 0
    %s14 = scalar_lea.sflag [#allocation4], 1
    %15 = vsyncpa %s14, 0
    loop: start=0, step=1, limit=6
    $region2: #{tpu_custom_call.1} parent=1 // loop_pre_header
      _
    $region3: #{tpu_custom_call.1} parent=1 // loop_header
      %s17 = sphi 0, %s21
      %p18 = scmp.ge.s32.totalorder %s17, 6
      %s24 = sphi 0, %s36
      %s25 = sphi 0, %s32
      %s26 = sphi 0, %s24
      %s27 = sphi 0, %s25
      %s28 = sphi 0, %s26
      %s29 = sphi 0, %s27
      %s41 = sphi 0, %s43
      %s44 = sphi 0, %s41
      %s45 = sphi 0, %s44
      %s61 = sphi 0, %s45
      %s65 = sphi 0, %s65
      %s67 = sphi 0, %s65
      %s68 = sphi 0, %s67
      %s82 = sphi 0, %s68
      %s86 = sphi 0, %s86
      %s88 = sphi 0, %s86
      %s89 = sphi 0, %s88
      %s103 = sphi 0, %s89
      %s107 = sphi 0, %s107
      %s109 = sphi 0, %s107
      %s110 = sphi 0, %s109
      %s124 = sphi 0, %s110
      %s132 = sphi 0, %s134
      %s135 = sphi 0, %s132
      %s136 = sphi 0, %s135
      %s152 = sphi 0, %s136
    $region4: #{tpu_custom_call.1} parent=1 // loop_header_branch
      %20 = sbr.rel (%p18) target = $region8
    $region5: #{tpu_custom_call.1} parent=1 // loop_body
      %s22 = ssub.s32 %s17, 1
      %s23 = ssub.s32 %s17, 2
      %s30 = sadd.s32 1, %s25
      %p31 = scmp.ge.s32.totalorder %s30, 2
      %s32 = scalar_select %p31, 0, %s30
      %s33 = sadd.s32 1, %s24
      %s34 = scalar_select %p31, %s33, %s24
      %p35 = scmp.ge.s32.totalorder %s34, 2
      %s36 = scalar_select %p35, 0, %s34
      %s37 = ssub.s32 %s24, %s36
      %s38 = ssub.s32 %s25, %s32
      %s39 = sor.u32 %s37, %s38
      %p40 = scmp.eq.s32.totalorder %s39, 0
      %s42 = sadd.s32 %s41, 1
      %s43 = scalar_select %p40, %s41, %s42
      %p46 = pneg %p40
      %p47 = scmp.eq.s32.totalorder %s17, 3
      %p48 = por %p46, %p47
      %p49 = scmp.ne.s32.totalorder %s41, %s44
      %p50 = scmp.eq.s32.totalorder %s17, 0
      %p51 = por %p49, %p50
      %p52 = scmp.ne.s32.totalorder %s41, %s44
      %p53 = scmp.eq.s32.totalorder %s22, 3
      %p54 = por %p52, %p53
      %p55 = scmp.ne.s32.totalorder %s44, %s45
      %p56 = scmp.eq.s32.totalorder %s22, 0
      %p57 = por %p55, %p56
      %p58 = scmp.ne.s32.totalorder %s44, %s45
      %p59 = scmp.eq.s32.totalorder %s23, 3
      %p60 = por %p58, %p59
      %p62 = scmp.ne.s32.totalorder %s45, %s61
      %p63 = scmp.eq.s32.totalorder %s23, 0
      %p64 = por %p62, %p63
      %s66 = sadd.s32 %s65, 1
      %p69 = scmp.eq.s32.totalorder %s17, 3
      %p70 = scmp.ne.s32.totalorder %s65, %s67
      %p71 = scmp.eq.s32.totalorder %s17, 0
      %p72 = por %p70, %p71
      %p73 = scmp.ne.s32.totalorder %s65, %s67
      %p74 = scmp.eq.s32.totalorder %s22, 3
      %p75 = por %p73, %p74
      %p76 = scmp.ne.s32.totalorder %s67, %s68
      %p77 = scmp.eq.s32.totalorder %s22, 0
      %p78 = por %p76, %p77
      %p79 = scmp.ne.s32.totalorder %s67, %s68
      %p80 = scmp.eq.s32.totalorder %s23, 3
      %p81 = por %p79, %p80
      %p83 = scmp.ne.s32.totalorder %s68, %s82
      %p84 = scmp.eq.s32.totalorder %s23, 0
      %p85 = por %p83, %p84
      %s87 = sadd.s32 %s86, 1
      %p90 = scmp.eq.s32.totalorder %s17, 3
      %p91 = scmp.ne.s32.totalorder %s86, %s88
      %p92 = scmp.eq.s32.totalorder %s17, 0
      %p93 = por %p91, %p92
      %p94 = scmp.ne.s32.totalorder %s86, %s88
      %p95 = scmp.eq.s32.totalorder %s22, 3
      %p96 = por %p94, %p95
      %p97 = scmp.ne.s32.totalorder %s88, %s89
      %p98 = scmp.eq.s32.totalorder %s22, 0
      %p99 = por %p97, %p98
      %p100 = scmp.ne.s32.totalorder %s88, %s89
      %p101 = scmp.eq.s32.totalorder %s23, 3
      %p102 = por %p100, %p101
      %p104 = scmp.ne.s32.totalorder %s89, %s103
      %p105 = scmp.eq.s32.totalorder %s23, 0
      %p106 = por %p104, %p105
      %s108 = sadd.s32 %s107, 1
      %p111 = scmp.eq.s32.totalorder %s17, 3
      %p112 = scmp.ne.s32.totalorder %s107, %s109
      %p113 = scmp.eq.s32.totalorder %s17, 0
      %p114 = por %p112, %p113
      %p115 = scmp.ne.s32.totalorder %s107, %s109
      %p116 = scmp.eq.s32.totalorder %s22, 3
      %p117 = por %p115, %p116
      %p118 = scmp.ne.s32.totalorder %s109, %s110
      %p119 = scmp.eq.s32.totalorder %s22, 0
      %p120 = por %p118, %p119
      %p121 = scmp.ne.s32.totalorder %s109, %s110
      %p122 = scmp.eq.s32.totalorder %s23, 3
      %p123 = por %p121, %p122
      %p125 = scmp.ne.s32.totalorder %s110, %s124
      %p126 = scmp.eq.s32.totalorder %s23, 0
      %p127 = por %p125, %p126
      %s128 = ssub.s32 %s24, %s36
      %s129 = ssub.s32 %s25, %s32
      %s130 = sor.u32 %s128, %s129
      %p131 = scmp.eq.s32.totalorder %s130, 0
      %s133 = sadd.s32 %s132, 1
      %s134 = scalar_select %p131, %s132, %s133
      %p137 = pneg %p131
      %p138 = scmp.eq.s32.totalorder %s17, 3
      %p139 = por %p137, %p138
      %p140 = scmp.ne.s32.totalorder %s132, %s135
      %p141 = scmp.eq.s32.totalorder %s17, 0
      %p142 = por %p140, %p141
      %p143 = scmp.ne.s32.totalorder %s132, %s135
      %p144 = scmp.eq.s32.totalorder %s22, 3
      %p145 = por %p143, %p144
      %p146 = scmp.ne.s32.totalorder %s135, %s136
      %p147 = scmp.eq.s32.totalorder %s22, 0
      %p148 = por %p146, %p147
      %p149 = scmp.ne.s32.totalorder %s135, %s136
      %p150 = scmp.eq.s32.totalorder %s23, 3
      %p151 = por %p149, %p150
      %p153 = scmp.ne.s32.totalorder %s136, %s152
      %p154 = scmp.eq.s32.totalorder %s23, 0
      %p155 = por %p153, %p154
      %p156 = scmp.le.s32.totalorder 1, %s17
      %p157 = scmp.lt.s32.totalorder %s17, 5
      %p158 = pnand %p156, %p157
      %p159 = pneg %p158
      // Predicated region
      $region9: #{tpu_custom_call.1} parent=5 // pred_check
        _
      $region10: #{tpu_custom_call.1} parent=5 // pred_check_branch
        %161 = sbr.rel (%p158) target = $region12
      $region11: #{tpu_custom_call.1} parent=5 // pred_region
        %s162 = ssub.s32 %s17, 1
        // Predicated region
        $region13: #{tpu_custom_call.1} parent=11 // pred_check
          %p163 = pneg %p78
        $region14: #{tpu_custom_call.1} parent=11 // pred_check_branch
          %165 = sbr.rel (%p163) target = $region16
        $region15: #{tpu_custom_call.1} parent=11 // pred_region
          %167 = vsyncadd [#allocation6], 0
          %s169 = sshll.u32 %s1, 4
          %s170 = int_to_ptr.hbm [resolvable:$true] %s169
          %s171 = sshll.u32 [#allocation5], 4
          %s172 = int_to_ptr.vmem [resolvable:$true] %s171
          %174 = dma.hbm_to_vmem [thread:$0]  %s170, 16, %s172, [#allocation6]
        $region16: #{tpu_custom_call.1} parent=11 // pred_fallthru
          _
        // Predicated region
        $region17: #{tpu_custom_call.1} parent=11 // pred_check
          %p175 = pneg %p99
        $region18: #{tpu_custom_call.1} parent=11 // pred_check_branch
          %177 = sbr.rel (%p175) target = $region20
        $region19: #{tpu_custom_call.1} parent=11 // pred_region
          _
        $region20: #{tpu_custom_call.1} parent=11 // pred_fallthru
          _
        // Predicated region
        $region21: #{tpu_custom_call.1} parent=11 // pred_check
          %p178 = pneg %p120
        $region22: #{tpu_custom_call.1} parent=11 // pred_check_branch
          %180 = sbr.rel (%p178) target = $region24
        $region23: #{tpu_custom_call.1} parent=11 // pred_region
          %182 = vsyncadd [#allocation6], 0
          %s184 = sshll.u32 %s3, 4
          %s185 = int_to_ptr.hbm [resolvable:$true] %s184
          %s186 = sshll.u32 [#allocation7], 4
          %s187 = int_to_ptr.vmem [resolvable:$true] %s186
          %189 = dma.hbm_to_vmem [thread:$0]  %s185, 64, %s187, [#allocation6]
        $region24: #{tpu_custom_call.1} parent=11 // pred_fallthru
          _
      $region12: #{tpu_custom_call.1} parent=5 // pred_fallthru
        _
      %p190 = scmp.lt.s32.totalorder %s17, 4
      // Predicated region
      $region25: #{tpu_custom_call.1} parent=5 // pred_check
        %p191 = pneg %p190
      $region26: #{tpu_custom_call.1} parent=5 // pred_check_branch
        %193 = sbr.rel (%p191) target = $region28
      $region27: #{tpu_custom_call.1} parent=5 // pred_region
        // Predicated region
        $region29: #{tpu_custom_call.1} parent=27 // pred_check
          %p194 = pneg %p51
        $region30: #{tpu_custom_call.1} parent=27 // pred_check_branch
          %196 = sbr.rel (%p194) target = $region32
        $region31: #{tpu_custom_call.1} parent=27 // pred_region
          %s197 = sand.u32 %s41, 1
          %s198 = scalar_lea.sflag [#allocation3], %s197
          %s199 = sand.u32 %s41, 1
          %s200 = smul.addr %s199, 256
          %s201 = scalar_lea.vmem [#allocation2], %s200
          %s202 = smul.u32 16, %s25
          %204 = vsyncadd %s198, 0
          %s205 = smul.addr %s202, 4
          %s206 = smul.addr %s24, 128
          %s207 = sadd.s32 %s205, %s206
          %s208 = smul.addr %s207, 4
          %s209 = scalar_lea.hbm %s0, %s208
          %s210 = sshll.u32 %s209, 4
          %s211 = int_to_ptr.hbm [resolvable:$true] %s210
          %s212 = sshll.u32 %s201, 4
          %s213 = int_to_ptr.vmem [resolvable:$true] %s212
          %218 = dma.hbm_to_vmem [thread:$0]  %s211, 4096, %s213, %s198, 64, 64, 4
        $region32: #{tpu_custom_call.1} parent=27 // pred_fallthru
          _
      $region28: #{tpu_custom_call.1} parent=5 // pred_fallthru
        _
      %p219 = scmp.le.s32.totalorder 1, %s17
      %p220 = scmp.lt.s32.totalorder %s17, 5
      %p221 = pnand %p219, %p220
      %p222 = pneg %p221
      // Predicated region
      $region33: #{tpu_custom_call.1} parent=5 // pred_check
        _
      $region34: #{tpu_custom_call.1} parent=5 // pred_check_branch
        %224 = sbr.rel (%p221) target = $region36
      $region35: #{tpu_custom_call.1} parent=5 // pred_region
        %s225 = ssub.s32 %s17, 1
        %s226 = sand.u32 %s44, 1
        %s227 = scalar_lea.sflag [#allocation3], %s226
        %s228 = sand.u32 %s44, 1
        %s229 = smul.addr %s228, 256
        %s230 = scalar_lea.vmem [#allocation2], %s229
        // Predicated region
        $region37: #{tpu_custom_call.1} parent=35 // pred_check
          %p231 = pneg %p57
        $region38: #{tpu_custom_call.1} parent=35 // pred_check_branch
          %233 = sbr.rel (%p231) target = $region40
        $region39: #{tpu_custom_call.1} parent=35 // pred_region
          %235 = dma.done %s227, 4096
        $region40: #{tpu_custom_call.1} parent=35 // pred_fallthru
          _
        // Predicated region
        $region41: #{tpu_custom_call.1} parent=35 // pred_check
          %p236 = pneg %p78
        $region42: #{tpu_custom_call.1} parent=35 // pred_check_branch
          %238 = sbr.rel (%p236) target = $region44
        $region43: #{tpu_custom_call.1} parent=35 // pred_region
          %240 = dma.done [#allocation6], 16
        $region44: #{tpu_custom_call.1} parent=35 // pred_fallthru
          _
        // Predicated region
        $region45: #{tpu_custom_call.1} parent=35 // pred_check
          %p241 = pneg %p120
        $region46: #{tpu_custom_call.1} parent=35 // pred_check_branch
          %243 = sbr.rel (%p241) target = $region48
        $region47: #{tpu_custom_call.1} parent=35 // pred_region
          %245 = dma.done [#allocation6], 64
        $region48: #{tpu_custom_call.1} parent=35 // pred_fallthru
          _
        %s246 = sand.u32 %s44, 1
        %s247 = scalar_lea.sflag [#allocation3], %s246
        %s248 = sand.u32 %s44, 1
        %s249 = smul.addr %s248, 256
        %s250 = scalar_lea.vmem [#allocation2], %s249
        %p251 = pneg %p57
        %p252 = pneg %p54
        %p253 = pneg %p78
        %p254 = pneg %p75
        %p255 = pneg %p99
        %p256 = pneg %p96
        %p257 = pneg %p120
        %p258 = pneg %p117
        %p259 = pneg %p148
        %p260 = pneg %p145
        %s261 = sand.u32 %s135, 1
        %s262 = scalar_lea.sflag [#allocation4], %s261
        %s263 = sand.u32 %s135, 1
        %s264 = smul.addr %s263, 32
        %s265 = scalar_lea.vmem [#allocation8], %s264
        %s266 = smul.u32 16, %s27
        %s267 = smul.u32 2, %s27
        %v268 = vld [vmem:[%s230] sm:$0xf]
        %v269 = vld [vmem:[%s230 + $0x4] sm:$0xf]
        %v270 = vld [vmem:[%s230 + $0x8] sm:$0xf]
        %v271 = vld [vmem:[%s230 + $0xc] sm:$0xf]
        %v272 = vld [vmem:[%s230 + $0x10] sm:$0xf]
        %v273 = vld [vmem:[%s230 + $0x14] sm:$0xf]
        %v274 = vld [vmem:[%s230 + $0x18] sm:$0xf]
        %v275 = vld [vmem:[%s230 + $0x1c] sm:$0xf]
        %v276 = vld [vmem:[%s230 + $0x20] sm:$0xf]
        %v277 = vld [vmem:[%s230 + $0x24] sm:$0xf]
        %v278 = vld [vmem:[%s230 + $0x28] sm:$0xf]
        %v279 = vld [vmem:[%s230 + $0x2c] sm:$0xf]
        %v280 = vld [vmem:[%s230 + $0x30] sm:$0xf]
        %v281 = vld [vmem:[%s230 + $0x34] sm:$0xf]
        %v282 = vld [vmem:[%s230 + $0x38] sm:$0xf]
        %v283 = vld [vmem:[%s230 + $0x3c] sm:$0xf]
        %v284 = vld [vmem:[%s230 + $0x40] sm:$0xf]
        %v285 = vld [vmem:[%s230 + $0x44] sm:$0xf]
        %v286 = vld [vmem:[%s230 + $0x48] sm:$0xf]
        %v287 = vld [vmem:[%s230 + $0x4c] sm:$0xf]
        %v288 = vld [vmem:[%s230 + $0x50] sm:$0xf]
        %v289 = vld [vmem:[%s230 + $0x54] sm:$0xf]
        %v290 = vld [vmem:[%s230 + $0x58] sm:$0xf]
        %v291 = vld [vmem:[%s230 + $0x5c] sm:$0xf]
        %v292 = vld [vmem:[%s230 + $0x60] sm:$0xf]
        %v293 = vld [vmem:[%s230 + $0x64] sm:$0xf]
        %v294 = vld [vmem:[%s230 + $0x68] sm:$0xf]
        %v295 = vld [vmem:[%s230 + $0x6c] sm:$0xf]
        %v296 = vld [vmem:[%s230 + $0x70] sm:$0xf]
        %v297 = vld [vmem:[%s230 + $0x74] sm:$0xf]
        %v298 = vld [vmem:[%s230 + $0x78] sm:$0xf]
        %v299 = vld [vmem:[%s230 + $0x7c] sm:$0xf]
        %v300 = vld [vmem:[%s230 + $0x80] sm:$0xf]
        %v301 = vld [vmem:[%s230 + $0x84] sm:$0xf]
        %v302 = vld [vmem:[%s230 + $0x88] sm:$0xf]
        %v303 = vld [vmem:[%s230 + $0x8c] sm:$0xf]
        %v304 = vld [vmem:[%s230 + $0x90] sm:$0xf]
        %v305 = vld [vmem:[%s230 + $0x94] sm:$0xf]
        %v306 = vld [vmem:[%s230 + $0x98] sm:$0xf]
        %v307 = vld [vmem:[%s230 + $0x9c] sm:$0xf]
        %v308 = vld [vmem:[%s230 + $0xa0] sm:$0xf]
        %v309 = vld [vmem:[%s230 + $0xa4] sm:$0xf]
        %v310 = vld [vmem:[%s230 + $0xa8] sm:$0xf]
        %v311 = vld [vmem:[%s230 + $0xac] sm:$0xf]
        %v312 = vld [vmem:[%s230 + $0xb0] sm:$0xf]
        %v313 = vld [vmem:[%s230 + $0xb4] sm:$0xf]
        %v314 = vld [vmem:[%s230 + $0xb8] sm:$0xf]
        %v315 = vld [vmem:[%s230 + $0xbc] sm:$0xf]
        %v316 = vld [vmem:[%s230 + $0xc0] sm:$0xf]
        %v317 = vld [vmem:[%s230 + $0xc4] sm:$0xf]
        %v318 = vld [vmem:[%s230 + $0xc8] sm:$0xf]
        %v319 = vld [vmem:[%s230 + $0xcc] sm:$0xf]
        %v320 = vld [vmem:[%s230 + $0xd0] sm:$0xf]
        %v321 = vld [vmem:[%s230 + $0xd4] sm:$0xf]
        %v322 = vld [vmem:[%s230 + $0xd8] sm:$0xf]
        %v323 = vld [vmem:[%s230 + $0xdc] sm:$0xf]
        %v324 = vld [vmem:[%s230 + $0xe0] sm:$0xf]
        %v325 = vld [vmem:[%s230 + $0xe4] sm:$0xf]
        %v326 = vld [vmem:[%s230 + $0xe8] sm:$0xf]
        %v327 = vld [vmem:[%s230 + $0xec] sm:$0xf]
        %v328 = vld [vmem:[%s230 + $0xf0] sm:$0xf]
        %v329 = vld [vmem:[%s230 + $0xf4] sm:$0xf]
        %v330 = vld [vmem:[%s230 + $0xf8] sm:$0xf]
        %v331 = vld [vmem:[%s230 + $0xfc] sm:$0xf]
        %v332 = vunpack.c.l.bf16 %v268
        %v333 = vunpack.c.l.bf16 %v269
        %v334 = vunpack.c.l.bf16 %v270
        %v335 = vunpack.c.l.bf16 %v271
        %v336 = vunpack.c.l.bf16 %v272
        %v337 = vunpack.c.l.bf16 %v273
        %v338 = vunpack.c.l.bf16 %v274
        %v339 = vunpack.c.l.bf16 %v275
        %v340 = vunpack.c.l.bf16 %v276
        %v341 = vunpack.c.l.bf16 %v277
        %v342 = vunpack.c.l.bf16 %v278
        %v343 = vunpack.c.l.bf16 %v279
        %v344 = vunpack.c.l.bf16 %v280
        %v345 = vunpack.c.l.bf16 %v281
        %v346 = vunpack.c.l.bf16 %v282
        %v347 = vunpack.c.l.bf16 %v283
        %v348 = vunpack.c.l.bf16 %v284
        %v349 = vunpack.c.l.bf16 %v285
        %v350 = vunpack.c.l.bf16 %v286
        %v351 = vunpack.c.l.bf16 %v287
        %v352 = vunpack.c.l.bf16 %v288
        %v353 = vunpack.c.l.bf16 %v289
        %v354 = vunpack.c.l.bf16 %v290
        %v355 = vunpack.c.l.bf16 %v291
        %v356 = vunpack.c.l.bf16 %v292
        %v357 = vunpack.c.l.bf16 %v293
        %v358 = vunpack.c.l.bf16 %v294
        %v359 = vunpack.c.l.bf16 %v295
        %v360 = vunpack.c.l.bf16 %v296
        %v361 = vunpack.c.l.bf16 %v297
        %v362 = vunpack.c.l.bf16 %v298
        %v363 = vunpack.c.l.bf16 %v299
        %v364 = vunpack.c.l.bf16 %v300
        %v365 = vunpack.c.l.bf16 %v301
        %v366 = vunpack.c.l.bf16 %v302
        %v367 = vunpack.c.l.bf16 %v303
        %v368 = vunpack.c.l.bf16 %v304
        %v369 = vunpack.c.l.bf16 %v305
        %v370 = vunpack.c.l.bf16 %v306
        %v371 = vunpack.c.l.bf16 %v307
        %v372 = vunpack.c.l.bf16 %v308
        %v373 = vunpack.c.l.bf16 %v309
        %v374 = vunpack.c.l.bf16 %v310
        %v375 = vunpack.c.l.bf16 %v311
        %v376 = vunpack.c.l.bf16 %v312
        %v377 = vunpack.c.l.bf16 %v313
        %v378 = vunpack.c.l.bf16 %v314
        %v379 = vunpack.c.l.bf16 %v315
        %v380 = vunpack.c.l.bf16 %v316
        %v381 = vunpack.c.l.bf16 %v317
        %v382 = vunpack.c.l.bf16 %v318
        %v383 = vunpack.c.l.bf16 %v319
        %v384 = vunpack.c.l.bf16 %v320
        %v385 = vunpack.c.l.bf16 %v321
        %v386 = vunpack.c.l.bf16 %v322
        %v387 = vunpack.c.l.bf16 %v323
        %v388 = vunpack.c.l.bf16 %v324
        %v389 = vunpack.c.l.bf16 %v325
        %v390 = vunpack.c.l.bf16 %v326
        %v391 = vunpack.c.l.bf16 %v327
        %v392 = vunpack.c.l.bf16 %v328
        %v393 = vunpack.c.l.bf16 %v329
        %v394 = vunpack.c.l.bf16 %v330
        %v395 = vunpack.c.l.bf16 %v331
        %v396 = vld [vmem:[#allocation5] sm:$0x1]
        %v397 = vld [vmem:[%s2] sm:$0x1]
        %vm398 = vcmask 261120
        %v399 = vsel %vm398, %v332, 0.0
        %400 = vadd.xlane.f32.xlu0 %v399
        %v401 = vpop.xlane.xlu0 %400
        %v402 = vsel %vm398, %v333, 0.0
        %403 = vadd.xlane.f32.xlu0 %v402
        %v404 = vpop.xlane.xlu0 %403
        %v405 = vsel %vm398, %v334, 0.0
        %406 = vadd.xlane.f32.xlu0 %v405
        %v407 = vpop.xlane.xlu0 %406
        %v408 = vsel %vm398, %v335, 0.0
        %409 = vadd.xlane.f32.xlu0 %v408
        %v410 = vpop.xlane.xlu0 %409
        %v411 = vsel %vm398, %v336, 0.0
        %412 = vadd.xlane.f32.xlu0 %v411
        %v413 = vpop.xlane.xlu0 %412
        %v414 = vsel %vm398, %v337, 0.0
        %415 = vadd.xlane.f32.xlu0 %v414
        %v416 = vpop.xlane.xlu0 %415
        %v417 = vsel %vm398, %v338, 0.0
        %418 = vadd.xlane.f32.xlu0 %v417
        %v419 = vpop.xlane.xlu0 %418
        %v420 = vsel %vm398, %v339, 0.0
        %421 = vadd.xlane.f32.xlu0 %v420
        %v422 = vpop.xlane.xlu0 %421
        %v423 = vsel %vm398, %v340, 0.0
        %424 = vadd.xlane.f32.xlu0 %v423
        %v425 = vpop.xlane.xlu0 %424
        %v426 = vsel %vm398, %v341, 0.0
        %427 = vadd.xlane.f32.xlu0 %v426
        %v428 = vpop.xlane.xlu0 %427
        %v429 = vsel %vm398, %v342, 0.0
        %430 = vadd.xlane.f32.xlu0 %v429
        %v431 = vpop.xlane.xlu0 %430
        %v432 = vsel %vm398, %v343, 0.0
        %433 = vadd.xlane.f32.xlu0 %v432
        %v434 = vpop.xlane.xlu0 %433
        %v435 = vsel %vm398, %v344, 0.0
        %436 = vadd.xlane.f32.xlu0 %v435
        %v437 = vpop.xlane.xlu0 %436
        %v438 = vsel %vm398, %v345, 0.0
        %439 = vadd.xlane.f32.xlu0 %v438
        %v440 = vpop.xlane.xlu0 %439
        %v441 = vsel %vm398, %v346, 0.0
        %442 = vadd.xlane.f32.xlu0 %v441
        %v443 = vpop.xlane.xlu0 %442
        %v444 = vsel %vm398, %v347, 0.0
        %445 = vadd.xlane.f32.xlu0 %v444
        %v446 = vpop.xlane.xlu0 %445
        %v447 = vsel %vm398, %v348, 0.0
        %448 = vadd.xlane.f32.xlu0 %v447
        %v449 = vpop.xlane.xlu0 %448
        %v450 = vsel %vm398, %v349, 0.0
        %451 = vadd.xlane.f32.xlu0 %v450
        %v452 = vpop.xlane.xlu0 %451
        %v453 = vsel %vm398, %v350, 0.0
        %454 = vadd.xlane.f32.xlu0 %v453
        %v455 = vpop.xlane.xlu0 %454
        %v456 = vsel %vm398, %v351, 0.0
        %457 = vadd.xlane.f32.xlu0 %v456
        %v458 = vpop.xlane.xlu0 %457
        %v459 = vsel %vm398, %v352, 0.0
        %460 = vadd.xlane.f32.xlu0 %v459
        %v461 = vpop.xlane.xlu0 %460
        %v462 = vsel %vm398, %v353, 0.0
        %463 = vadd.xlane.f32.xlu0 %v462
        %v464 = vpop.xlane.xlu0 %463
        %v465 = vsel %vm398, %v354, 0.0
        %466 = vadd.xlane.f32.xlu0 %v465
        %v467 = vpop.xlane.xlu0 %466
        %v468 = vsel %vm398, %v355, 0.0
        %469 = vadd.xlane.f32.xlu0 %v468
        %v470 = vpop.xlane.xlu0 %469
        %v471 = vsel %vm398, %v356, 0.0
        %472 = vadd.xlane.f32.xlu0 %v471
        %v473 = vpop.xlane.xlu0 %472
        %v474 = vsel %vm398, %v357, 0.0
        %475 = vadd.xlane.f32.xlu0 %v474
        %v476 = vpop.xlane.xlu0 %475
        %v477 = vsel %vm398, %v358, 0.0
        %478 = vadd.xlane.f32.xlu0 %v477
        %v479 = vpop.xlane.xlu0 %478
        %v480 = vsel %vm398, %v359, 0.0
        %481 = vadd.xlane.f32.xlu0 %v480
        %v482 = vpop.xlane.xlu0 %481
        %v483 = vsel %vm398, %v360, 0.0
        %484 = vadd.xlane.f32.xlu0 %v483
        %v485 = vpop.xlane.xlu0 %484
        %v486 = vsel %vm398, %v361, 0.0
        %487 = vadd.xlane.f32.xlu0 %v486
        %v488 = vpop.xlane.xlu0 %487
        %v489 = vsel %vm398, %v362, 0.0
        %490 = vadd.xlane.f32.xlu0 %v489
        %v491 = vpop.xlane.xlu0 %490
        %v492 = vsel %vm398, %v363, 0.0
        %493 = vadd.xlane.f32.xlu0 %v492
        %v494 = vpop.xlane.xlu0 %493
        %v495 = vsel %vm398, %v364, 0.0
        %496 = vadd.xlane.f32.xlu0 %v495
        %v497 = vpop.xlane.xlu0 %496
        %v498 = vsel %vm398, %v365, 0.0
        %499 = vadd.xlane.f32.xlu0 %v498
        %v500 = vpop.xlane.xlu0 %499
        %v501 = vsel %vm398, %v366, 0.0
        %502 = vadd.xlane.f32.xlu0 %v501
        %v503 = vpop.xlane.xlu0 %502
        %v504 = vsel %vm398, %v367, 0.0
        %505 = vadd.xlane.f32.xlu0 %v504
        %v506 = vpop.xlane.xlu0 %505
        %v507 = vsel %vm398, %v368, 0.0
        %508 = vadd.xlane.f32.xlu0 %v507
        %v509 = vpop.xlane.xlu0 %508
        %v510 = vsel %vm398, %v369, 0.0
        %511 = vadd.xlane.f32.xlu0 %v510
        %v512 = vpop.xlane.xlu0 %511
        %v513 = vsel %vm398, %v370, 0.0
        %514 = vadd.xlane.f32.xlu0 %v513
        %v515 = vpop.xlane.xlu0 %514
        %v516 = vsel %vm398, %v371, 0.0
        %517 = vadd.xlane.f32.xlu0 %v516
        %v518 = vpop.xlane.xlu0 %517
        %v519 = vsel %vm398, %v372, 0.0
        %520 = vadd.xlane.f32.xlu0 %v519
        %v521 = vpop.xlane.xlu0 %520
        %v522 = vsel %vm398, %v373, 0.0
        %523 = vadd.xlane.f32.xlu0 %v522
        %v524 = vpop.xlane.xlu0 %523
        %v525 = vsel %vm398, %v374, 0.0
        %526 = vadd.xlane.f32.xlu0 %v525
        %v527 = vpop.xlane.xlu0 %526
        %v528 = vsel %vm398, %v375, 0.0
        %529 = vadd.xlane.f32.xlu0 %v528
        %v530 = vpop.xlane.xlu0 %529
        %v531 = vsel %vm398, %v376, 0.0
        %532 = vadd.xlane.f32.xlu0 %v531
        %v533 = vpop.xlane.xlu0 %532
        %v534 = vsel %vm398, %v377, 0.0
        %535 = vadd.xlane.f32.xlu0 %v534
        %v536 = vpop.xlane.xlu0 %535
        %v537 = vsel %vm398, %v378, 0.0
        %538 = vadd.xlane.f32.xlu0 %v537
        %v539 = vpop.xlane.xlu0 %538
        %v540 = vsel %vm398, %v379, 0.0
        %541 = vadd.xlane.f32.xlu0 %v540
        %v542 = vpop.xlane.xlu0 %541
        %v543 = vsel %vm398, %v380, 0.0
        %544 = vadd.xlane.f32.xlu0 %v543
        %v545 = vpop.xlane.xlu0 %544
        %v546 = vsel %vm398, %v381, 0.0
        %547 = vadd.xlane.f32.xlu0 %v546
        %v548 = vpop.xlane.xlu0 %547
        %v549 = vsel %vm398, %v382, 0.0
        %550 = vadd.xlane.f32.xlu0 %v549
        %v551 = vpop.xlane.xlu0 %550
        %v552 = vsel %vm398, %v383, 0.0
        %553 = vadd.xlane.f32.xlu0 %v552
        %v554 = vpop.xlane.xlu0 %553
        %v555 = vsel %vm398, %v384, 0.0
        %556 = vadd.xlane.f32.xlu0 %v555
        %v557 = vpop.xlane.xlu0 %556
        %v558 = vsel %vm398, %v385, 0.0
        %559 = vadd.xlane.f32.xlu0 %v558
        %v560 = vpop.xlane.xlu0 %559
        %v561 = vsel %vm398, %v386, 0.0
        %562 = vadd.xlane.f32.xlu0 %v561
        %v563 = vpop.xlane.xlu0 %562
        %v564 = vsel %vm398, %v387, 0.0
        %565 = vadd.xlane.f32.xlu0 %v564
        %v566 = vpop.xlane.xlu0 %565
        %v567 = vsel %vm398, %v388, 0.0
        %568 = vadd.xlane.f32.xlu0 %v567
        %v569 = vpop.xlane.xlu0 %568
        %v570 = vsel %vm398, %v389, 0.0
        %571 = vadd.xlane.f32.xlu0 %v570
        %v572 = vpop.xlane.xlu0 %571
        %v573 = vsel %vm398, %v390, 0.0
        %574 = vadd.xlane.f32.xlu0 %v573
        %v575 = vpop.xlane.xlu0 %574
        %v576 = vsel %vm398, %v391, 0.0
        %577 = vadd.xlane.f32.xlu0 %v576
        %v578 = vpop.xlane.xlu0 %577
        %v579 = vsel %vm398, %v392, 0.0
        %580 = vadd.xlane.f32.xlu0 %v579
        %v581 = vpop.xlane.xlu0 %580
        %v582 = vsel %vm398, %v393, 0.0
        %583 = vadd.xlane.f32.xlu0 %v582
        %v584 = vpop.xlane.xlu0 %583
        %v585 = vsel %vm398, %v394, 0.0
        %586 = vadd.xlane.f32.xlu0 %v585
        %v587 = vpop.xlane.xlu0 %586
        %v588 = vsel %vm398, %v395, 0.0
        %589 = vadd.xlane.f32.xlu0 %v588
        %v590 = vpop.xlane.xlu0 %589
        %v591 = vrcp.pop 32.0
        %v592 = vmul.f32 32.0, %v591
        %v593 = vsub.f32 1.0, %v592
        %v594 = vmul.f32 %v591, %v593
        %v595 = vadd.f32 %v591, %v594
        %vm596 = vweird.f32 %v591
        %v597 = vsel %vm596, %v591, %v595
        %v598 = vmul.f32 %v401, %v597
        %v599 = vmul.f32 %v404, %v597
        %v600 = vmul.f32 %v407, %v597
        %v601 = vmul.f32 %v410, %v597
        %v602 = vmul.f32 %v413, %v597
        %v603 = vmul.f32 %v416, %v597
        %v604 = vmul.f32 %v419, %v597
        %v605 = vmul.f32 %v422, %v597
        %v606 = vmul.f32 %v425, %v597
        %v607 = vmul.f32 %v428, %v597
        %v608 = vmul.f32 %v431, %v597
        %v609 = vmul.f32 %v434, %v597
        %v610 = vmul.f32 %v437, %v597
        %v611 = vmul.f32 %v440, %v597
        %v612 = vmul.f32 %v443, %v597
        %v613 = vmul.f32 %v446, %v597
        %v614 = vmul.f32 %v449, %v597
        %v615 = vmul.f32 %v452, %v597
        %v616 = vmul.f32 %v455, %v597
        %v617 = vmul.f32 %v458, %v597
        %v618 = vmul.f32 %v461, %v597
        %v619 = vmul.f32 %v464, %v597
        %v620 = vmul.f32 %v467, %v597
        %v621 = vmul.f32 %v470, %v597
        %v622 = vmul.f32 %v473, %v597
        %v623 = vmul.f32 %v476, %v597
        %v624 = vmul.f32 %v479, %v597
        %v625 = vmul.f32 %v482, %v597
        %v626 = vmul.f32 %v485, %v597
        %v627 = vmul.f32 %v488, %v597
        %v628 = vmul.f32 %v491, %v597
        %v629 = vmul.f32 %v494, %v597
        %v630 = vmul.f32 %v497, %v597
        %v631 = vmul.f32 %v500, %v597
        %v632 = vmul.f32 %v503, %v597
        %v633 = vmul.f32 %v506, %v597
        %v634 = vmul.f32 %v509, %v597
        %v635 = vmul.f32 %v512, %v597
        %v636 = vmul.f32 %v515, %v597
        %v637 = vmul.f32 %v518, %v597
        %v638 = vmul.f32 %v521, %v597
        %v639 = vmul.f32 %v524, %v597
        %v640 = vmul.f32 %v527, %v597
        %v641 = vmul.f32 %v530, %v597
        %v642 = vmul.f32 %v533, %v597
        %v643 = vmul.f32 %v536, %v597
        %v644 = vmul.f32 %v539, %v597
        %v645 = vmul.f32 %v542, %v597
        %v646 = vmul.f32 %v545, %v597
        %v647 = vmul.f32 %v548, %v597
        %v648 = vmul.f32 %v551, %v597
        %v649 = vmul.f32 %v554, %v597
        %v650 = vmul.f32 %v557, %v597
        %v651 = vmul.f32 %v560, %v597
        %v652 = vmul.f32 %v563, %v597
        %v653 = vmul.f32 %v566, %v597
        %v654 = vmul.f32 %v569, %v597
        %v655 = vmul.f32 %v572, %v597
        %v656 = vmul.f32 %v575, %v597
        %v657 = vmul.f32 %v578, %v597
        %v658 = vmul.f32 %v581, %v597
        %v659 = vmul.f32 %v584, %v597
        %v660 = vmul.f32 %v587, %v597
        %v661 = vmul.f32 %v590, %v597
        %v662 = vsub.f32 %v332, %v598
        %v663 = vsub.f32 %v333, %v599
        %v664 = vsub.f32 %v334, %v600
        %v665 = vsub.f32 %v335, %v601
        %v666 = vsub.f32 %v336, %v602
        %v667 = vsub.f32 %v337, %v603
        %v668 = vsub.f32 %v338, %v604
        %v669 = vsub.f32 %v339, %v605
        %v670 = vsub.f32 %v340, %v606
        %v671 = vsub.f32 %v341, %v607
        %v672 = vsub.f32 %v342, %v608
        %v673 = vsub.f32 %v343, %v609
        %v674 = vsub.f32 %v344, %v610
        %v675 = vsub.f32 %v345, %v611
        %v676 = vsub.f32 %v346, %v612
        %v677 = vsub.f32 %v347, %v613
        %v678 = vsub.f32 %v348, %v614
        %v679 = vsub.f32 %v349, %v615
        %v680 = vsub.f32 %v350, %v616
        %v681 = vsub.f32 %v351, %v617
        %v682 = vsub.f32 %v352, %v618
        %v683 = vsub.f32 %v353, %v619
        %v684 = vsub.f32 %v354, %v620
        %v685 = vsub.f32 %v355, %v621
        %v686 = vsub.f32 %v356, %v622
        %v687 = vsub.f32 %v357, %v623
        %v688 = vsub.f32 %v358, %v624
        %v689 = vsub.f32 %v359, %v625
        %v690 = vsub.f32 %v360, %v626
        %v691 = vsub.f32 %v361, %v627
        %v692 = vsub.f32 %v362, %v628
        %v693 = vsub.f32 %v363, %v629
        %v694 = vsub.f32 %v364, %v630
        %v695 = vsub.f32 %v365, %v631
        %v696 = vsub.f32 %v366, %v632
        %v697 = vsub.f32 %v367, %v633
        %v698 = vsub.f32 %v368, %v634
        %v699 = vsub.f32 %v369, %v635
        %v700 = vsub.f32 %v370, %v636
        %v701 = vsub.f32 %v371, %v637
        %v702 = vsub.f32 %v372, %v638
        %v703 = vsub.f32 %v373, %v639
        %v704 = vsub.f32 %v374, %v640
        %v705 = vsub.f32 %v375, %v641
        %v706 = vsub.f32 %v376, %v642
        %v707 = vsub.f32 %v377, %v643
        %v708 = vsub.f32 %v378, %v644
        %v709 = vsub.f32 %v379, %v645
        %v710 = vsub.f32 %v380, %v646
        %v711 = vsub.f32 %v381, %v647
        %v712 = vsub.f32 %v382, %v648
        %v713 = vsub.f32 %v383, %v649
        %v714 = vsub.f32 %v384, %v650
        %v715 = vsub.f32 %v385, %v651
        %v716 = vsub.f32 %v386, %v652
        %v717 = vsub.f32 %v387, %v653
        %v718 = vsub.f32 %v388, %v654
        %v719 = vsub.f32 %v389, %v655
        %v720 = vsub.f32 %v390, %v656
        %v721 = vsub.f32 %v391, %v657
        %v722 = vsub.f32 %v392, %v658
        %v723 = vsub.f32 %v393, %v659
        %v724 = vsub.f32 %v394, %v660
        %v725 = vsub.f32 %v395, %v661
        %v726 = vmul.f32 %v662, %v662
        %v727 = vmul.f32 %v663, %v663
        %v728 = vmul.f32 %v664, %v664
        %v729 = vmul.f32 %v665, %v665
        %v730 = vmul.f32 %v666, %v666
        %v731 = vmul.f32 %v667, %v667
        %v732 = vmul.f32 %v668, %v668
        %v733 = vmul.f32 %v669, %v669
        %v734 = vmul.f32 %v670, %v670
        %v735 = vmul.f32 %v671, %v671
        %v736 = vmul.f32 %v672, %v672
        %v737 = vmul.f32 %v673, %v673
        %v738 = vmul.f32 %v674, %v674
        %v739 = vmul.f32 %v675, %v675
        %v740 = vmul.f32 %v676, %v676
        %v741 = vmul.f32 %v677, %v677
        %v742 = vmul.f32 %v678, %v678
        %v743 = vmul.f32 %v679, %v679
        %v744 = vmul.f32 %v680, %v680
        %v745 = vmul.f32 %v681, %v681
        %v746 = vmul.f32 %v682, %v682
        %v747 = vmul.f32 %v683, %v683
        %v748 = vmul.f32 %v684, %v684
        %v749 = vmul.f32 %v685, %v685
        %v750 = vmul.f32 %v686, %v686
        %v751 = vmul.f32 %v687, %v687
        %v752 = vmul.f32 %v688, %v688
        %v753 = vmul.f32 %v689, %v689
        %v754 = vmul.f32 %v690, %v690
        %v755 = vmul.f32 %v691, %v691
        %v756 = vmul.f32 %v692, %v692
        %v757 = vmul.f32 %v693, %v693
        %v758 = vmul.f32 %v694, %v694
        %v759 = vmul.f32 %v695, %v695
        %v760 = vmul.f32 %v696, %v696
        %v761 = vmul.f32 %v697, %v697
        %v762 = vmul.f32 %v698, %v698
        %v763 = vmul.f32 %v699, %v699
        %v764 = vmul.f32 %v700, %v700
        %v765 = vmul.f32 %v701, %v701
        %v766 = vmul.f32 %v702, %v702
        %v767 = vmul.f32 %v703, %v703
        %v768 = vmul.f32 %v704, %v704
        %v769 = vmul.f32 %v705, %v705
        %v770 = vmul.f32 %v706, %v706
        %v771 = vmul.f32 %v707, %v707
        %v772 = vmul.f32 %v708, %v708
        %v773 = vmul.f32 %v709, %v709
        %v774 = vmul.f32 %v710, %v710
        %v775 = vmul.f32 %v711, %v711
        %v776 = vmul.f32 %v712, %v712
        %v777 = vmul.f32 %v713, %v713
        %v778 = vmul.f32 %v714, %v714
        %v779 = vmul.f32 %v715, %v715
        %v780 = vmul.f32 %v716, %v716
        %v781 = vmul.f32 %v717, %v717
        %v782 = vmul.f32 %v718, %v718
        %v783 = vmul.f32 %v719, %v719
        %v784 = vmul.f32 %v720, %v720
        %v785 = vmul.f32 %v721, %v721
        %v786 = vmul.f32 %v722, %v722
        %v787 = vmul.f32 %v723, %v723
        %v788 = vmul.f32 %v724, %v724
        %v789 = vmul.f32 %v725, %v725
        %v790 = vsel %vm398, %v726, 0.0
        %791 = vadd.xlane.f32.xlu0 %v790
        %v792 = vpop.xlane.xlu0 %791
        %v793 = vsel %vm398, %v727, 0.0
        %794 = vadd.xlane.f32.xlu0 %v793
        %v795 = vpop.xlane.xlu0 %794
        %v796 = vsel %vm398, %v728, 0.0
        %797 = vadd.xlane.f32.xlu0 %v796
        %v798 = vpop.xlane.xlu0 %797
        %v799 = vsel %vm398, %v729, 0.0
        %800 = vadd.xlane.f32.xlu0 %v799
        %v801 = vpop.xlane.xlu0 %800
        %v802 = vsel %vm398, %v730, 0.0
        %803 = vadd.xlane.f32.xlu0 %v802
        %v804 = vpop.xlane.xlu0 %803
        %v805 = vsel %vm398, %v731, 0.0
        %806 = vadd.xlane.f32.xlu0 %v805
        %v807 = vpop.xlane.xlu0 %806
        %v808 = vsel %vm398, %v732, 0.0
        %809 = vadd.xlane.f32.xlu0 %v808
        %v810 = vpop.xlane.xlu0 %809
        %v811 = vsel %vm398, %v733, 0.0
        %812 = vadd.xlane.f32.xlu0 %v811
        %v813 = vpop.xlane.xlu0 %812
        %v814 = vsel %vm398, %v734, 0.0
        %815 = vadd.xlane.f32.xlu0 %v814
        %v816 = vpop.xlane.xlu0 %815
        %v817 = vsel %vm398, %v735, 0.0
        %818 = vadd.xlane.f32.xlu0 %v817
        %v819 = vpop.xlane.xlu0 %818
        %v820 = vsel %vm398, %v736, 0.0
        %821 = vadd.xlane.f32.xlu0 %v820
        %v822 = vpop.xlane.xlu0 %821
        %v823 = vsel %vm398, %v737, 0.0
        %824 = vadd.xlane.f32.xlu0 %v823
        %v825 = vpop.xlane.xlu0 %824
        %v826 = vsel %vm398, %v738, 0.0
        %827 = vadd.xlane.f32.xlu0 %v826
        %v828 = vpop.xlane.xlu0 %827
        %v829 = vsel %vm398, %v739, 0.0
        %830 = vadd.xlane.f32.xlu0 %v829
        %v831 = vpop.xlane.xlu0 %830
        %v832 = vsel %vm398, %v740, 0.0
        %833 = vadd.xlane.f32.xlu0 %v832
        %v834 = vpop.xlane.xlu0 %833
        %v835 = vsel %vm398, %v741, 0.0
        %836 = vadd.xlane.f32.xlu0 %v835
        %v837 = vpop.xlane.xlu0 %836
        %v838 = vsel %vm398, %v742, 0.0
        %839 = vadd.xlane.f32.xlu0 %v838
        %v840 = vpop.xlane.xlu0 %839
        %v841 = vsel %vm398, %v743, 0.0
        %842 = vadd.xlane.f32.xlu0 %v841
        %v843 = vpop.xlane.xlu0 %842
        %v844 = vsel %vm398, %v744, 0.0
        %845 = vadd.xlane.f32.xlu0 %v844
        %v846 = vpop.xlane.xlu0 %845
        %v847 = vsel %vm398, %v745, 0.0
        %848 = vadd.xlane.f32.xlu0 %v847
        %v849 = vpop.xlane.xlu0 %848
        %v850 = vsel %vm398, %v746, 0.0
        %851 = vadd.xlane.f32.xlu0 %v850
        %v852 = vpop.xlane.xlu0 %851
        %v853 = vsel %vm398, %v747, 0.0
        %854 = vadd.xlane.f32.xlu0 %v853
        %v855 = vpop.xlane.xlu0 %854
        %v856 = vsel %vm398, %v748, 0.0
        %857 = vadd.xlane.f32.xlu0 %v856
        %v858 = vpop.xlane.xlu0 %857
        %v859 = vsel %vm398, %v749, 0.0
        %860 = vadd.xlane.f32.xlu0 %v859
        %v861 = vpop.xlane.xlu0 %860
        %v862 = vsel %vm398, %v750, 0.0
        %863 = vadd.xlane.f32.xlu0 %v862
        %v864 = vpop.xlane.xlu0 %863
        %v865 = vsel %vm398, %v751, 0.0
        %866 = vadd.xlane.f32.xlu0 %v865
        %v867 = vpop.xlane.xlu0 %866
        %v868 = vsel %vm398, %v752, 0.0
        %869 = vadd.xlane.f32.xlu0 %v868
        %v870 = vpop.xlane.xlu0 %869
        %v871 = vsel %vm398, %v753, 0.0
        %872 = vadd.xlane.f32.xlu0 %v871
        %v873 = vpop.xlane.xlu0 %872
        %v874 = vsel %vm398, %v754, 0.0
        %875 = vadd.xlane.f32.xlu0 %v874
        %v876 = vpop.xlane.xlu0 %875
        %v877 = vsel %vm398, %v755, 0.0
        %878 = vadd.xlane.f32.xlu0 %v877
        %v879 = vpop.xlane.xlu0 %878
        %v880 = vsel %vm398, %v756, 0.0
        %881 = vadd.xlane.f32.xlu0 %v880
        %v882 = vpop.xlane.xlu0 %881
        %v883 = vsel %vm398, %v757, 0.0
        %884 = vadd.xlane.f32.xlu0 %v883
        %v885 = vpop.xlane.xlu0 %884
        %v886 = vsel %vm398, %v758, 0.0
        %887 = vadd.xlane.f32.xlu0 %v886
        %v888 = vpop.xlane.xlu0 %887
        %v889 = vsel %vm398, %v759, 0.0
        %890 = vadd.xlane.f32.xlu0 %v889
        %v891 = vpop.xlane.xlu0 %890
        %v892 = vsel %vm398, %v760, 0.0
        %893 = vadd.xlane.f32.xlu0 %v892
        %v894 = vpop.xlane.xlu0 %893
        %v895 = vsel %vm398, %v761, 0.0
        %896 = vadd.xlane.f32.xlu0 %v895
        %v897 = vpop.xlane.xlu0 %896
        %v898 = vsel %vm398, %v762, 0.0
        %899 = vadd.xlane.f32.xlu0 %v898
        %v900 = vpop.xlane.xlu0 %899
        %v901 = vsel %vm398, %v763, 0.0
        %902 = vadd.xlane.f32.xlu0 %v901
        %v903 = vpop.xlane.xlu0 %902
        %v904 = vsel %vm398, %v764, 0.0
        %905 = vadd.xlane.f32.xlu0 %v904
        %v906 = vpop.xlane.xlu0 %905
        %v907 = vsel %vm398, %v765, 0.0
        %908 = vadd.xlane.f32.xlu0 %v907
        %v909 = vpop.xlane.xlu0 %908
        %v910 = vsel %vm398, %v766, 0.0
        %911 = vadd.xlane.f32.xlu0 %v910
        %v912 = vpop.xlane.xlu0 %911
        %v913 = vsel %vm398, %v767, 0.0
        %914 = vadd.xlane.f32.xlu0 %v913
        %v915 = vpop.xlane.xlu0 %914
        %v916 = vsel %vm398, %v768, 0.0
        %917 = vadd.xlane.f32.xlu0 %v916
        %v918 = vpop.xlane.xlu0 %917
        %v919 = vsel %vm398, %v769, 0.0
        %920 = vadd.xlane.f32.xlu0 %v919
        %v921 = vpop.xlane.xlu0 %920
        %v922 = vsel %vm398, %v770, 0.0
        %923 = vadd.xlane.f32.xlu0 %v922
        %v924 = vpop.xlane.xlu0 %923
        %v925 = vsel %vm398, %v771, 0.0
        %926 = vadd.xlane.f32.xlu0 %v925
        %v927 = vpop.xlane.xlu0 %926
        %v928 = vsel %vm398, %v772, 0.0
        %929 = vadd.xlane.f32.xlu0 %v928
        %v930 = vpop.xlane.xlu0 %929
        %v931 = vsel %vm398, %v773, 0.0
        %932 = vadd.xlane.f32.xlu0 %v931
        %v933 = vpop.xlane.xlu0 %932
        %v934 = vsel %vm398, %v774, 0.0
        %935 = vadd.xlane.f32.xlu0 %v934
        %v936 = vpop.xlane.xlu0 %935
        %v937 = vsel %vm398, %v775, 0.0
        %938 = vadd.xlane.f32.xlu0 %v937
        %v939 = vpop.xlane.xlu0 %938
        %v940 = vsel %vm398, %v776, 0.0
        %941 = vadd.xlane.f32.xlu0 %v940
        %v942 = vpop.xlane.xlu0 %941
        %v943 = vsel %vm398, %v777, 0.0
        %944 = vadd.xlane.f32.xlu0 %v943
        %v945 = vpop.xlane.xlu0 %944
        %v946 = vsel %vm398, %v778, 0.0
        %947 = vadd.xlane.f32.xlu0 %v946
        %v948 = vpop.xlane.xlu0 %947
        %v949 = vsel %vm398, %v779, 0.0
        %950 = vadd.xlane.f32.xlu0 %v949
        %v951 = vpop.xlane.xlu0 %950
        %v952 = vsel %vm398, %v780, 0.0
        %953 = vadd.xlane.f32.xlu0 %v952
        %v954 = vpop.xlane.xlu0 %953
        %v955 = vsel %vm398, %v781, 0.0
        %956 = vadd.xlane.f32.xlu0 %v955
        %v957 = vpop.xlane.xlu0 %956
        %v958 = vsel %vm398, %v782, 0.0
        %959 = vadd.xlane.f32.xlu0 %v958
        %v960 = vpop.xlane.xlu0 %959
        %v961 = vsel %vm398, %v783, 0.0
        %962 = vadd.xlane.f32.xlu0 %v961
        %v963 = vpop.xlane.xlu0 %962
        %v964 = vsel %vm398, %v784, 0.0
        %965 = vadd.xlane.f32.xlu0 %v964
        %v966 = vpop.xlane.xlu0 %965
        %v967 = vsel %vm398, %v785, 0.0
        %968 = vadd.xlane.f32.xlu0 %v967
        %v969 = vpop.xlane.xlu0 %968
        %v970 = vsel %vm398, %v786, 0.0
        %971 = vadd.xlane.f32.xlu0 %v970
        %v972 = vpop.xlane.xlu0 %971
        %v973 = vsel %vm398, %v787, 0.0
        %974 = vadd.xlane.f32.xlu0 %v973
        %v975 = vpop.xlane.xlu0 %974
        %v976 = vsel %vm398, %v788, 0.0
        %977 = vadd.xlane.f32.xlu0 %v976
        %v978 = vpop.xlane.xlu0 %977
        %v979 = vsel %vm398, %v789, 0.0
        %980 = vadd.xlane.f32.xlu0 %v979
        %v981 = vpop.xlane.xlu0 %980
        %v982 = vmul.f32 %v792, %v597
        %v983 = vmul.f32 %v795, %v597
        %v984 = vmul.f32 %v798, %v597
        %v985 = vmul.f32 %v801, %v597
        %v986 = vmul.f32 %v804, %v597
        %v987 = vmul.f32 %v807, %v597
        %v988 = vmul.f32 %v810, %v597
        %v989 = vmul.f32 %v813, %v597
        %v990 = vmul.f32 %v816, %v597
        %v991 = vmul.f32 %v819, %v597
        %v992 = vmul.f32 %v822, %v597
        %v993 = vmul.f32 %v825, %v597
        %v994 = vmul.f32 %v828, %v597
        %v995 = vmul.f32 %v831, %v597
        %v996 = vmul.f32 %v834, %v597
        %v997 = vmul.f32 %v837, %v597
        %v998 = vmul.f32 %v840, %v597
        %v999 = vmul.f32 %v843, %v597
        %v1000 = vmul.f32 %v846, %v597
        %v1001 = vmul.f32 %v849, %v597
        %v1002 = vmul.f32 %v852, %v597
        %v1003 = vmul.f32 %v855, %v597
        %v1004 = vmul.f32 %v858, %v597
        %v1005 = vmul.f32 %v861, %v597
        %v1006 = vmul.f32 %v864, %v597
        %v1007 = vmul.f32 %v867, %v597
        %v1008 = vmul.f32 %v870, %v597
        %v1009 = vmul.f32 %v873, %v597
        %v1010 = vmul.f32 %v876, %v597
        %v1011 = vmul.f32 %v879, %v597
        %v1012 = vmul.f32 %v882, %v597
        %v1013 = vmul.f32 %v885, %v597
        %v1014 = vmul.f32 %v888, %v597
        %v1015 = vmul.f32 %v891, %v597
        %v1016 = vmul.f32 %v894, %v597
        %v1017 = vmul.f32 %v897, %v597
        %v1018 = vmul.f32 %v900, %v597
        %v1019 = vmul.f32 %v903, %v597
        %v1020 = vmul.f32 %v906, %v597
        %v1021 = vmul.f32 %v909, %v597
        %v1022 = vmul.f32 %v912, %v597
        %v1023 = vmul.f32 %v915, %v597
        %v1024 = vmul.f32 %v918, %v597
        %v1025 = vmul.f32 %v921, %v597
        %v1026 = vmul.f32 %v924, %v597
        %v1027 = vmul.f32 %v927, %v597
        %v1028 = vmul.f32 %v930, %v597
        %v1029 = vmul.f32 %v933, %v597
        %v1030 = vmul.f32 %v936, %v597
        %v1031 = vmul.f32 %v939, %v597
        %v1032 = vmul.f32 %v942, %v597
        %v1033 = vmul.f32 %v945, %v597
        %v1034 = vmul.f32 %v948, %v597
        %v1035 = vmul.f32 %v951, %v597
        %v1036 = vmul.f32 %v954, %v597
        %v1037 = vmul.f32 %v957, %v597
        %v1038 = vmul.f32 %v960, %v597
        %v1039 = vmul.f32 %v963, %v597
        %v1040 = vmul.f32 %v966, %v597
        %v1041 = vmul.f32 %v969, %v597
        %v1042 = vmul.f32 %v972, %v597
        %v1043 = vmul.f32 %v975, %v597
        %v1044 = vmul.f32 %v978, %v597
        %v1045 = vmul.f32 %v981, %v597
        %v1046 = vadd.f32 %v982, 1e-05
        %v1047 = vadd.f32 %v983, 1e-05
        %v1048 = vadd.f32 %v984, 1e-05
        %v1049 = vadd.f32 %v985, 1e-05
        %v1050 = vadd.f32 %v986, 1e-05
        %v1051 = vadd.f32 %v987, 1e-05
        %v1052 = vadd.f32 %v988, 1e-05
        %v1053 = vadd.f32 %v989, 1e-05
        %v1054 = vadd.f32 %v990, 1e-05
        %v1055 = vadd.f32 %v991, 1e-05
        %v1056 = vadd.f32 %v992, 1e-05
        %v1057 = vadd.f32 %v993, 1e-05
        %v1058 = vadd.f32 %v994, 1e-05
        %v1059 = vadd.f32 %v995, 1e-05
        %v1060 = vadd.f32 %v996, 1e-05
        %v1061 = vadd.f32 %v997, 1e-05
        %v1062 = vadd.f32 %v998, 1e-05
        %v1063 = vadd.f32 %v999, 1e-05
        %v1064 = vadd.f32 %v1000, 1e-05
        %v1065 = vadd.f32 %v1001, 1e-05
        %v1066 = vadd.f32 %v1002, 1e-05
        %v1067 = vadd.f32 %v1003, 1e-05
        %v1068 = vadd.f32 %v1004, 1e-05
        %v1069 = vadd.f32 %v1005, 1e-05
        %v1070 = vadd.f32 %v1006, 1e-05
        %v1071 = vadd.f32 %v1007, 1e-05
        %v1072 = vadd.f32 %v1008, 1e-05
        %v1073 = vadd.f32 %v1009, 1e-05
        %v1074 = vadd.f32 %v1010, 1e-05
        %v1075 = vadd.f32 %v1011, 1e-05
        %v1076 = vadd.f32 %v1012, 1e-05
        %v1077 = vadd.f32 %v1013, 1e-05
        %v1078 = vadd.f32 %v1014, 1e-05
        %v1079 = vadd.f32 %v1015, 1e-05
        %v1080 = vadd.f32 %v1016, 1e-05
        %v1081 = vadd.f32 %v1017, 1e-05
        %v1082 = vadd.f32 %v1018, 1e-05
        %v1083 = vadd.f32 %v1019, 1e-05
        %v1084 = vadd.f32 %v1020, 1e-05
        %v1085 = vadd.f32 %v1021, 1e-05
        %v1086 = vadd.f32 %v1022, 1e-05
        %v1087 = vadd.f32 %v1023, 1e-05
        %v1088 = vadd.f32 %v1024, 1e-05
        %v1089 = vadd.f32 %v1025, 1e-05
        %v1090 = vadd.f32 %v1026, 1e-05
        %v1091 = vadd.f32 %v1027, 1e-05
        %v1092 = vadd.f32 %v1028, 1e-05
        %v1093 = vadd.f32 %v1029, 1e-05
        %v1094 = vadd.f32 %v1030, 1e-05
        %v1095 = vadd.f32 %v1031, 1e-05
        %v1096 = vadd.f32 %v1032, 1e-05
        %v1097 = vadd.f32 %v1033, 1e-05
        %v1098 = vadd.f32 %v1034, 1e-05
        %v1099 = vadd.f32 %v1035, 1e-05
        %v1100 = vadd.f32 %v1036, 1e-05
        %v1101 = vadd.f32 %v1037, 1e-05
        %v1102 = vadd.f32 %v1038, 1e-05
        %v1103 = vadd.f32 %v1039, 1e-05
        %v1104 = vadd.f32 %v1040, 1e-05
        %v1105 = vadd.f32 %v1041, 1e-05
        %v1106 = vadd.f32 %v1042, 1e-05
        %v1107 = vadd.f32 %v1043, 1e-05
        %v1108 = vadd.f32 %v1044, 1e-05
        %v1109 = vadd.f32 %v1045, 1e-05
        %v1110 = vrsqrt.pop %v1046
        %v1111 = vmul.f32 %v1110, %v1046
        %v1112 = vmul.f32 %v1111, %v1110
        %v1113 = vmul.f32 0.5, %v1112
        %v1114 = vsub.f32 1.5, %v1113
        %v1115 = vmul.f32 %v1110, %v1114
        %vm1116 = vweird.f32 %v1046
        %vm1117 = vweird.f32 %v1110
        %vm1118 = vmor %vm1116, %vm1117
        %v1119 = vsel %vm1118, %v1110, %v1115
        %v1120 = vrsqrt.pop %v1047
        %v1121 = vmul.f32 %v1120, %v1047
        %v1122 = vmul.f32 %v1121, %v1120
        %v1123 = vmul.f32 0.5, %v1122
        %v1124 = vsub.f32 1.5, %v1123
        %v1125 = vmul.f32 %v1120, %v1124
        %vm1126 = vweird.f32 %v1047
        %vm1127 = vweird.f32 %v1120
        %vm1128 = vmor %vm1126, %vm1127
        %v1129 = vsel %vm1128, %v1120, %v1125
        %v1130 = vrsqrt.pop %v1048
        %v1131 = vmul.f32 %v1130, %v1048
        %v1132 = vmul.f32 %v1131, %v1130
        %v1133 = vmul.f32 0.5, %v1132
        %v1134 = vsub.f32 1.5, %v1133
        %v1135 = vmul.f32 %v1130, %v1134
        %vm1136 = vweird.f32 %v1048
        %vm1137 = vweird.f32 %v1130
        %vm1138 = vmor %vm1136, %vm1137
        %v1139 = vsel %vm1138, %v1130, %v1135
        %v1140 = vrsqrt.pop %v1049
        %v1141 = vmul.f32 %v1140, %v1049
        %v1142 = vmul.f32 %v1141, %v1140
        %v1143 = vmul.f32 0.5, %v1142
        %v1144 = vsub.f32 1.5, %v1143
        %v1145 = vmul.f32 %v1140, %v1144
        %vm1146 = vweird.f32 %v1049
        %vm1147 = vweird.f32 %v1140
        %vm1148 = vmor %vm1146, %vm1147
        %v1149 = vsel %vm1148, %v1140, %v1145
        %v1150 = vrsqrt.pop %v1050
        %v1151 = vmul.f32 %v1150, %v1050
        %v1152 = vmul.f32 %v1151, %v1150
        %v1153 = vmul.f32 0.5, %v1152
        %v1154 = vsub.f32 1.5, %v1153
        %v1155 = vmul.f32 %v1150, %v1154
        %vm1156 = vweird.f32 %v1050
        %vm1157 = vweird.f32 %v1150
        %vm1158 = vmor %vm1156, %vm1157
        %v1159 = vsel %vm1158, %v1150, %v1155
        %v1160 = vrsqrt.pop %v1051
        %v1161 = vmul.f32 %v1160, %v1051
        %v1162 = vmul.f32 %v1161, %v1160
        %v1163 = vmul.f32 0.5, %v1162
        %v1164 = vsub.f32 1.5, %v1163
        %v1165 = vmul.f32 %v1160, %v1164
        %vm1166 = vweird.f32 %v1051
        %vm1167 = vweird.f32 %v1160
        %vm1168 = vmor %vm1166, %vm1167
        %v1169 = vsel %vm1168, %v1160, %v1165
        %v1170 = vrsqrt.pop %v1052
        %v1171 = vmul.f32 %v1170, %v1052
        %v1172 = vmul.f32 %v1171, %v1170
        %v1173 = vmul.f32 0.5, %v1172
        %v1174 = vsub.f32 1.5, %v1173
        %v1175 = vmul.f32 %v1170, %v1174
        %vm1176 = vweird.f32 %v1052
        %vm1177 = vweird.f32 %v1170
        %vm1178 = vmor %vm1176, %vm1177
        %v1179 = vsel %vm1178, %v1170, %v1175
        %v1180 = vrsqrt.pop %v1053
        %v1181 = vmul.f32 %v1180, %v1053
        %v1182 = vmul.f32 %v1181, %v1180
        %v1183 = vmul.f32 0.5, %v1182
        %v1184 = vsub.f32 1.5, %v1183
        %v1185 = vmul.f32 %v1180, %v1184
        %vm1186 = vweird.f32 %v1053
        %vm1187 = vweird.f32 %v1180
        %vm1188 = vmor %vm1186, %vm1187
        %v1189 = vsel %vm1188, %v1180, %v1185
        %v1190 = vrsqrt.pop %v1054
        %v1191 = vmul.f32 %v1190, %v1054
        %v1192 = vmul.f32 %v1191, %v1190
        %v1193 = vmul.f32 0.5, %v1192
        %v1194 = vsub.f32 1.5, %v1193
        %v1195 = vmul.f32 %v1190, %v1194
        %vm1196 = vweird.f32 %v1054
        %vm1197 = vweird.f32 %v1190
        %vm1198 = vmor %vm1196, %vm1197
        %v1199 = vsel %vm1198, %v1190, %v1195
        %v1200 = vrsqrt.pop %v1055
        %v1201 = vmul.f32 %v1200, %v1055
        %v1202 = vmul.f32 %v1201, %v1200
        %v1203 = vmul.f32 0.5, %v1202
        %v1204 = vsub.f32 1.5, %v1203
        %v1205 = vmul.f32 %v1200, %v1204
        %vm1206 = vweird.f32 %v1055
        %vm1207 = vweird.f32 %v1200
        %vm1208 = vmor %vm1206, %vm1207
        %v1209 = vsel %vm1208, %v1200, %v1205
        %v1210 = vrsqrt.pop %v1056
        %v1211 = vmul.f32 %v1210, %v1056
        %v1212 = vmul.f32 %v1211, %v1210
        %v1213 = vmul.f32 0.5, %v1212
        %v1214 = vsub.f32 1.5, %v1213
        %v1215 = vmul.f32 %v1210, %v1214
        %vm1216 = vweird.f32 %v1056
        %vm1217 = vweird.f32 %v1210
        %vm1218 = vmor %vm1216, %vm1217
        %v1219 = vsel %vm1218, %v1210, %v1215
        %v1220 = vrsqrt.pop %v1057
        %v1221 = vmul.f32 %v1220, %v1057
        %v1222 = vmul.f32 %v1221, %v1220
        %v1223 = vmul.f32 0.5, %v1222
        %v1224 = vsub.f32 1.5, %v1223
        %v1225 = vmul.f32 %v1220, %v1224
        %vm1226 = vweird.f32 %v1057
        %vm1227 = vweird.f32 %v1220
        %vm1228 = vmor %vm1226, %vm1227
        %v1229 = vsel %vm1228, %v1220, %v1225
        %v1230 = vrsqrt.pop %v1058
        %v1231 = vmul.f32 %v1230, %v1058
        %v1232 = vmul.f32 %v1231, %v1230
        %v1233 = vmul.f32 0.5, %v1232
        %v1234 = vsub.f32 1.5, %v1233
        %v1235 = vmul.f32 %v1230, %v1234
        %vm1236 = vweird.f32 %v1058
        %vm1237 = vweird.f32 %v1230
        %vm1238 = vmor %vm1236, %vm1237
        %v1239 = vsel %vm1238, %v1230, %v1235
        %v1240 = vrsqrt.pop %v1059
        %v1241 = vmul.f32 %v1240, %v1059
        %v1242 = vmul.f32 %v1241, %v1240
        %v1243 = vmul.f32 0.5, %v1242
        %v1244 = vsub.f32 1.5, %v1243
        %v1245 = vmul.f32 %v1240, %v1244
        %vm1246 = vweird.f32 %v1059
        %vm1247 = vweird.f32 %v1240
        %vm1248 = vmor %vm1246, %vm1247
        %v1249 = vsel %vm1248, %v1240, %v1245
        %v1250 = vrsqrt.pop %v1060
        %v1251 = vmul.f32 %v1250, %v1060
        %v1252 = vmul.f32 %v1251, %v1250
        %v1253 = vmul.f32 0.5, %v1252
        %v1254 = vsub.f32 1.5, %v1253
        %v1255 = vmul.f32 %v1250, %v1254
        %vm1256 = vweird.f32 %v1060
        %vm1257 = vweird.f32 %v1250
        %vm1258 = vmor %vm1256, %vm1257
        %v1259 = vsel %vm1258, %v1250, %v1255
        %v1260 = vrsqrt.pop %v1061
        %v1261 = vmul.f32 %v1260, %v1061
        %v1262 = vmul.f32 %v1261, %v1260
        %v1263 = vmul.f32 0.5, %v1262
        %v1264 = vsub.f32 1.5, %v1263
        %v1265 = vmul.f32 %v1260, %v1264
        %vm1266 = vweird.f32 %v1061
        %vm1267 = vweird.f32 %v1260
        %vm1268 = vmor %vm1266, %vm1267
        %v1269 = vsel %vm1268, %v1260, %v1265
        %v1270 = vrsqrt.pop %v1062
        %v1271 = vmul.f32 %v1270, %v1062
        %v1272 = vmul.f32 %v1271, %v1270
        %v1273 = vmul.f32 0.5, %v1272
        %v1274 = vsub.f32 1.5, %v1273
        %v1275 = vmul.f32 %v1270, %v1274
        %vm1276 = vweird.f32 %v1062
        %vm1277 = vweird.f32 %v1270
        %vm1278 = vmor %vm1276, %vm1277
        %v1279 = vsel %vm1278, %v1270, %v1275
        %v1280 = vrsqrt.pop %v1063
        %v1281 = vmul.f32 %v1280, %v1063
        %v1282 = vmul.f32 %v1281, %v1280
        %v1283 = vmul.f32 0.5, %v1282
        %v1284 = vsub.f32 1.5, %v1283
        %v1285 = vmul.f32 %v1280, %v1284
        %vm1286 = vweird.f32 %v1063
        %vm1287 = vweird.f32 %v1280
        %vm1288 = vmor %vm1286, %vm1287
        %v1289 = vsel %vm1288, %v1280, %v1285
        %v1290 = vrsqrt.pop %v1064
        %v1291 = vmul.f32 %v1290, %v1064
        %v1292 = vmul.f32 %v1291, %v1290
        %v1293 = vmul.f32 0.5, %v1292
        %v1294 = vsub.f32 1.5, %v1293
        %v1295 = vmul.f32 %v1290, %v1294
        %vm1296 = vweird.f32 %v1064
        %vm1297 = vweird.f32 %v1290
        %vm1298 = vmor %vm1296, %vm1297
        %v1299 = vsel %vm1298, %v1290, %v1295
        %v1300 = vrsqrt.pop %v1065
        %v1301 = vmul.f32 %v1300, %v1065
        %v1302 = vmul.f32 %v1301, %v1300
        %v1303 = vmul.f32 0.5, %v1302
        %v1304 = vsub.f32 1.5, %v1303
        %v1305 = vmul.f32 %v1300, %v1304
        %vm1306 = vweird.f32 %v1065
        %vm1307 = vweird.f32 %v1300
        %vm1308 = vmor %vm1306, %vm1307
        %v1309 = vsel %vm1308, %v1300, %v1305
        %v1310 = vrsqrt.pop %v1066
        %v1311 = vmul.f32 %v1310, %v1066
        %v1312 = vmul.f32 %v1311, %v1310
        %v1313 = vmul.f32 0.5, %v1312
        %v1314 = vsub.f32 1.5, %v1313
        %v1315 = vmul.f32 %v1310, %v1314
        %vm1316 = vweird.f32 %v1066
        %vm1317 = vweird.f32 %v1310
        %vm1318 = vmor %vm1316, %vm1317
        %v1319 = vsel %vm1318, %v1310, %v1315
        %v1320 = vrsqrt.pop %v1067
        %v1321 = vmul.f32 %v1320, %v1067
        %v1322 = vmul.f32 %v1321, %v1320
        %v1323 = vmul.f32 0.5, %v1322
        %v1324 = vsub.f32 1.5, %v1323
        %v1325 = vmul.f32 %v1320, %v1324
        %vm1326 = vweird.f32 %v1067
        %vm1327 = vweird.f32 %v1320
        %vm1328 = vmor %vm1326, %vm1327
        %v1329 = vsel %vm1328, %v1320, %v1325
        %v1330 = vrsqrt.pop %v1068
        %v1331 = vmul.f32 %v1330, %v1068
        %v1332 = vmul.f32 %v1331, %v1330
        %v1333 = vmul.f32 0.5, %v1332
        %v1334 = vsub.f32 1.5, %v1333
        %v1335 = vmul.f32 %v1330, %v1334
        %vm1336 = vweird.f32 %v1068
        %vm1337 = vweird.f32 %v1330
        %vm1338 = vmor %vm1336, %vm1337
        %v1339 = vsel %vm1338, %v1330, %v1335
        %v1340 = vrsqrt.pop %v1069
        %v1341 = vmul.f32 %v1340, %v1069
        %v1342 = vmul.f32 %v1341, %v1340
        %v1343 = vmul.f32 0.5, %v1342
        %v1344 = vsub.f32 1.5, %v1343
        %v1345 = vmul.f32 %v1340, %v1344
        %vm1346 = vweird.f32 %v1069
        %vm1347 = vweird.f32 %v1340
        %vm1348 = vmor %vm1346, %vm1347
        %v1349 = vsel %vm1348, %v1340, %v1345
        %v1350 = vrsqrt.pop %v1070
        %v1351 = vmul.f32 %v1350, %v1070
        %v1352 = vmul.f32 %v1351, %v1350
        %v1353 = vmul.f32 0.5, %v1352
        %v1354 = vsub.f32 1.5, %v1353
        %v1355 = vmul.f32 %v1350, %v1354
        %vm1356 = vweird.f32 %v1070
        %vm1357 = vweird.f32 %v1350
        %vm1358 = vmor %vm1356, %vm1357
        %v1359 = vsel %vm1358, %v1350, %v1355
        %v1360 = vrsqrt.pop %v1071
        %v1361 = vmul.f32 %v1360, %v1071
        %v1362 = vmul.f32 %v1361, %v1360
        %v1363 = vmul.f32 0.5, %v1362
        %v1364 = vsub.f32 1.5, %v1363
        %v1365 = vmul.f32 %v1360, %v1364
        %vm1366 = vweird.f32 %v1071
        %vm1367 = vweird.f32 %v1360
        %vm1368 = vmor %vm1366, %vm1367
        %v1369 = vsel %vm1368, %v1360, %v1365
        %v1370 = vrsqrt.pop %v1072
        %v1371 = vmul.f32 %v1370, %v1072
        %v1372 = vmul.f32 %v1371, %v1370
        %v1373 = vmul.f32 0.5, %v1372
        %v1374 = vsub.f32 1.5, %v1373
        %v1375 = vmul.f32 %v1370, %v1374
        %vm1376 = vweird.f32 %v1072
        %vm1377 = vweird.f32 %v1370
        %vm1378 = vmor %vm1376, %vm1377
        %v1379 = vsel %vm1378, %v1370, %v1375
        %v1380 = vrsqrt.pop %v1073
        %v1381 = vmul.f32 %v1380, %v1073
        %v1382 = vmul.f32 %v1381, %v1380
        %v1383 = vmul.f32 0.5, %v1382
        %v1384 = vsub.f32 1.5, %v1383
        %v1385 = vmul.f32 %v1380, %v1384
        %vm1386 = vweird.f32 %v1073
        %vm1387 = vweird.f32 %v1380
        %vm1388 = vmor %vm1386, %vm1387
        %v1389 = vsel %vm1388, %v1380, %v1385
        %v1390 = vrsqrt.pop %v1074
        %v1391 = vmul.f32 %v1390, %v1074
        %v1392 = vmul.f32 %v1391, %v1390
        %v1393 = vmul.f32 0.5, %v1392
        %v1394 = vsub.f32 1.5, %v1393
        %v1395 = vmul.f32 %v1390, %v1394
        %vm1396 = vweird.f32 %v1074
        %vm1397 = vweird.f32 %v1390
        %vm1398 = vmor %vm1396, %vm1397
        %v1399 = vsel %vm1398, %v1390, %v1395
        %v1400 = vrsqrt.pop %v1075
        %v1401 = vmul.f32 %v1400, %v1075
        %v1402 = vmul.f32 %v1401, %v1400
        %v1403 = vmul.f32 0.5, %v1402
        %v1404 = vsub.f32 1.5, %v1403
        %v1405 = vmul.f32 %v1400, %v1404
        %vm1406 = vweird.f32 %v1075
        %vm1407 = vweird.f32 %v1400
        %vm1408 = vmor %vm1406, %vm1407
        %v1409 = vsel %vm1408, %v1400, %v1405
        %v1410 = vrsqrt.pop %v1076
        %v1411 = vmul.f32 %v1410, %v1076
        %v1412 = vmul.f32 %v1411, %v1410
        %v1413 = vmul.f32 0.5, %v1412
        %v1414 = vsub.f32 1.5, %v1413
        %v1415 = vmul.f32 %v1410, %v1414
        %vm1416 = vweird.f32 %v1076
        %vm1417 = vweird.f32 %v1410
        %vm1418 = vmor %vm1416, %vm1417
        %v1419 = vsel %vm1418, %v1410, %v1415
        %v1420 = vrsqrt.pop %v1077
        %v1421 = vmul.f32 %v1420, %v1077
        %v1422 = vmul.f32 %v1421, %v1420
        %v1423 = vmul.f32 0.5, %v1422
        %v1424 = vsub.f32 1.5, %v1423
        %v1425 = vmul.f32 %v1420, %v1424
        %vm1426 = vweird.f32 %v1077
        %vm1427 = vweird.f32 %v1420
        %vm1428 = vmor %vm1426, %vm1427
        %v1429 = vsel %vm1428, %v1420, %v1425
        %v1430 = vrsqrt.pop %v1078
        %v1431 = vmul.f32 %v1430, %v1078
        %v1432 = vmul.f32 %v1431, %v1430
        %v1433 = vmul.f32 0.5, %v1432
        %v1434 = vsub.f32 1.5, %v1433
        %v1435 = vmul.f32 %v1430, %v1434
        %vm1436 = vweird.f32 %v1078
        %vm1437 = vweird.f32 %v1430
        %vm1438 = vmor %vm1436, %vm1437
        %v1439 = vsel %vm1438, %v1430, %v1435
        %v1440 = vrsqrt.pop %v1079
        %v1441 = vmul.f32 %v1440, %v1079
        %v1442 = vmul.f32 %v1441, %v1440
        %v1443 = vmul.f32 0.5, %v1442
        %v1444 = vsub.f32 1.5, %v1443
        %v1445 = vmul.f32 %v1440, %v1444
        %vm1446 = vweird.f32 %v1079
        %vm1447 = vweird.f32 %v1440
        %vm1448 = vmor %vm1446, %vm1447
        %v1449 = vsel %vm1448, %v1440, %v1445
        %v1450 = vrsqrt.pop %v1080
        %v1451 = vmul.f32 %v1450, %v1080
        %v1452 = vmul.f32 %v1451, %v1450
        %v1453 = vmul.f32 0.5, %v1452
        %v1454 = vsub.f32 1.5, %v1453
        %v1455 = vmul.f32 %v1450, %v1454
        %vm1456 = vweird.f32 %v1080
        %vm1457 = vweird.f32 %v1450
        %vm1458 = vmor %vm1456, %vm1457
        %v1459 = vsel %vm1458, %v1450, %v1455
        %v1460 = vrsqrt.pop %v1081
        %v1461 = vmul.f32 %v1460, %v1081
        %v1462 = vmul.f32 %v1461, %v1460
        %v1463 = vmul.f32 0.5, %v1462
        %v1464 = vsub.f32 1.5, %v1463
        %v1465 = vmul.f32 %v1460, %v1464
        %vm1466 = vweird.f32 %v1081
        %vm1467 = vweird.f32 %v1460
        %vm1468 = vmor %vm1466, %vm1467
        %v1469 = vsel %vm1468, %v1460, %v1465
        %v1470 = vrsqrt.pop %v1082
        %v1471 = vmul.f32 %v1470, %v1082
        %v1472 = vmul.f32 %v1471, %v1470
        %v1473 = vmul.f32 0.5, %v1472
        %v1474 = vsub.f32 1.5, %v1473
        %v1475 = vmul.f32 %v1470, %v1474
        %vm1476 = vweird.f32 %v1082
        %vm1477 = vweird.f32 %v1470
        %vm1478 = vmor %vm1476, %vm1477
        %v1479 = vsel %vm1478, %v1470, %v1475
        %v1480 = vrsqrt.pop %v1083
        %v1481 = vmul.f32 %v1480, %v1083
        %v1482 = vmul.f32 %v1481, %v1480
        %v1483 = vmul.f32 0.5, %v1482
        %v1484 = vsub.f32 1.5, %v1483
        %v1485 = vmul.f32 %v1480, %v1484
        %vm1486 = vweird.f32 %v1083
        %vm1487 = vweird.f32 %v1480
        %vm1488 = vmor %vm1486, %vm1487
        %v1489 = vsel %vm1488, %v1480, %v1485
        %v1490 = vrsqrt.pop %v1084
        %v1491 = vmul.f32 %v1490, %v1084
        %v1492 = vmul.f32 %v1491, %v1490
        %v1493 = vmul.f32 0.5, %v1492
        %v1494 = vsub.f32 1.5, %v1493
        %v1495 = vmul.f32 %v1490, %v1494
        %vm1496 = vweird.f32 %v1084
        %vm1497 = vweird.f32 %v1490
        %vm1498 = vmor %vm1496, %vm1497
        %v1499 = vsel %vm1498, %v1490, %v1495
        %v1500 = vrsqrt.pop %v1085
        %v1501 = vmul.f32 %v1500, %v1085
        %v1502 = vmul.f32 %v1501, %v1500
        %v1503 = vmul.f32 0.5, %v1502
        %v1504 = vsub.f32 1.5, %v1503
        %v1505 = vmul.f32 %v1500, %v1504
        %vm1506 = vweird.f32 %v1085
        %vm1507 = vweird.f32 %v1500
        %vm1508 = vmor %vm1506, %vm1507
        %v1509 = vsel %vm1508, %v1500, %v1505
        %v1510 = vrsqrt.pop %v1086
        %v1511 = vmul.f32 %v1510, %v1086
        %v1512 = vmul.f32 %v1511, %v1510
        %v1513 = vmul.f32 0.5, %v1512
        %v1514 = vsub.f32 1.5, %v1513
        %v1515 = vmul.f32 %v1510, %v1514
        %vm1516 = vweird.f32 %v1086
        %vm1517 = vweird.f32 %v1510
        %vm1518 = vmor %vm1516, %vm1517
        %v1519 = vsel %vm1518, %v1510, %v1515
        %v1520 = vrsqrt.pop %v1087
        %v1521 = vmul.f32 %v1520, %v1087
        %v1522 = vmul.f32 %v1521, %v1520
        %v1523 = vmul.f32 0.5, %v1522
        %v1524 = vsub.f32 1.5, %v1523
        %v1525 = vmul.f32 %v1520, %v1524
        %vm1526 = vweird.f32 %v1087
        %vm1527 = vweird.f32 %v1520
        %vm1528 = vmor %vm1526, %vm1527
        %v1529 = vsel %vm1528, %v1520, %v1525
        %v1530 = vrsqrt.pop %v1088
        %v1531 = vmul.f32 %v1530, %v1088
        %v1532 = vmul.f32 %v1531, %v1530
        %v1533 = vmul.f32 0.5, %v1532
        %v1534 = vsub.f32 1.5, %v1533
        %v1535 = vmul.f32 %v1530, %v1534
        %vm1536 = vweird.f32 %v1088
        %vm1537 = vweird.f32 %v1530
        %vm1538 = vmor %vm1536, %vm1537
        %v1539 = vsel %vm1538, %v1530, %v1535
        %v1540 = vrsqrt.pop %v1089
        %v1541 = vmul.f32 %v1540, %v1089
        %v1542 = vmul.f32 %v1541, %v1540
        %v1543 = vmul.f32 0.5, %v1542
        %v1544 = vsub.f32 1.5, %v1543
        %v1545 = vmul.f32 %v1540, %v1544
        %vm1546 = vweird.f32 %v1089
        %vm1547 = vweird.f32 %v1540
        %vm1548 = vmor %vm1546, %vm1547
        %v1549 = vsel %vm1548, %v1540, %v1545
        %v1550 = vrsqrt.pop %v1090
        %v1551 = vmul.f32 %v1550, %v1090
        %v1552 = vmul.f32 %v1551, %v1550
        %v1553 = vmul.f32 0.5, %v1552
        %v1554 = vsub.f32 1.5, %v1553
        %v1555 = vmul.f32 %v1550, %v1554
        %vm1556 = vweird.f32 %v1090
        %vm1557 = vweird.f32 %v1550
        %vm1558 = vmor %vm1556, %vm1557
        %v1559 = vsel %vm1558, %v1550, %v1555
        %v1560 = vrsqrt.pop %v1091
        %v1561 = vmul.f32 %v1560, %v1091
        %v1562 = vmul.f32 %v1561, %v1560
        %v1563 = vmul.f32 0.5, %v1562
        %v1564 = vsub.f32 1.5, %v1563
        %v1565 = vmul.f32 %v1560, %v1564
        %vm1566 = vweird.f32 %v1091
        %vm1567 = vweird.f32 %v1560
        %vm1568 = vmor %vm1566, %vm1567
        %v1569 = vsel %vm1568, %v1560, %v1565
        %v1570 = vrsqrt.pop %v1092
        %v1571 = vmul.f32 %v1570, %v1092
        %v1572 = vmul.f32 %v1571, %v1570
        %v1573 = vmul.f32 0.5, %v1572
        %v1574 = vsub.f32 1.5, %v1573
        %v1575 = vmul.f32 %v1570, %v1574
        %vm1576 = vweird.f32 %v1092
        %vm1577 = vweird.f32 %v1570
        %vm1578 = vmor %vm1576, %vm1577
        %v1579 = vsel %vm1578, %v1570, %v1575
        %v1580 = vrsqrt.pop %v1093
        %v1581 = vmul.f32 %v1580, %v1093
        %v1582 = vmul.f32 %v1581, %v1580
        %v1583 = vmul.f32 0.5, %v1582
        %v1584 = vsub.f32 1.5, %v1583
        %v1585 = vmul.f32 %v1580, %v1584
        %vm1586 = vweird.f32 %v1093
        %vm1587 = vweird.f32 %v1580
        %vm1588 = vmor %vm1586, %vm1587
        %v1589 = vsel %vm1588, %v1580, %v1585
        %v1590 = vrsqrt.pop %v1094
        %v1591 = vmul.f32 %v1590, %v1094
        %v1592 = vmul.f32 %v1591, %v1590
        %v1593 = vmul.f32 0.5, %v1592
        %v1594 = vsub.f32 1.5, %v1593
        %v1595 = vmul.f32 %v1590, %v1594
        %vm1596 = vweird.f32 %v1094
        %vm1597 = vweird.f32 %v1590
        %vm1598 = vmor %vm1596, %vm1597
        %v1599 = vsel %vm1598, %v1590, %v1595
        %v1600 = vrsqrt.pop %v1095
        %v1601 = vmul.f32 %v1600, %v1095
        %v1602 = vmul.f32 %v1601, %v1600
        %v1603 = vmul.f32 0.5, %v1602
        %v1604 = vsub.f32 1.5, %v1603
        %v1605 = vmul.f32 %v1600, %v1604
        %vm1606 = vweird.f32 %v1095
        %vm1607 = vweird.f32 %v1600
        %vm1608 = vmor %vm1606, %vm1607
        %v1609 = vsel %vm1608, %v1600, %v1605
        %v1610 = vrsqrt.pop %v1096
        %v1611 = vmul.f32 %v1610, %v1096
        %v1612 = vmul.f32 %v1611, %v1610
        %v1613 = vmul.f32 0.5, %v1612
        %v1614 = vsub.f32 1.5, %v1613
        %v1615 = vmul.f32 %v1610, %v1614
        %vm1616 = vweird.f32 %v1096
        %vm1617 = vweird.f32 %v1610
        %vm1618 = vmor %vm1616, %vm1617
        %v1619 = vsel %vm1618, %v1610, %v1615
        %v1620 = vrsqrt.pop %v1097
        %v1621 = vmul.f32 %v1620, %v1097
        %v1622 = vmul.f32 %v1621, %v1620
        %v1623 = vmul.f32 0.5, %v1622
        %v1624 = vsub.f32 1.5, %v1623
        %v1625 = vmul.f32 %v1620, %v1624
        %vm1626 = vweird.f32 %v1097
        %vm1627 = vweird.f32 %v1620
        %vm1628 = vmor %vm1626, %vm1627
        %v1629 = vsel %vm1628, %v1620, %v1625
        %v1630 = vrsqrt.pop %v1098
        %v1631 = vmul.f32 %v1630, %v1098
        %v1632 = vmul.f32 %v1631, %v1630
        %v1633 = vmul.f32 0.5, %v1632
        %v1634 = vsub.f32 1.5, %v1633
        %v1635 = vmul.f32 %v1630, %v1634
        %vm1636 = vweird.f32 %v1098
        %vm1637 = vweird.f32 %v1630
        %vm1638 = vmor %vm1636, %vm1637
        %v1639 = vsel %vm1638, %v1630, %v1635
        %v1640 = vrsqrt.pop %v1099
        %v1641 = vmul.f32 %v1640, %v1099
        %v1642 = vmul.f32 %v1641, %v1640
        %v1643 = vmul.f32 0.5, %v1642
        %v1644 = vsub.f32 1.5, %v1643
        %v1645 = vmul.f32 %v1640, %v1644
        %vm1646 = vweird.f32 %v1099
        %vm1647 = vweird.f32 %v1640
        %vm1648 = vmor %vm1646, %vm1647
        %v1649 = vsel %vm1648, %v1640, %v1645
        %v1650 = vrsqrt.pop %v1100
        %v1651 = vmul.f32 %v1650, %v1100
        %v1652 = vmul.f32 %v1651, %v1650
        %v1653 = vmul.f32 0.5, %v1652
        %v1654 = vsub.f32 1.5, %v1653
        %v1655 = vmul.f32 %v1650, %v1654
        %vm1656 = vweird.f32 %v1100
        %vm1657 = vweird.f32 %v1650
        %vm1658 = vmor %vm1656, %vm1657
        %v1659 = vsel %vm1658, %v1650, %v1655
        %v1660 = vrsqrt.pop %v1101
        %v1661 = vmul.f32 %v1660, %v1101
        %v1662 = vmul.f32 %v1661, %v1660
        %v1663 = vmul.f32 0.5, %v1662
        %v1664 = vsub.f32 1.5, %v1663
        %v1665 = vmul.f32 %v1660, %v1664
        %vm1666 = vweird.f32 %v1101
        %vm1667 = vweird.f32 %v1660
        %vm1668 = vmor %vm1666, %vm1667
        %v1669 = vsel %vm1668, %v1660, %v1665
        %v1670 = vrsqrt.pop %v1102
        %v1671 = vmul.f32 %v1670, %v1102
        %v1672 = vmul.f32 %v1671, %v1670
        %v1673 = vmul.f32 0.5, %v1672
        %v1674 = vsub.f32 1.5, %v1673
        %v1675 = vmul.f32 %v1670, %v1674
        %vm1676 = vweird.f32 %v1102
        %vm1677 = vweird.f32 %v1670
        %vm1678 = vmor %vm1676, %vm1677
        %v1679 = vsel %vm1678, %v1670, %v1675
        %v1680 = vrsqrt.pop %v1103
        %v1681 = vmul.f32 %v1680, %v1103
        %v1682 = vmul.f32 %v1681, %v1680
        %v1683 = vmul.f32 0.5, %v1682
        %v1684 = vsub.f32 1.5, %v1683
        %v1685 = vmul.f32 %v1680, %v1684
        %vm1686 = vweird.f32 %v1103
        %vm1687 = vweird.f32 %v1680
        %vm1688 = vmor %vm1686, %vm1687
        %v1689 = vsel %vm1688, %v1680, %v1685
        %v1690 = vrsqrt.pop %v1104
        %v1691 = vmul.f32 %v1690, %v1104
        %v1692 = vmul.f32 %v1691, %v1690
        %v1693 = vmul.f32 0.5, %v1692
        %v1694 = vsub.f32 1.5, %v1693
        %v1695 = vmul.f32 %v1690, %v1694
        %vm1696 = vweird.f32 %v1104
        %vm1697 = vweird.f32 %v1690
        %vm1698 = vmor %vm1696, %vm1697
        %v1699 = vsel %vm1698, %v1690, %v1695
        %v1700 = vrsqrt.pop %v1105
        %v1701 = vmul.f32 %v1700, %v1105
        %v1702 = vmul.f32 %v1701, %v1700
        %v1703 = vmul.f32 0.5, %v1702
        %v1704 = vsub.f32 1.5, %v1703
        %v1705 = vmul.f32 %v1700, %v1704
        %vm1706 = vweird.f32 %v1105
        %vm1707 = vweird.f32 %v1700
        %vm1708 = vmor %vm1706, %vm1707
        %v1709 = vsel %vm1708, %v1700, %v1705
        %v1710 = vrsqrt.pop %v1106
        %v1711 = vmul.f32 %v1710, %v1106
        %v1712 = vmul.f32 %v1711, %v1710
        %v1713 = vmul.f32 0.5, %v1712
        %v1714 = vsub.f32 1.5, %v1713
        %v1715 = vmul.f32 %v1710, %v1714
        %vm1716 = vweird.f32 %v1106
        %vm1717 = vweird.f32 %v1710
        %vm1718 = vmor %vm1716, %vm1717
        %v1719 = vsel %vm1718, %v1710, %v1715
        %v1720 = vrsqrt.pop %v1107
        %v1721 = vmul.f32 %v1720, %v1107
        %v1722 = vmul.f32 %v1721, %v1720
        %v1723 = vmul.f32 0.5, %v1722
        %v1724 = vsub.f32 1.5, %v1723
        %v1725 = vmul.f32 %v1720, %v1724
        %vm1726 = vweird.f32 %v1107
        %vm1727 = vweird.f32 %v1720
        %vm1728 = vmor %vm1726, %vm1727
        %v1729 = vsel %vm1728, %v1720, %v1725
        %v1730 = vrsqrt.pop %v1108
        %v1731 = vmul.f32 %v1730, %v1108
        %v1732 = vmul.f32 %v1731, %v1730
        %v1733 = vmul.f32 0.5, %v1732
        %v1734 = vsub.f32 1.5, %v1733
        %v1735 = vmul.f32 %v1730, %v1734
        %vm1736 = vweird.f32 %v1108
        %vm1737 = vweird.f32 %v1730
        %vm1738 = vmor %vm1736, %vm1737
        %v1739 = vsel %vm1738, %v1730, %v1735
        %v1740 = vrsqrt.pop %v1109
        %v1741 = vmul.f32 %v1740, %v1109
        %v1742 = vmul.f32 %v1741, %v1740
        %v1743 = vmul.f32 0.5, %v1742
        %v1744 = vsub.f32 1.5, %v1743
        %v1745 = vmul.f32 %v1740, %v1744
        %vm1746 = vweird.f32 %v1109
        %vm1747 = vweird.f32 %v1740
        %vm1748 = vmor %vm1746, %vm1747
        %v1749 = vsel %vm1748, %v1740, %v1745
        %v1750 = vmul.f32 %v662, %v1119
        %v1751 = vmul.f32 %v663, %v1129
        %v1752 = vmul.f32 %v664, %v1139
        %v1753 = vmul.f32 %v665, %v1149
        %v1754 = vmul.f32 %v666, %v1159
        %v1755 = vmul.f32 %v667, %v1169
        %v1756 = vmul.f32 %v668, %v1179
        %v1757 = vmul.f32 %v669, %v1189
        %v1758 = vmul.f32 %v670, %v1199
        %v1759 = vmul.f32 %v671, %v1209
        %v1760 = vmul.f32 %v672, %v1219
        %v1761 = vmul.f32 %v673, %v1229
        %v1762 = vmul.f32 %v674, %v1239
        %v1763 = vmul.f32 %v675, %v1249
        %v1764 = vmul.f32 %v676, %v1259
        %v1765 = vmul.f32 %v677, %v1269
        %v1766 = vmul.f32 %v678, %v1279
        %v1767 = vmul.f32 %v679, %v1289
        %v1768 = vmul.f32 %v680, %v1299
        %v1769 = vmul.f32 %v681, %v1309
        %v1770 = vmul.f32 %v682, %v1319
        %v1771 = vmul.f32 %v683, %v1329
        %v1772 = vmul.f32 %v684, %v1339
        %v1773 = vmul.f32 %v685, %v1349
        %v1774 = vmul.f32 %v686, %v1359
        %v1775 = vmul.f32 %v687, %v1369
        %v1776 = vmul.f32 %v688, %v1379
        %v1777 = vmul.f32 %v689, %v1389
        %v1778 = vmul.f32 %v690, %v1399
        %v1779 = vmul.f32 %v691, %v1409
        %v1780 = vmul.f32 %v692, %v1419
        %v1781 = vmul.f32 %v693, %v1429
        %v1782 = vmul.f32 %v694, %v1439
        %v1783 = vmul.f32 %v695, %v1449
        %v1784 = vmul.f32 %v696, %v1459
        %v1785 = vmul.f32 %v697, %v1469
        %v1786 = vmul.f32 %v698, %v1479
        %v1787 = vmul.f32 %v699, %v1489
        %v1788 = vmul.f32 %v700, %v1499
        %v1789 = vmul.f32 %v701, %v1509
        %v1790 = vmul.f32 %v702, %v1519
        %v1791 = vmul.f32 %v703, %v1529
        %v1792 = vmul.f32 %v704, %v1539
        %v1793 = vmul.f32 %v705, %v1549
        %v1794 = vmul.f32 %v706, %v1559
        %v1795 = vmul.f32 %v707, %v1569
        %v1796 = vmul.f32 %v708, %v1579
        %v1797 = vmul.f32 %v709, %v1589
        %v1798 = vmul.f32 %v710, %v1599
        %v1799 = vmul.f32 %v711, %v1609
        %v1800 = vmul.f32 %v712, %v1619
        %v1801 = vmul.f32 %v713, %v1629
        %v1802 = vmul.f32 %v714, %v1639
        %v1803 = vmul.f32 %v715, %v1649
        %v1804 = vmul.f32 %v716, %v1659
        %v1805 = vmul.f32 %v717, %v1669
        %v1806 = vmul.f32 %v718, %v1679
        %v1807 = vmul.f32 %v719, %v1689
        %v1808 = vmul.f32 %v720, %v1699
        %v1809 = vmul.f32 %v721, %v1709
        %v1810 = vmul.f32 %v722, %v1719
        %v1811 = vmul.f32 %v723, %v1729
        %v1812 = vmul.f32 %v724, %v1739
        %v1813 = vmul.f32 %v725, %v1749
        %v1815 = vperm.slane %v396, 0
        %v1817 = vmul.f32 %v1750, %v1815
        %v1818 = vmul.f32 %v1751, %v1815
        %v1819 = vmul.f32 %v1752, %v1815
        %v1820 = vmul.f32 %v1753, %v1815
        %v1821 = vmul.f32 %v1754, %v1815
        %v1822 = vmul.f32 %v1755, %v1815
        %v1823 = vmul.f32 %v1756, %v1815
        %v1824 = vmul.f32 %v1757, %v1815
        %v1825 = vmul.f32 %v1758, %v1815
        %v1826 = vmul.f32 %v1759, %v1815
        %v1827 = vmul.f32 %v1760, %v1815
        %v1828 = vmul.f32 %v1761, %v1815
        %v1829 = vmul.f32 %v1762, %v1815
        %v1830 = vmul.f32 %v1763, %v1815
        %v1831 = vmul.f32 %v1764, %v1815
        %v1832 = vmul.f32 %v1765, %v1815
        %v1833 = vmul.f32 %v1766, %v1815
        %v1834 = vmul.f32 %v1767, %v1815
        %v1835 = vmul.f32 %v1768, %v1815
        %v1836 = vmul.f32 %v1769, %v1815
        %v1837 = vmul.f32 %v1770, %v1815
        %v1838 = vmul.f32 %v1771, %v1815
        %v1839 = vmul.f32 %v1772, %v1815
        %v1840 = vmul.f32 %v1773, %v1815
        %v1841 = vmul.f32 %v1774, %v1815
        %v1842 = vmul.f32 %v1775, %v1815
        %v1843 = vmul.f32 %v1776, %v1815
        %v1844 = vmul.f32 %v1777, %v1815
        %v1845 = vmul.f32 %v1778, %v1815
        %v1846 = vmul.f32 %v1779, %v1815
        %v1847 = vmul.f32 %v1780, %v1815
        %v1848 = vmul.f32 %v1781, %v1815
        %v1849 = vmul.f32 %v1782, %v1815
        %v1850 = vmul.f32 %v1783, %v1815
        %v1851 = vmul.f32 %v1784, %v1815
        %v1852 = vmul.f32 %v1785, %v1815
        %v1853 = vmul.f32 %v1786, %v1815
        %v1854 = vmul.f32 %v1787, %v1815
        %v1855 = vmul.f32 %v1788, %v1815
        %v1856 = vmul.f32 %v1789, %v1815
        %v1857 = vmul.f32 %v1790, %v1815
        %v1858 = vmul.f32 %v1791, %v1815
        %v1859 = vmul.f32 %v1792, %v1815
        %v1860 = vmul.f32 %v1793, %v1815
        %v1861 = vmul.f32 %v1794, %v1815
        %v1862 = vmul.f32 %v1795, %v1815
        %v1863 = vmul.f32 %v1796, %v1815
        %v1864 = vmul.f32 %v1797, %v1815
        %v1865 = vmul.f32 %v1798, %v1815
        %v1866 = vmul.f32 %v1799, %v1815
        %v1867 = vmul.f32 %v1800, %v1815
        %v1868 = vmul.f32 %v1801, %v1815
        %v1869 = vmul.f32 %v1802, %v1815
        %v1870 = vmul.f32 %v1803, %v1815
        %v1871 = vmul.f32 %v1804, %v1815
        %v1872 = vmul.f32 %v1805, %v1815
        %v1873 = vmul.f32 %v1806, %v1815
        %v1874 = vmul.f32 %v1807, %v1815
        %v1875 = vmul.f32 %v1808, %v1815
        %v1876 = vmul.f32 %v1809, %v1815
        %v1877 = vmul.f32 %v1810, %v1815
        %v1878 = vmul.f32 %v1811, %v1815
        %v1879 = vmul.f32 %v1812, %v1815
        %v1880 = vmul.f32 %v1813, %v1815
        %v1882 = vperm.slane %v397, 0
        %v1884 = vadd.f32 %v1817, %v1882
        %v1885 = vadd.f32 %v1818, %v1882
        %v1886 = vadd.f32 %v1819, %v1882
        %v1887 = vadd.f32 %v1820, %v1882
        %v1888 = vadd.f32 %v1821, %v1882
        %v1889 = vadd.f32 %v1822, %v1882
        %v1890 = vadd.f32 %v1823, %v1882
        %v1891 = vadd.f32 %v1824, %v1882
        %v1892 = vadd.f32 %v1825, %v1882
        %v1893 = vadd.f32 %v1826, %v1882
        %v1894 = vadd.f32 %v1827, %v1882
        %v1895 = vadd.f32 %v1828, %v1882
        %v1896 = vadd.f32 %v1829, %v1882
        %v1897 = vadd.f32 %v1830, %v1882
        %v1898 = vadd.f32 %v1831, %v1882
        %v1899 = vadd.f32 %v1832, %v1882
        %v1900 = vadd.f32 %v1833, %v1882
        %v1901 = vadd.f32 %v1834, %v1882
        %v1902 = vadd.f32 %v1835, %v1882
        %v1903 = vadd.f32 %v1836, %v1882
        %v1904 = vadd.f32 %v1837, %v1882
        %v1905 = vadd.f32 %v1838, %v1882
        %v1906 = vadd.f32 %v1839, %v1882
        %v1907 = vadd.f32 %v1840, %v1882
        %v1908 = vadd.f32 %v1841, %v1882
        %v1909 = vadd.f32 %v1842, %v1882
        %v1910 = vadd.f32 %v1843, %v1882
        %v1911 = vadd.f32 %v1844, %v1882
        %v1912 = vadd.f32 %v1845, %v1882
        %v1913 = vadd.f32 %v1846, %v1882
        %v1914 = vadd.f32 %v1847, %v1882
        %v1915 = vadd.f32 %v1848, %v1882
        %v1916 = vadd.f32 %v1849, %v1882
        %v1917 = vadd.f32 %v1850, %v1882
        %v1918 = vadd.f32 %v1851, %v1882
        %v1919 = vadd.f32 %v1852, %v1882
        %v1920 = vadd.f32 %v1853, %v1882
        %v1921 = vadd.f32 %v1854, %v1882
        %v1922 = vadd.f32 %v1855, %v1882
        %v1923 = vadd.f32 %v1856, %v1882
        %v1924 = vadd.f32 %v1857, %v1882
        %v1925 = vadd.f32 %v1858, %v1882
        %v1926 = vadd.f32 %v1859, %v1882
        %v1927 = vadd.f32 %v1860, %v1882
        %v1928 = vadd.f32 %v1861, %v1882
        %v1929 = vadd.f32 %v1862, %v1882
        %v1930 = vadd.f32 %v1863, %v1882
        %v1931 = vadd.f32 %v1864, %v1882
        %v1932 = vadd.f32 %v1865, %v1882
        %v1933 = vadd.f32 %v1866, %v1882
        %v1934 = vadd.f32 %v1867, %v1882
        %v1935 = vadd.f32 %v1868, %v1882
        %v1936 = vadd.f32 %v1869, %v1882
        %v1937 = vadd.f32 %v1870, %v1882
        %v1938 = vadd.f32 %v1871, %v1882
        %v1939 = vadd.f32 %v1872, %v1882
        %v1940 = vadd.f32 %v1873, %v1882
        %v1941 = vadd.f32 %v1874, %v1882
        %v1942 = vadd.f32 %v1875, %v1882
        %v1943 = vadd.f32 %v1876, %v1882
        %v1944 = vadd.f32 %v1877, %v1882
        %v1945 = vadd.f32 %v1878, %v1882
        %v1946 = vadd.f32 %v1879, %v1882
        %v1947 = vadd.f32 %v1880, %v1882
        %v1948 = vld [vmem:[#allocation7] sm:$0x1]
        %v1949 = vperm.slane %v1948, 0
        %v1950 = vmul.f32 %v1884, %v1949
        %v1951 = vmul.f32 %v1885, %v1949
        %v1952 = vmul.f32 %v1886, %v1949
        %v1953 = vmul.f32 %v1887, %v1949
        %v1954 = vmul.f32 %v1888, %v1949
        %v1955 = vmul.f32 %v1889, %v1949
        %v1956 = vmul.f32 %v1890, %v1949
        %v1957 = vmul.f32 %v1891, %v1949
        %v1958 = vmul.f32 %v1892, %v1949
        %v1959 = vmul.f32 %v1893, %v1949
        %v1960 = vmul.f32 %v1894, %v1949
        %v1961 = vmul.f32 %v1895, %v1949
        %v1962 = vmul.f32 %v1896, %v1949
        %v1963 = vmul.f32 %v1897, %v1949
        %v1964 = vmul.f32 %v1898, %v1949
        %v1965 = vmul.f32 %v1899, %v1949
        %v1966 = vmul.f32 %v1900, %v1949
        %v1967 = vmul.f32 %v1901, %v1949
        %v1968 = vmul.f32 %v1902, %v1949
        %v1969 = vmul.f32 %v1903, %v1949
        %v1970 = vmul.f32 %v1904, %v1949
        %v1971 = vmul.f32 %v1905, %v1949
        %v1972 = vmul.f32 %v1906, %v1949
        %v1973 = vmul.f32 %v1907, %v1949
        %v1974 = vmul.f32 %v1908, %v1949
        %v1975 = vmul.f32 %v1909, %v1949
        %v1976 = vmul.f32 %v1910, %v1949
        %v1977 = vmul.f32 %v1911, %v1949
        %v1978 = vmul.f32 %v1912, %v1949
        %v1979 = vmul.f32 %v1913, %v1949
        %v1980 = vmul.f32 %v1914, %v1949
        %v1981 = vmul.f32 %v1915, %v1949
        %v1982 = vmul.f32 %v1916, %v1949
        %v1983 = vmul.f32 %v1917, %v1949
        %v1984 = vmul.f32 %v1918, %v1949
        %v1985 = vmul.f32 %v1919, %v1949
        %v1986 = vmul.f32 %v1920, %v1949
        %v1987 = vmul.f32 %v1921, %v1949
        %v1988 = vmul.f32 %v1922, %v1949
        %v1989 = vmul.f32 %v1923, %v1949
        %v1990 = vmul.f32 %v1924, %v1949
        %v1991 = vmul.f32 %v1925, %v1949
        %v1992 = vmul.f32 %v1926, %v1949
        %v1993 = vmul.f32 %v1927, %v1949
        %v1994 = vmul.f32 %v1928, %v1949
        %v1995 = vmul.f32 %v1929, %v1949
        %v1996 = vmul.f32 %v1930, %v1949
        %v1997 = vmul.f32 %v1931, %v1949
        %v1998 = vmul.f32 %v1932, %v1949
        %v1999 = vmul.f32 %v1933, %v1949
        %v2000 = vmul.f32 %v1934, %v1949
        %v2001 = vmul.f32 %v1935, %v1949
        %v2002 = vmul.f32 %v1936, %v1949
        %v2003 = vmul.f32 %v1937, %v1949
        %v2004 = vmul.f32 %v1938, %v1949
        %v2005 = vmul.f32 %v1939, %v1949
        %v2006 = vmul.f32 %v1940, %v1949
        %v2007 = vmul.f32 %v1941, %v1949
        %v2008 = vmul.f32 %v1942, %v1949
        %v2009 = vmul.f32 %v1943, %v1949
        %v2010 = vmul.f32 %v1944, %v1949
        %v2011 = vmul.f32 %v1945, %v1949
        %v2012 = vmul.f32 %v1946, %v1949
        %v2013 = vmul.f32 %v1947, %v1949
        %v2014 = vsel %vm398, %v1950, 0.0
        %2015 = vadd.xlane.f32.xlu0 %v2014
        %v2016 = vpop.xlane.xlu0 %2015
        %v2017 = vsel %vm398, %v1951, 0.0
        %2018 = vadd.xlane.f32.xlu0 %v2017
        %v2019 = vpop.xlane.xlu0 %2018
        %v2020 = vsel %vm398, %v1952, 0.0
        %2021 = vadd.xlane.f32.xlu0 %v2020
        %v2022 = vpop.xlane.xlu0 %2021
        %v2023 = vsel %vm398, %v1953, 0.0
        %2024 = vadd.xlane.f32.xlu0 %v2023
        %v2025 = vpop.xlane.xlu0 %2024
        %v2026 = vsel %vm398, %v1954, 0.0
        %2027 = vadd.xlane.f32.xlu0 %v2026
        %v2028 = vpop.xlane.xlu0 %2027
        %v2029 = vsel %vm398, %v1955, 0.0
        %2030 = vadd.xlane.f32.xlu0 %v2029
        %v2031 = vpop.xlane.xlu0 %2030
        %v2032 = vsel %vm398, %v1956, 0.0
        %2033 = vadd.xlane.f32.xlu0 %v2032
        %v2034 = vpop.xlane.xlu0 %2033
        %v2035 = vsel %vm398, %v1957, 0.0
        %2036 = vadd.xlane.f32.xlu0 %v2035
        %v2037 = vpop.xlane.xlu0 %2036
        %v2038 = vsel %vm398, %v1958, 0.0
        %2039 = vadd.xlane.f32.xlu0 %v2038
        %v2040 = vpop.xlane.xlu0 %2039
        %v2041 = vsel %vm398, %v1959, 0.0
        %2042 = vadd.xlane.f32.xlu0 %v2041
        %v2043 = vpop.xlane.xlu0 %2042
        %v2044 = vsel %vm398, %v1960, 0.0
        %2045 = vadd.xlane.f32.xlu0 %v2044
        %v2046 = vpop.xlane.xlu0 %2045
        %v2047 = vsel %vm398, %v1961, 0.0
        %2048 = vadd.xlane.f32.xlu0 %v2047
        %v2049 = vpop.xlane.xlu0 %2048
        %v2050 = vsel %vm398, %v1962, 0.0
        %2051 = vadd.xlane.f32.xlu0 %v2050
        %v2052 = vpop.xlane.xlu0 %2051
        %v2053 = vsel %vm398, %v1963, 0.0
        %2054 = vadd.xlane.f32.xlu0 %v2053
        %v2055 = vpop.xlane.xlu0 %2054
        %v2056 = vsel %vm398, %v1964, 0.0
        %2057 = vadd.xlane.f32.xlu0 %v2056
        %v2058 = vpop.xlane.xlu0 %2057
        %v2059 = vsel %vm398, %v1965, 0.0
        %2060 = vadd.xlane.f32.xlu0 %v2059
        %v2061 = vpop.xlane.xlu0 %2060
        %v2062 = vsel %vm398, %v1966, 0.0
        %2063 = vadd.xlane.f32.xlu0 %v2062
        %v2064 = vpop.xlane.xlu0 %2063
        %v2065 = vsel %vm398, %v1967, 0.0
        %2066 = vadd.xlane.f32.xlu0 %v2065
        %v2067 = vpop.xlane.xlu0 %2066
        %v2068 = vsel %vm398, %v1968, 0.0
        %2069 = vadd.xlane.f32.xlu0 %v2068
        %v2070 = vpop.xlane.xlu0 %2069
        %v2071 = vsel %vm398, %v1969, 0.0
        %2072 = vadd.xlane.f32.xlu0 %v2071
        %v2073 = vpop.xlane.xlu0 %2072
        %v2074 = vsel %vm398, %v1970, 0.0
        %2075 = vadd.xlane.f32.xlu0 %v2074
        %v2076 = vpop.xlane.xlu0 %2075
        %v2077 = vsel %vm398, %v1971, 0.0
        %2078 = vadd.xlane.f32.xlu0 %v2077
        %v2079 = vpop.xlane.xlu0 %2078
        %v2080 = vsel %vm398, %v1972, 0.0
        %2081 = vadd.xlane.f32.xlu0 %v2080
        %v2082 = vpop.xlane.xlu0 %2081
        %v2083 = vsel %vm398, %v1973, 0.0
        %2084 = vadd.xlane.f32.xlu0 %v2083
        %v2085 = vpop.xlane.xlu0 %2084
        %v2086 = vsel %vm398, %v1974, 0.0
        %2087 = vadd.xlane.f32.xlu0 %v2086
        %v2088 = vpop.xlane.xlu0 %2087
        %v2089 = vsel %vm398, %v1975, 0.0
        %2090 = vadd.xlane.f32.xlu0 %v2089
        %v2091 = vpop.xlane.xlu0 %2090
        %v2092 = vsel %vm398, %v1976, 0.0
        %2093 = vadd.xlane.f32.xlu0 %v2092
        %v2094 = vpop.xlane.xlu0 %2093
        %v2095 = vsel %vm398, %v1977, 0.0
        %2096 = vadd.xlane.f32.xlu0 %v2095
        %v2097 = vpop.xlane.xlu0 %2096
        %v2098 = vsel %vm398, %v1978, 0.0
        %2099 = vadd.xlane.f32.xlu0 %v2098
        %v2100 = vpop.xlane.xlu0 %2099
        %v2101 = vsel %vm398, %v1979, 0.0
        %2102 = vadd.xlane.f32.xlu0 %v2101
        %v2103 = vpop.xlane.xlu0 %2102
        %v2104 = vsel %vm398, %v1980, 0.0
        %2105 = vadd.xlane.f32.xlu0 %v2104
        %v2106 = vpop.xlane.xlu0 %2105
        %v2107 = vsel %vm398, %v1981, 0.0
        %2108 = vadd.xlane.f32.xlu0 %v2107
        %v2109 = vpop.xlane.xlu0 %2108
        %v2110 = vsel %vm398, %v1982, 0.0
        %2111 = vadd.xlane.f32.xlu0 %v2110
        %v2112 = vpop.xlane.xlu0 %2111
        %v2113 = vsel %vm398, %v1983, 0.0
        %2114 = vadd.xlane.f32.xlu0 %v2113
        %v2115 = vpop.xlane.xlu0 %2114
        %v2116 = vsel %vm398, %v1984, 0.0
        %2117 = vadd.xlane.f32.xlu0 %v2116
        %v2118 = vpop.xlane.xlu0 %2117
        %v2119 = vsel %vm398, %v1985, 0.0
        %2120 = vadd.xlane.f32.xlu0 %v2119
        %v2121 = vpop.xlane.xlu0 %2120
        %v2122 = vsel %vm398, %v1986, 0.0
        %2123 = vadd.xlane.f32.xlu0 %v2122
        %v2124 = vpop.xlane.xlu0 %2123
        %v2125 = vsel %vm398, %v1987, 0.0
        %2126 = vadd.xlane.f32.xlu0 %v2125
        %v2127 = vpop.xlane.xlu0 %2126
        %v2128 = vsel %vm398, %v1988, 0.0
        %2129 = vadd.xlane.f32.xlu0 %v2128
        %v2130 = vpop.xlane.xlu0 %2129
        %v2131 = vsel %vm398, %v1989, 0.0
        %2132 = vadd.xlane.f32.xlu0 %v2131
        %v2133 = vpop.xlane.xlu0 %2132
        %v2134 = vsel %vm398, %v1990, 0.0
        %2135 = vadd.xlane.f32.xlu0 %v2134
        %v2136 = vpop.xlane.xlu0 %2135
        %v2137 = vsel %vm398, %v1991, 0.0
        %2138 = vadd.xlane.f32.xlu0 %v2137
        %v2139 = vpop.xlane.xlu0 %2138
        %v2140 = vsel %vm398, %v1992, 0.0
        %2141 = vadd.xlane.f32.xlu0 %v2140
        %v2142 = vpop.xlane.xlu0 %2141
        %v2143 = vsel %vm398, %v1993, 0.0
        %2144 = vadd.xlane.f32.xlu0 %v2143
        %v2145 = vpop.xlane.xlu0 %2144
        %v2146 = vsel %vm398, %v1994, 0.0
        %2147 = vadd.xlane.f32.xlu0 %v2146
        %v2148 = vpop.xlane.xlu0 %2147
        %v2149 = vsel %vm398, %v1995, 0.0
        %2150 = vadd.xlane.f32.xlu0 %v2149
        %v2151 = vpop.xlane.xlu0 %2150
        %v2152 = vsel %vm398, %v1996, 0.0
        %2153 = vadd.xlane.f32.xlu0 %v2152
        %v2154 = vpop.xlane.xlu0 %2153
        %v2155 = vsel %vm398, %v1997, 0.0
        %2156 = vadd.xlane.f32.xlu0 %v2155
        %v2157 = vpop.xlane.xlu0 %2156
        %v2158 = vsel %vm398, %v1998, 0.0
        %2159 = vadd.xlane.f32.xlu0 %v2158
        %v2160 = vpop.xlane.xlu0 %2159
        %v2161 = vsel %vm398, %v1999, 0.0
        %2162 = vadd.xlane.f32.xlu0 %v2161
        %v2163 = vpop.xlane.xlu0 %2162
        %v2164 = vsel %vm398, %v2000, 0.0
        %2165 = vadd.xlane.f32.xlu0 %v2164
        %v2166 = vpop.xlane.xlu0 %2165
        %v2167 = vsel %vm398, %v2001, 0.0
        %2168 = vadd.xlane.f32.xlu0 %v2167
        %v2169 = vpop.xlane.xlu0 %2168
        %v2170 = vsel %vm398, %v2002, 0.0
        %2171 = vadd.xlane.f32.xlu0 %v2170
        %v2172 = vpop.xlane.xlu0 %2171
        %v2173 = vsel %vm398, %v2003, 0.0
        %2174 = vadd.xlane.f32.xlu0 %v2173
        %v2175 = vpop.xlane.xlu0 %2174
        %v2176 = vsel %vm398, %v2004, 0.0
        %2177 = vadd.xlane.f32.xlu0 %v2176
        %v2178 = vpop.xlane.xlu0 %2177
        %v2179 = vsel %vm398, %v2005, 0.0
        %2180 = vadd.xlane.f32.xlu0 %v2179
        %v2181 = vpop.xlane.xlu0 %2180
        %v2182 = vsel %vm398, %v2006, 0.0
        %2183 = vadd.xlane.f32.xlu0 %v2182
        %v2184 = vpop.xlane.xlu0 %2183
        %v2185 = vsel %vm398, %v2007, 0.0
        %2186 = vadd.xlane.f32.xlu0 %v2185
        %v2187 = vpop.xlane.xlu0 %2186
        %v2188 = vsel %vm398, %v2008, 0.0
        %2189 = vadd.xlane.f32.xlu0 %v2188
        %v2190 = vpop.xlane.xlu0 %2189
        %v2191 = vsel %vm398, %v2009, 0.0
        %2192 = vadd.xlane.f32.xlu0 %v2191
        %v2193 = vpop.xlane.xlu0 %2192
        %v2194 = vsel %vm398, %v2010, 0.0
        %2195 = vadd.xlane.f32.xlu0 %v2194
        %v2196 = vpop.xlane.xlu0 %2195
        %v2197 = vsel %vm398, %v2011, 0.0
        %2198 = vadd.xlane.f32.xlu0 %v2197
        %v2199 = vpop.xlane.xlu0 %2198
        %v2200 = vsel %vm398, %v2012, 0.0
        %2201 = vadd.xlane.f32.xlu0 %v2200
        %v2202 = vpop.xlane.xlu0 %2201
        %v2203 = vsel %vm398, %v2013, 0.0
        %2204 = vadd.xlane.f32.xlu0 %v2203
        %v2205 = vpop.xlane.xlu0 %2204
        %v2206 = vpack.c.bf16 %v2016, %v2016
        %v2207 = vpack.c.bf16 %v2019, %v2019
        %v2208 = vpack.c.bf16 %v2022, %v2022
        %v2209 = vpack.c.bf16 %v2025, %v2025
        %v2210 = vpack.c.bf16 %v2028, %v2028
        %v2211 = vpack.c.bf16 %v2031, %v2031
        %v2212 = vpack.c.bf16 %v2034, %v2034
        %v2213 = vpack.c.bf16 %v2037, %v2037
        %v2214 = vpack.c.bf16 %v2040, %v2040
        %v2215 = vpack.c.bf16 %v2043, %v2043
        %v2216 = vpack.c.bf16 %v2046, %v2046
        %v2217 = vpack.c.bf16 %v2049, %v2049
        %v2218 = vpack.c.bf16 %v2052, %v2052
        %v2219 = vpack.c.bf16 %v2055, %v2055
        %v2220 = vpack.c.bf16 %v2058, %v2058
        %v2221 = vpack.c.bf16 %v2061, %v2061
        %v2222 = vpack.c.bf16 %v2064, %v2064
        %v2223 = vpack.c.bf16 %v2067, %v2067
        %v2224 = vpack.c.bf16 %v2070, %v2070
        %v2225 = vpack.c.bf16 %v2073, %v2073
        %v2226 = vpack.c.bf16 %v2076, %v2076
        %v2227 = vpack.c.bf16 %v2079, %v2079
        %v2228 = vpack.c.bf16 %v2082, %v2082
        %v2229 = vpack.c.bf16 %v2085, %v2085
        %v2230 = vpack.c.bf16 %v2088, %v2088
        %v2231 = vpack.c.bf16 %v2091, %v2091
        %v2232 = vpack.c.bf16 %v2094, %v2094
        %v2233 = vpack.c.bf16 %v2097, %v2097
        %v2234 = vpack.c.bf16 %v2100, %v2100
        %v2235 = vpack.c.bf16 %v2103, %v2103
        %v2236 = vpack.c.bf16 %v2106, %v2106
        %v2237 = vpack.c.bf16 %v2109, %v2109
        %v2238 = vpack.c.bf16 %v2112, %v2112
        %v2239 = vpack.c.bf16 %v2115, %v2115
        %v2240 = vpack.c.bf16 %v2118, %v2118
        %v2241 = vpack.c.bf16 %v2121, %v2121
        %v2242 = vpack.c.bf16 %v2124, %v2124
        %v2243 = vpack.c.bf16 %v2127, %v2127
        %v2244 = vpack.c.bf16 %v2130, %v2130
        %v2245 = vpack.c.bf16 %v2133, %v2133
        %v2246 = vpack.c.bf16 %v2136, %v2136
        %v2247 = vpack.c.bf16 %v2139, %v2139
        %v2248 = vpack.c.bf16 %v2142, %v2142
        %v2249 = vpack.c.bf16 %v2145, %v2145
        %v2250 = vpack.c.bf16 %v2148, %v2148
        %v2251 = vpack.c.bf16 %v2151, %v2151
        %v2252 = vpack.c.bf16 %v2154, %v2154
        %v2253 = vpack.c.bf16 %v2157, %v2157
        %v2254 = vpack.c.bf16 %v2160, %v2160
        %v2255 = vpack.c.bf16 %v2163, %v2163
        %v2256 = vpack.c.bf16 %v2166, %v2166
        %v2257 = vpack.c.bf16 %v2169, %v2169
        %v2258 = vpack.c.bf16 %v2172, %v2172
        %v2259 = vpack.c.bf16 %v2175, %v2175
        %v2260 = vpack.c.bf16 %v2178, %v2178
        %v2261 = vpack.c.bf16 %v2181, %v2181
        %v2262 = vpack.c.bf16 %v2184, %v2184
        %v2263 = vpack.c.bf16 %v2187, %v2187
        %v2264 = vpack.c.bf16 %v2190, %v2190
        %v2265 = vpack.c.bf16 %v2193, %v2193
        %v2266 = vpack.c.bf16 %v2196, %v2196
        %v2267 = vpack.c.bf16 %v2199, %v2199
        %v2268 = vpack.c.bf16 %v2202, %v2202
        %v2269 = vpack.c.bf16 %v2205, %v2205
        %v2334 = vunpack.c.l.b16 %v2206
        %v2335 = vunpack.c.l.b16 %v2207
        %v2336 = vunpack.c.l.b16 %v2208
        %v2337 = vunpack.c.l.b16 %v2209
        %v2338 = vunpack.c.l.b16 %v2210
        %v2339 = vunpack.c.l.b16 %v2211
        %v2340 = vunpack.c.l.b16 %v2212
        %v2341 = vunpack.c.l.b16 %v2213
        %v2342 = vunpack.c.l.b16 %v2214
        %v2343 = vunpack.c.l.b16 %v2215
        %v2344 = vunpack.c.l.b16 %v2216
        %v2345 = vunpack.c.l.b16 %v2217
        %v2346 = vunpack.c.l.b16 %v2218
        %v2347 = vunpack.c.l.b16 %v2219
        %v2348 = vunpack.c.l.b16 %v2220
        %v2349 = vunpack.c.l.b16 %v2221
        %v2350 = vunpack.c.l.b16 %v2222
        %v2351 = vunpack.c.l.b16 %v2223
        %v2352 = vunpack.c.l.b16 %v2224
        %v2353 = vunpack.c.l.b16 %v2225
        %v2354 = vunpack.c.l.b16 %v2226
        %v2355 = vunpack.c.l.b16 %v2227
        %v2356 = vunpack.c.l.b16 %v2228
        %v2357 = vunpack.c.l.b16 %v2229
        %v2358 = vunpack.c.l.b16 %v2230
        %v2359 = vunpack.c.l.b16 %v2231
        %v2360 = vunpack.c.l.b16 %v2232
        %v2361 = vunpack.c.l.b16 %v2233
        %v2362 = vunpack.c.l.b16 %v2234
        %v2363 = vunpack.c.l.b16 %v2235
        %v2364 = vunpack.c.l.b16 %v2236
        %v2365 = vunpack.c.l.b16 %v2237
        %v2366 = vunpack.c.l.b16 %v2238
        %v2367 = vunpack.c.l.b16 %v2239
        %v2368 = vunpack.c.l.b16 %v2240
        %v2369 = vunpack.c.l.b16 %v2241
        %v2370 = vunpack.c.l.b16 %v2242
        %v2371 = vunpack.c.l.b16 %v2243
        %v2372 = vunpack.c.l.b16 %v2244
        %v2373 = vunpack.c.l.b16 %v2245
        %v2374 = vunpack.c.l.b16 %v2246
        %v2375 = vunpack.c.l.b16 %v2247
        %v2376 = vunpack.c.l.b16 %v2248
        %v2377 = vunpack.c.l.b16 %v2249
        %v2378 = vunpack.c.l.b16 %v2250
        %v2379 = vunpack.c.l.b16 %v2251
        %v2380 = vunpack.c.l.b16 %v2252
        %v2381 = vunpack.c.l.b16 %v2253
        %v2382 = vunpack.c.l.b16 %v2254
        %v2383 = vunpack.c.l.b16 %v2255
        %v2384 = vunpack.c.l.b16 %v2256
        %v2385 = vunpack.c.l.b16 %v2257
        %v2386 = vunpack.c.l.b16 %v2258
        %v2387 = vunpack.c.l.b16 %v2259
        %v2388 = vunpack.c.l.b16 %v2260
        %v2389 = vunpack.c.l.b16 %v2261
        %v2390 = vunpack.c.l.b16 %v2262
        %v2391 = vunpack.c.l.b16 %v2263
        %v2392 = vunpack.c.l.b16 %v2264
        %v2393 = vunpack.c.l.b16 %v2265
        %v2394 = vunpack.c.l.b16 %v2266
        %v2395 = vunpack.c.l.b16 %v2267
        %v2396 = vunpack.c.l.b16 %v2268
        %v2397 = vunpack.c.l.b16 %v2269
        %v2398 = vlaneseq
        %v2399 = vand.u32 %v2398, 127
        %v2400 = vperm.slane %v2334, %v2399
        %v2401 = vadd.s32 %v2399, 4294967288
        %v2402 = vperm.slane %v2335, %v2401
        %vm2403 = vcmask 130112
        %v2404 = vsel %vm2403, %v2402, %v2400
        %v2405 = vadd.s32 %v2399, 4294967280
        %v2406 = vperm.slane %v2336, %v2405
        %vm2407 = vcmask 195712
        %v2408 = vsel %vm2407, %v2406, %v2404
        %v2409 = vadd.s32 %v2399, 4294967272
        %v2410 = vperm.slane %v2337, %v2409
        %vm2411 = vcmask 261312
        %v2412 = vsel %vm2411, %v2410, %v2408
        %v2413 = vperm.slane %v2338, %v2399
        %v2414 = vperm.slane %v2339, %v2401
        %v2415 = vsel %vm2403, %v2414, %v2413
        %v2416 = vperm.slane %v2340, %v2405
        %v2417 = vsel %vm2407, %v2416, %v2415
        %v2418 = vperm.slane %v2341, %v2409
        %v2419 = vsel %vm2411, %v2418, %v2417
        %v2420 = vperm.slane %v2342, %v2399
        %v2421 = vperm.slane %v2343, %v2401
        %v2422 = vsel %vm2403, %v2421, %v2420
        %v2423 = vperm.slane %v2344, %v2405
        %v2424 = vsel %vm2407, %v2423, %v2422
        %v2425 = vperm.slane %v2345, %v2409
        %v2426 = vsel %vm2411, %v2425, %v2424
        %v2427 = vperm.slane %v2346, %v2399
        %v2428 = vperm.slane %v2347, %v2401
        %v2429 = vsel %vm2403, %v2428, %v2427
        %v2430 = vperm.slane %v2348, %v2405
        %v2431 = vsel %vm2407, %v2430, %v2429
        %v2432 = vperm.slane %v2349, %v2409
        %v2433 = vsel %vm2411, %v2432, %v2431
        %v2434 = vperm.slane %v2350, %v2399
        %v2435 = vperm.slane %v2351, %v2401
        %v2436 = vsel %vm2403, %v2435, %v2434
        %v2437 = vperm.slane %v2352, %v2405
        %v2438 = vsel %vm2407, %v2437, %v2436
        %v2439 = vperm.slane %v2353, %v2409
        %v2440 = vsel %vm2411, %v2439, %v2438
        %v2441 = vperm.slane %v2354, %v2399
        %v2442 = vperm.slane %v2355, %v2401
        %v2443 = vsel %vm2403, %v2442, %v2441
        %v2444 = vperm.slane %v2356, %v2405
        %v2445 = vsel %vm2407, %v2444, %v2443
        %v2446 = vperm.slane %v2357, %v2409
        %v2447 = vsel %vm2411, %v2446, %v2445
        %v2448 = vperm.slane %v2358, %v2399
        %v2449 = vperm.slane %v2359, %v2401
        %v2450 = vsel %vm2403, %v2449, %v2448
        %v2451 = vperm.slane %v2360, %v2405
        %v2452 = vsel %vm2407, %v2451, %v2450
        %v2453 = vperm.slane %v2361, %v2409
        %v2454 = vsel %vm2411, %v2453, %v2452
        %v2455 = vperm.slane %v2362, %v2399
        %v2456 = vperm.slane %v2363, %v2401
        %v2457 = vsel %vm2403, %v2456, %v2455
        %v2458 = vperm.slane %v2364, %v2405
        %v2459 = vsel %vm2407, %v2458, %v2457
        %v2460 = vperm.slane %v2365, %v2409
        %v2461 = vsel %vm2411, %v2460, %v2459
        %v2462 = vperm.slane %v2366, %v2399
        %v2463 = vperm.slane %v2367, %v2401
        %v2464 = vsel %vm2403, %v2463, %v2462
        %v2465 = vperm.slane %v2368, %v2405
        %v2466 = vsel %vm2407, %v2465, %v2464
        %v2467 = vperm.slane %v2369, %v2409
        %v2468 = vsel %vm2411, %v2467, %v2466
        %v2469 = vperm.slane %v2370, %v2399
        %v2470 = vperm.slane %v2371, %v2401
        %v2471 = vsel %vm2403, %v2470, %v2469
        %v2472 = vperm.slane %v2372, %v2405
        %v2473 = vsel %vm2407, %v2472, %v2471
        %v2474 = vperm.slane %v2373, %v2409
        %v2475 = vsel %vm2411, %v2474, %v2473
        %v2476 = vperm.slane %v2374, %v2399
        %v2477 = vperm.slane %v2375, %v2401
        %v2478 = vsel %vm2403, %v2477, %v2476
        %v2479 = vperm.slane %v2376, %v2405
        %v2480 = vsel %vm2407, %v2479, %v2478
        %v2481 = vperm.slane %v2377, %v2409
        %v2482 = vsel %vm2411, %v2481, %v2480
        %v2483 = vperm.slane %v2378, %v2399
        %v2484 = vperm.slane %v2379, %v2401
        %v2485 = vsel %vm2403, %v2484, %v2483
        %v2486 = vperm.slane %v2380, %v2405
        %v2487 = vsel %vm2407, %v2486, %v2485
        %v2488 = vperm.slane %v2381, %v2409
        %v2489 = vsel %vm2411, %v2488, %v2487
        %v2490 = vperm.slane %v2382, %v2399
        %v2491 = vperm.slane %v2383, %v2401
        %v2492 = vsel %vm2403, %v2491, %v2490
        %v2493 = vperm.slane %v2384, %v2405
        %v2494 = vsel %vm2407, %v2493, %v2492
        %v2495 = vperm.slane %v2385, %v2409
        %v2496 = vsel %vm2411, %v2495, %v2494
        %v2497 = vperm.slane %v2386, %v2399
        %v2498 = vperm.slane %v2387, %v2401
        %v2499 = vsel %vm2403, %v2498, %v2497
        %v2500 = vperm.slane %v2388, %v2405
        %v2501 = vsel %vm2407, %v2500, %v2499
        %v2502 = vperm.slane %v2389, %v2409
        %v2503 = vsel %vm2411, %v2502, %v2501
        %v2504 = vperm.slane %v2390, %v2399
        %v2505 = vperm.slane %v2391, %v2401
        %v2506 = vsel %vm2403, %v2505, %v2504
        %v2507 = vperm.slane %v2392, %v2405
        %v2508 = vsel %vm2407, %v2507, %v2506
        %v2509 = vperm.slane %v2393, %v2409
        %v2510 = vsel %vm2411, %v2509, %v2508
        %v2511 = vperm.slane %v2394, %v2399
        %v2512 = vperm.slane %v2395, %v2401
        %v2513 = vsel %vm2403, %v2512, %v2511
        %v2514 = vperm.slane %v2396, %v2405
        %v2515 = vsel %vm2407, %v2514, %v2513
        %v2516 = vperm.slane %v2397, %v2409
        %v2517 = vsel %vm2411, %v2516, %v2515
        %vm2518 = vcmask 1041409
        %v2519 = vsel %vm2518, %v2419, %v2412
        %vm2520 = vcmask 1042434
        %v2521 = vsel %vm2520, %v2426, %v2519
        %vm2522 = vcmask 1043459
        %v2523 = vsel %vm2522, %v2433, %v2521
        %vm2524 = vcmask 1044484
        %v2525 = vsel %vm2524, %v2440, %v2523
        %vm2526 = vcmask 1045509
        %v2527 = vsel %vm2526, %v2447, %v2525
        %vm2528 = vcmask 1046534
        %v2529 = vsel %vm2528, %v2454, %v2527
        %vm2530 = vcmask 1047559
        %v2531 = vsel %vm2530, %v2461, %v2529
        %v2532 = vsel %vm2518, %v2475, %v2468
        %v2533 = vsel %vm2520, %v2482, %v2532
        %v2534 = vsel %vm2522, %v2489, %v2533
        %v2535 = vsel %vm2524, %v2496, %v2534
        %v2536 = vsel %vm2526, %v2503, %v2535
        %v2537 = vsel %vm2528, %v2510, %v2536
        %v2538 = vsel %vm2530, %v2517, %v2537
        %v2539 = vpack.c.b16 %v2531, %v2531
        %v2540 = vpack.c.b16 %v2538, %v2538
        %vm2543 = vcmask 257024
        %2544 = vst.msk [vmem:[%s265] sm:$0xf] %vm2543, %v2539
        %2545 = vst.msk [vmem:[%s265 + $0x4] sm:$0xf] %vm2543, %v2540
        %v2546 = vld [vmem:[#allocation7 + $0x1] sm:$0x1]
        %v2547 = vperm.slane %v2546, 0
        %v2548 = vmul.f32 %v1884, %v2547
        %v2549 = vmul.f32 %v1885, %v2547
        %v2550 = vmul.f32 %v1886, %v2547
        %v2551 = vmul.f32 %v1887, %v2547
        %v2552 = vmul.f32 %v1888, %v2547
        %v2553 = vmul.f32 %v1889, %v2547
        %v2554 = vmul.f32 %v1890, %v2547
        %v2555 = vmul.f32 %v1891, %v2547
        %v2556 = vmul.f32 %v1892, %v2547
        %v2557 = vmul.f32 %v1893, %v2547
        %v2558 = vmul.f32 %v1894, %v2547
        %v2559 = vmul.f32 %v1895, %v2547
        %v2560 = vmul.f32 %v1896, %v2547
        %v2561 = vmul.f32 %v1897, %v2547
        %v2562 = vmul.f32 %v1898, %v2547
        %v2563 = vmul.f32 %v1899, %v2547
        %v2564 = vmul.f32 %v1900, %v2547
        %v2565 = vmul.f32 %v1901, %v2547
        %v2566 = vmul.f32 %v1902, %v2547
        %v2567 = vmul.f32 %v1903, %v2547
        %v2568 = vmul.f32 %v1904, %v2547
        %v2569 = vmul.f32 %v1905, %v2547
        %v2570 = vmul.f32 %v1906, %v2547
        %v2571 = vmul.f32 %v1907, %v2547
        %v2572 = vmul.f32 %v1908, %v2547
        %v2573 = vmul.f32 %v1909, %v2547
        %v2574 = vmul.f32 %v1910, %v2547
        %v2575 = vmul.f32 %v1911, %v2547
        %v2576 = vmul.f32 %v1912, %v2547
        %v2577 = vmul.f32 %v1913, %v2547
        %v2578 = vmul.f32 %v1914, %v2547
        %v2579 = vmul.f32 %v1915, %v2547
        %v2580 = vmul.f32 %v1916, %v2547
        %v2581 = vmul.f32 %v1917, %v2547
        %v2582 = vmul.f32 %v1918, %v2547
        %v2583 = vmul.f32 %v1919, %v2547
        %v2584 = vmul.f32 %v1920, %v2547
        %v2585 = vmul.f32 %v1921, %v2547
        %v2586 = vmul.f32 %v1922, %v2547
        %v2587 = vmul.f32 %v1923, %v2547
        %v2588 = vmul.f32 %v1924, %v2547
        %v2589 = vmul.f32 %v1925, %v2547
        %v2590 = vmul.f32 %v1926, %v2547
        %v2591 = vmul.f32 %v1927, %v2547
        %v2592 = vmul.f32 %v1928, %v2547
        %v2593 = vmul.f32 %v1929, %v2547
        %v2594 = vmul.f32 %v1930, %v2547
        %v2595 = vmul.f32 %v1931, %v2547
        %v2596 = vmul.f32 %v1932, %v2547
        %v2597 = vmul.f32 %v1933, %v2547
        %v2598 = vmul.f32 %v1934, %v2547
        %v2599 = vmul.f32 %v1935, %v2547
        %v2600 = vmul.f32 %v1936, %v2547
        %v2601 = vmul.f32 %v1937, %v2547
        %v2602 = vmul.f32 %v1938, %v2547
        %v2603 = vmul.f32 %v1939, %v2547
        %v2604 = vmul.f32 %v1940, %v2547
        %v2605 = vmul.f32 %v1941, %v2547
        %v2606 = vmul.f32 %v1942, %v2547
        %v2607 = vmul.f32 %v1943, %v2547
        %v2608 = vmul.f32 %v1944, %v2547
        %v2609 = vmul.f32 %v1945, %v2547
        %v2610 = vmul.f32 %v1946, %v2547
        %v2611 = vmul.f32 %v1947, %v2547
        %v2612 = vsel %vm398, %v2548, 0.0
        %2613 = vadd.xlane.f32.xlu0 %v2612
        %v2614 = vpop.xlane.xlu0 %2613
        %v2615 = vsel %vm398, %v2549, 0.0
        %2616 = vadd.xlane.f32.xlu0 %v2615
        %v2617 = vpop.xlane.xlu0 %2616
        %v2618 = vsel %vm398, %v2550, 0.0
        %2619 = vadd.xlane.f32.xlu0 %v2618
        %v2620 = vpop.xlane.xlu0 %2619
        %v2621 = vsel %vm398, %v2551, 0.0
        %2622 = vadd.xlane.f32.xlu0 %v2621
        %v2623 = vpop.xlane.xlu0 %2622
        %v2624 = vsel %vm398, %v2552, 0.0
        %2625 = vadd.xlane.f32.xlu0 %v2624
        %v2626 = vpop.xlane.xlu0 %2625
        %v2627 = vsel %vm398, %v2553, 0.0
        %2628 = vadd.xlane.f32.xlu0 %v2627
        %v2629 = vpop.xlane.xlu0 %2628
        %v2630 = vsel %vm398, %v2554, 0.0
        %2631 = vadd.xlane.f32.xlu0 %v2630
        %v2632 = vpop.xlane.xlu0 %2631
        %v2633 = vsel %vm398, %v2555, 0.0
        %2634 = vadd.xlane.f32.xlu0 %v2633
        %v2635 = vpop.xlane.xlu0 %2634
        %v2636 = vsel %vm398, %v2556, 0.0
        %2637 = vadd.xlane.f32.xlu0 %v2636
        %v2638 = vpop.xlane.xlu0 %2637
        %v2639 = vsel %vm398, %v2557, 0.0
        %2640 = vadd.xlane.f32.xlu0 %v2639
        %v2641 = vpop.xlane.xlu0 %2640
        %v2642 = vsel %vm398, %v2558, 0.0
        %2643 = vadd.xlane.f32.xlu0 %v2642
        %v2644 = vpop.xlane.xlu0 %2643
        %v2645 = vsel %vm398, %v2559, 0.0
        %2646 = vadd.xlane.f32.xlu0 %v2645
        %v2647 = vpop.xlane.xlu0 %2646
        %v2648 = vsel %vm398, %v2560, 0.0
        %2649 = vadd.xlane.f32.xlu0 %v2648
        %v2650 = vpop.xlane.xlu0 %2649
        %v2651 = vsel %vm398, %v2561, 0.0
        %2652 = vadd.xlane.f32.xlu0 %v2651
        %v2653 = vpop.xlane.xlu0 %2652
        %v2654 = vsel %vm398, %v2562, 0.0
        %2655 = vadd.xlane.f32.xlu0 %v2654
        %v2656 = vpop.xlane.xlu0 %2655
        %v2657 = vsel %vm398, %v2563, 0.0
        %2658 = vadd.xlane.f32.xlu0 %v2657
        %v2659 = vpop.xlane.xlu0 %2658
        %v2660 = vsel %vm398, %v2564, 0.0
        %2661 = vadd.xlane.f32.xlu0 %v2660
        %v2662 = vpop.xlane.xlu0 %2661
        %v2663 = vsel %vm398, %v2565, 0.0
        %2664 = vadd.xlane.f32.xlu0 %v2663
        %v2665 = vpop.xlane.xlu0 %2664
        %v2666 = vsel %vm398, %v2566, 0.0
        %2667 = vadd.xlane.f32.xlu0 %v2666
        %v2668 = vpop.xlane.xlu0 %2667
        %v2669 = vsel %vm398, %v2567, 0.0
        %2670 = vadd.xlane.f32.xlu0 %v2669
        %v2671 = vpop.xlane.xlu0 %2670
        %v2672 = vsel %vm398, %v2568, 0.0
        %2673 = vadd.xlane.f32.xlu0 %v2672
        %v2674 = vpop.xlane.xlu0 %2673
        %v2675 = vsel %vm398, %v2569, 0.0
        %2676 = vadd.xlane.f32.xlu0 %v2675
        %v2677 = vpop.xlane.xlu0 %2676
        %v2678 = vsel %vm398, %v2570, 0.0
        %2679 = vadd.xlane.f32.xlu0 %v2678
        %v2680 = vpop.xlane.xlu0 %2679
        %v2681 = vsel %vm398, %v2571, 0.0
        %2682 = vadd.xlane.f32.xlu0 %v2681
        %v2683 = vpop.xlane.xlu0 %2682
        %v2684 = vsel %vm398, %v2572, 0.0
        %2685 = vadd.xlane.f32.xlu0 %v2684
        %v2686 = vpop.xlane.xlu0 %2685
        %v2687 = vsel %vm398, %v2573, 0.0
        %2688 = vadd.xlane.f32.xlu0 %v2687
        %v2689 = vpop.xlane.xlu0 %2688
        %v2690 = vsel %vm398, %v2574, 0.0
        %2691 = vadd.xlane.f32.xlu0 %v2690
        %v2692 = vpop.xlane.xlu0 %2691
        %v2693 = vsel %vm398, %v2575, 0.0
        %2694 = vadd.xlane.f32.xlu0 %v2693
        %v2695 = vpop.xlane.xlu0 %2694
        %v2696 = vsel %vm398, %v2576, 0.0
        %2697 = vadd.xlane.f32.xlu0 %v2696
        %v2698 = vpop.xlane.xlu0 %2697
        %v2699 = vsel %vm398, %v2577, 0.0
        %2700 = vadd.xlane.f32.xlu0 %v2699
        %v2701 = vpop.xlane.xlu0 %2700
        %v2702 = vsel %vm398, %v2578, 0.0
        %2703 = vadd.xlane.f32.xlu0 %v2702
        %v2704 = vpop.xlane.xlu0 %2703
        %v2705 = vsel %vm398, %v2579, 0.0
        %2706 = vadd.xlane.f32.xlu0 %v2705
        %v2707 = vpop.xlane.xlu0 %2706
        %v2708 = vsel %vm398, %v2580, 0.0
        %2709 = vadd.xlane.f32.xlu0 %v2708
        %v2710 = vpop.xlane.xlu0 %2709
        %v2711 = vsel %vm398, %v2581, 0.0
        %2712 = vadd.xlane.f32.xlu0 %v2711
        %v2713 = vpop.xlane.xlu0 %2712
        %v2714 = vsel %vm398, %v2582, 0.0
        %2715 = vadd.xlane.f32.xlu0 %v2714
        %v2716 = vpop.xlane.xlu0 %2715
        %v2717 = vsel %vm398, %v2583, 0.0
        %2718 = vadd.xlane.f32.xlu0 %v2717
        %v2719 = vpop.xlane.xlu0 %2718
        %v2720 = vsel %vm398, %v2584, 0.0
        %2721 = vadd.xlane.f32.xlu0 %v2720
        %v2722 = vpop.xlane.xlu0 %2721
        %v2723 = vsel %vm398, %v2585, 0.0
        %2724 = vadd.xlane.f32.xlu0 %v2723
        %v2725 = vpop.xlane.xlu0 %2724
        %v2726 = vsel %vm398, %v2586, 0.0
        %2727 = vadd.xlane.f32.xlu0 %v2726
        %v2728 = vpop.xlane.xlu0 %2727
        %v2729 = vsel %vm398, %v2587, 0.0
        %2730 = vadd.xlane.f32.xlu0 %v2729
        %v2731 = vpop.xlane.xlu0 %2730
        %v2732 = vsel %vm398, %v2588, 0.0
        %2733 = vadd.xlane.f32.xlu0 %v2732
        %v2734 = vpop.xlane.xlu0 %2733
        %v2735 = vsel %vm398, %v2589, 0.0
        %2736 = vadd.xlane.f32.xlu0 %v2735
        %v2737 = vpop.xlane.xlu0 %2736
        %v2738 = vsel %vm398, %v2590, 0.0
        %2739 = vadd.xlane.f32.xlu0 %v2738
        %v2740 = vpop.xlane.xlu0 %2739
        %v2741 = vsel %vm398, %v2591, 0.0
        %2742 = vadd.xlane.f32.xlu0 %v2741
        %v2743 = vpop.xlane.xlu0 %2742
        %v2744 = vsel %vm398, %v2592, 0.0
        %2745 = vadd.xlane.f32.xlu0 %v2744
        %v2746 = vpop.xlane.xlu0 %2745
        %v2747 = vsel %vm398, %v2593, 0.0
        %2748 = vadd.xlane.f32.xlu0 %v2747
        %v2749 = vpop.xlane.xlu0 %2748
        %v2750 = vsel %vm398, %v2594, 0.0
        %2751 = vadd.xlane.f32.xlu0 %v2750
        %v2752 = vpop.xlane.xlu0 %2751
        %v2753 = vsel %vm398, %v2595, 0.0
        %2754 = vadd.xlane.f32.xlu0 %v2753
        %v2755 = vpop.xlane.xlu0 %2754
        %v2756 = vsel %vm398, %v2596, 0.0
        %2757 = vadd.xlane.f32.xlu0 %v2756
        %v2758 = vpop.xlane.xlu0 %2757
        %v2759 = vsel %vm398, %v2597, 0.0
        %2760 = vadd.xlane.f32.xlu0 %v2759
        %v2761 = vpop.xlane.xlu0 %2760
        %v2762 = vsel %vm398, %v2598, 0.0
        %2763 = vadd.xlane.f32.xlu0 %v2762
        %v2764 = vpop.xlane.xlu0 %2763
        %v2765 = vsel %vm398, %v2599, 0.0
        %2766 = vadd.xlane.f32.xlu0 %v2765
        %v2767 = vpop.xlane.xlu0 %2766
        %v2768 = vsel %vm398, %v2600, 0.0
        %2769 = vadd.xlane.f32.xlu0 %v2768
        %v2770 = vpop.xlane.xlu0 %2769
        %v2771 = vsel %vm398, %v2601, 0.0
        %2772 = vadd.xlane.f32.xlu0 %v2771
        %v2773 = vpop.xlane.xlu0 %2772
        %v2774 = vsel %vm398, %v2602, 0.0
        %2775 = vadd.xlane.f32.xlu0 %v2774
        %v2776 = vpop.xlane.xlu0 %2775
        %v2777 = vsel %vm398, %v2603, 0.0
        %2778 = vadd.xlane.f32.xlu0 %v2777
        %v2779 = vpop.xlane.xlu0 %2778
        %v2780 = vsel %vm398, %v2604, 0.0
        %2781 = vadd.xlane.f32.xlu0 %v2780
        %v2782 = vpop.xlane.xlu0 %2781
        %v2783 = vsel %vm398, %v2605, 0.0
        %2784 = vadd.xlane.f32.xlu0 %v2783
        %v2785 = vpop.xlane.xlu0 %2784
        %v2786 = vsel %vm398, %v2606, 0.0
        %2787 = vadd.xlane.f32.xlu0 %v2786
        %v2788 = vpop.xlane.xlu0 %2787
        %v2789 = vsel %vm398, %v2607, 0.0
        %2790 = vadd.xlane.f32.xlu0 %v2789
        %v2791 = vpop.xlane.xlu0 %2790
        %v2792 = vsel %vm398, %v2608, 0.0
        %2793 = vadd.xlane.f32.xlu0 %v2792
        %v2794 = vpop.xlane.xlu0 %2793
        %v2795 = vsel %vm398, %v2609, 0.0
        %2796 = vadd.xlane.f32.xlu0 %v2795
        %v2797 = vpop.xlane.xlu0 %2796
        %v2798 = vsel %vm398, %v2610, 0.0
        %2799 = vadd.xlane.f32.xlu0 %v2798
        %v2800 = vpop.xlane.xlu0 %2799
        %v2801 = vsel %vm398, %v2611, 0.0
        %2802 = vadd.xlane.f32.xlu0 %v2801
        %v2803 = vpop.xlane.xlu0 %2802
        %v2804 = vpack.c.bf16 %v2614, %v2614
        %v2805 = vpack.c.bf16 %v2617, %v2617
        %v2806 = vpack.c.bf16 %v2620, %v2620
        %v2807 = vpack.c.bf16 %v2623, %v2623
        %v2808 = vpack.c.bf16 %v2626, %v2626
        %v2809 = vpack.c.bf16 %v2629, %v2629
        %v2810 = vpack.c.bf16 %v2632, %v2632
        %v2811 = vpack.c.bf16 %v2635, %v2635
        %v2812 = vpack.c.bf16 %v2638, %v2638
        %v2813 = vpack.c.bf16 %v2641, %v2641
        %v2814 = vpack.c.bf16 %v2644, %v2644
        %v2815 = vpack.c.bf16 %v2647, %v2647
        %v2816 = vpack.c.bf16 %v2650, %v2650
        %v2817 = vpack.c.bf16 %v2653, %v2653
        %v2818 = vpack.c.bf16 %v2656, %v2656
        %v2819 = vpack.c.bf16 %v2659, %v2659
        %v2820 = vpack.c.bf16 %v2662, %v2662
        %v2821 = vpack.c.bf16 %v2665, %v2665
        %v2822 = vpack.c.bf16 %v2668, %v2668
        %v2823 = vpack.c.bf16 %v2671, %v2671
        %v2824 = vpack.c.bf16 %v2674, %v2674
        %v2825 = vpack.c.bf16 %v2677, %v2677
        %v2826 = vpack.c.bf16 %v2680, %v2680
        %v2827 = vpack.c.bf16 %v2683, %v2683
        %v2828 = vpack.c.bf16 %v2686, %v2686
        %v2829 = vpack.c.bf16 %v2689, %v2689
        %v2830 = vpack.c.bf16 %v2692, %v2692
        %v2831 = vpack.c.bf16 %v2695, %v2695
        %v2832 = vpack.c.bf16 %v2698, %v2698
        %v2833 = vpack.c.bf16 %v2701, %v2701
        %v2834 = vpack.c.bf16 %v2704, %v2704
        %v2835 = vpack.c.bf16 %v2707, %v2707
        %v2836 = vpack.c.bf16 %v2710, %v2710
        %v2837 = vpack.c.bf16 %v2713, %v2713
        %v2838 = vpack.c.bf16 %v2716, %v2716
        %v2839 = vpack.c.bf16 %v2719, %v2719
        %v2840 = vpack.c.bf16 %v2722, %v2722
        %v2841 = vpack.c.bf16 %v2725, %v2725
        %v2842 = vpack.c.bf16 %v2728, %v2728
        %v2843 = vpack.c.bf16 %v2731, %v2731
        %v2844 = vpack.c.bf16 %v2734, %v2734
        %v2845 = vpack.c.bf16 %v2737, %v2737
        %v2846 = vpack.c.bf16 %v2740, %v2740
        %v2847 = vpack.c.bf16 %v2743, %v2743
        %v2848 = vpack.c.bf16 %v2746, %v2746
        %v2849 = vpack.c.bf16 %v2749, %v2749
        %v2850 = vpack.c.bf16 %v2752, %v2752
        %v2851 = vpack.c.bf16 %v2755, %v2755
        %v2852 = vpack.c.bf16 %v2758, %v2758
        %v2853 = vpack.c.bf16 %v2761, %v2761
        %v2854 = vpack.c.bf16 %v2764, %v2764
        %v2855 = vpack.c.bf16 %v2767, %v2767
        %v2856 = vpack.c.bf16 %v2770, %v2770
        %v2857 = vpack.c.bf16 %v2773, %v2773
        %v2858 = vpack.c.bf16 %v2776, %v2776
        %v2859 = vpack.c.bf16 %v2779, %v2779
        %v2860 = vpack.c.bf16 %v2782, %v2782
        %v2861 = vpack.c.bf16 %v2785, %v2785
        %v2862 = vpack.c.bf16 %v2788, %v2788
        %v2863 = vpack.c.bf16 %v2791, %v2791
        %v2864 = vpack.c.bf16 %v2794, %v2794
        %v2865 = vpack.c.bf16 %v2797, %v2797
        %v2866 = vpack.c.bf16 %v2800, %v2800
        %v2867 = vpack.c.bf16 %v2803, %v2803
        %v2932 = vunpack.c.l.b16 %v2804
        %v2933 = vunpack.c.l.b16 %v2805
        %v2934 = vunpack.c.l.b16 %v2806
        %v2935 = vunpack.c.l.b16 %v2807
        %v2936 = vunpack.c.l.b16 %v2808
        %v2937 = vunpack.c.l.b16 %v2809
        %v2938 = vunpack.c.l.b16 %v2810
        %v2939 = vunpack.c.l.b16 %v2811
        %v2940 = vunpack.c.l.b16 %v2812
        %v2941 = vunpack.c.l.b16 %v2813
        %v2942 = vunpack.c.l.b16 %v2814
        %v2943 = vunpack.c.l.b16 %v2815
        %v2944 = vunpack.c.l.b16 %v2816
        %v2945 = vunpack.c.l.b16 %v2817
        %v2946 = vunpack.c.l.b16 %v2818
        %v2947 = vunpack.c.l.b16 %v2819
        %v2948 = vunpack.c.l.b16 %v2820
        %v2949 = vunpack.c.l.b16 %v2821
        %v2950 = vunpack.c.l.b16 %v2822
        %v2951 = vunpack.c.l.b16 %v2823
        %v2952 = vunpack.c.l.b16 %v2824
        %v2953 = vunpack.c.l.b16 %v2825
        %v2954 = vunpack.c.l.b16 %v2826
        %v2955 = vunpack.c.l.b16 %v2827
        %v2956 = vunpack.c.l.b16 %v2828
        %v2957 = vunpack.c.l.b16 %v2829
        %v2958 = vunpack.c.l.b16 %v2830
        %v2959 = vunpack.c.l.b16 %v2831
        %v2960 = vunpack.c.l.b16 %v2832
        %v2961 = vunpack.c.l.b16 %v2833
        %v2962 = vunpack.c.l.b16 %v2834
        %v2963 = vunpack.c.l.b16 %v2835
        %v2964 = vunpack.c.l.b16 %v2836
        %v2965 = vunpack.c.l.b16 %v2837
        %v2966 = vunpack.c.l.b16 %v2838
        %v2967 = vunpack.c.l.b16 %v2839
        %v2968 = vunpack.c.l.b16 %v2840
        %v2969 = vunpack.c.l.b16 %v2841
        %v2970 = vunpack.c.l.b16 %v2842
        %v2971 = vunpack.c.l.b16 %v2843
        %v2972 = vunpack.c.l.b16 %v2844
        %v2973 = vunpack.c.l.b16 %v2845
        %v2974 = vunpack.c.l.b16 %v2846
        %v2975 = vunpack.c.l.b16 %v2847
        %v2976 = vunpack.c.l.b16 %v2848
        %v2977 = vunpack.c.l.b16 %v2849
        %v2978 = vunpack.c.l.b16 %v2850
        %v2979 = vunpack.c.l.b16 %v2851
        %v2980 = vunpack.c.l.b16 %v2852
        %v2981 = vunpack.c.l.b16 %v2853
        %v2982 = vunpack.c.l.b16 %v2854
        %v2983 = vunpack.c.l.b16 %v2855
        %v2984 = vunpack.c.l.b16 %v2856
        %v2985 = vunpack.c.l.b16 %v2857
        %v2986 = vunpack.c.l.b16 %v2858
        %v2987 = vunpack.c.l.b16 %v2859
        %v2988 = vunpack.c.l.b16 %v2860
        %v2989 = vunpack.c.l.b16 %v2861
        %v2990 = vunpack.c.l.b16 %v2862
        %v2991 = vunpack.c.l.b16 %v2863
        %v2992 = vunpack.c.l.b16 %v2864
        %v2993 = vunpack.c.l.b16 %v2865
        %v2994 = vunpack.c.l.b16 %v2866
        %v2995 = vunpack.c.l.b16 %v2867
        %v2996 = vperm.slane %v2932, %v2399
        %v2997 = vperm.slane %v2933, %v2401
        %v2998 = vsel %vm2403, %v2997, %v2996
        %v2999 = vperm.slane %v2934, %v2405
        %v3000 = vsel %vm2407, %v2999, %v2998
        %v3001 = vperm.slane %v2935, %v2409
        %v3002 = vsel %vm2411, %v3001, %v3000
        %v3003 = vperm.slane %v2936, %v2399
        %v3004 = vperm.slane %v2937, %v2401
        %v3005 = vsel %vm2403, %v3004, %v3003
        %v3006 = vperm.slane %v2938, %v2405
        %v3007 = vsel %vm2407, %v3006, %v3005
        %v3008 = vperm.slane %v2939, %v2409
        %v3009 = vsel %vm2411, %v3008, %v3007
        %v3010 = vperm.slane %v2940, %v2399
        %v3011 = vperm.slane %v2941, %v2401
        %v3012 = vsel %vm2403, %v3011, %v3010
        %v3013 = vperm.slane %v2942, %v2405
        %v3014 = vsel %vm2407, %v3013, %v3012
        %v3015 = vperm.slane %v2943, %v2409
        %v3016 = vsel %vm2411, %v3015, %v3014
        %v3017 = vperm.slane %v2944, %v2399
        %v3018 = vperm.slane %v2945, %v2401
        %v3019 = vsel %vm2403, %v3018, %v3017
        %v3020 = vperm.slane %v2946, %v2405
        %v3021 = vsel %vm2407, %v3020, %v3019
        %v3022 = vperm.slane %v2947, %v2409
        %v3023 = vsel %vm2411, %v3022, %v3021
        %v3024 = vperm.slane %v2948, %v2399
        %v3025 = vperm.slane %v2949, %v2401
        %v3026 = vsel %vm2403, %v3025, %v3024
        %v3027 = vperm.slane %v2950, %v2405
        %v3028 = vsel %vm2407, %v3027, %v3026
        %v3029 = vperm.slane %v2951, %v2409
        %v3030 = vsel %vm2411, %v3029, %v3028
        %v3031 = vperm.slane %v2952, %v2399
        %v3032 = vperm.slane %v2953, %v2401
        %v3033 = vsel %vm2403, %v3032, %v3031
        %v3034 = vperm.slane %v2954, %v2405
        %v3035 = vsel %vm2407, %v3034, %v3033
        %v3036 = vperm.slane %v2955, %v2409
        %v3037 = vsel %vm2411, %v3036, %v3035
        %v3038 = vperm.slane %v2956, %v2399
        %v3039 = vperm.slane %v2957, %v2401
        %v3040 = vsel %vm2403, %v3039, %v3038
        %v3041 = vperm.slane %v2958, %v2405
        %v3042 = vsel %vm2407, %v3041, %v3040
        %v3043 = vperm.slane %v2959, %v2409
        %v3044 = vsel %vm2411, %v3043, %v3042
        %v3045 = vperm.slane %v2960, %v2399
        %v3046 = vperm.slane %v2961, %v2401
        %v3047 = vsel %vm2403, %v3046, %v3045
        %v3048 = vperm.slane %v2962, %v2405
        %v3049 = vsel %vm2407, %v3048, %v3047
        %v3050 = vperm.slane %v2963, %v2409
        %v3051 = vsel %vm2411, %v3050, %v3049
        %v3052 = vperm.slane %v2964, %v2399
        %v3053 = vperm.slane %v2965, %v2401
        %v3054 = vsel %vm2403, %v3053, %v3052
        %v3055 = vperm.slane %v2966, %v2405
        %v3056 = vsel %vm2407, %v3055, %v3054
        %v3057 = vperm.slane %v2967, %v2409
        %v3058 = vsel %vm2411, %v3057, %v3056
        %v3059 = vperm.slane %v2968, %v2399
        %v3060 = vperm.slane %v2969, %v2401
        %v3061 = vsel %vm2403, %v3060, %v3059
        %v3062 = vperm.slane %v2970, %v2405
        %v3063 = vsel %vm2407, %v3062, %v3061
        %v3064 = vperm.slane %v2971, %v2409
        %v3065 = vsel %vm2411, %v3064, %v3063
        %v3066 = vperm.slane %v2972, %v2399
        %v3067 = vperm.slane %v2973, %v2401
        %v3068 = vsel %vm2403, %v3067, %v3066
        %v3069 = vperm.slane %v2974, %v2405
        %v3070 = vsel %vm2407, %v3069, %v3068
        %v3071 = vperm.slane %v2975, %v2409
        %v3072 = vsel %vm2411, %v3071, %v3070
        %v3073 = vperm.slane %v2976, %v2399
        %v3074 = vperm.slane %v2977, %v2401
        %v3075 = vsel %vm2403, %v3074, %v3073
        %v3076 = vperm.slane %v2978, %v2405
        %v3077 = vsel %vm2407, %v3076, %v3075
        %v3078 = vperm.slane %v2979, %v2409
        %v3079 = vsel %vm2411, %v3078, %v3077
        %v3080 = vperm.slane %v2980, %v2399
        %v3081 = vperm.slane %v2981, %v2401
        %v3082 = vsel %vm2403, %v3081, %v3080
        %v3083 = vperm.slane %v2982, %v2405
        %v3084 = vsel %vm2407, %v3083, %v3082
        %v3085 = vperm.slane %v2983, %v2409
        %v3086 = vsel %vm2411, %v3085, %v3084
        %v3087 = vperm.slane %v2984, %v2399
        %v3088 = vperm.slane %v2985, %v2401
        %v3089 = vsel %vm2403, %v3088, %v3087
        %v3090 = vperm.slane %v2986, %v2405
        %v3091 = vsel %vm2407, %v3090, %v3089
        %v3092 = vperm.slane %v2987, %v2409
        %v3093 = vsel %vm2411, %v3092, %v3091
        %v3094 = vperm.slane %v2988, %v2399
        %v3095 = vperm.slane %v2989, %v2401
        %v3096 = vsel %vm2403, %v3095, %v3094
        %v3097 = vperm.slane %v2990, %v2405
        %v3098 = vsel %vm2407, %v3097, %v3096
        %v3099 = vperm.slane %v2991, %v2409
        %v3100 = vsel %vm2411, %v3099, %v3098
        %v3101 = vperm.slane %v2992, %v2399
        %v3102 = vperm.slane %v2993, %v2401
        %v3103 = vsel %vm2403, %v3102, %v3101
        %v3104 = vperm.slane %v2994, %v2405
        %v3105 = vsel %vm2407, %v3104, %v3103
        %v3106 = vperm.slane %v2995, %v2409
        %v3107 = vsel %vm2411, %v3106, %v3105
        %v3108 = vsel %vm2518, %v3009, %v3002
        %v3109 = vsel %vm2520, %v3016, %v3108
        %v3110 = vsel %vm2522, %v3023, %v3109
        %v3111 = vsel %vm2524, %v3030, %v3110
        %v3112 = vsel %vm2526, %v3037, %v3111
        %v3113 = vsel %vm2528, %v3044, %v3112
        %v3114 = vsel %vm2530, %v3051, %v3113
        %v3115 = vsel %vm2518, %v3065, %v3058
        %v3116 = vsel %vm2520, %v3072, %v3115
        %v3117 = vsel %vm2522, %v3079, %v3116
        %v3118 = vsel %vm2524, %v3086, %v3117
        %v3119 = vsel %vm2526, %v3093, %v3118
        %v3120 = vsel %vm2528, %v3100, %v3119
        %v3121 = vsel %vm2530, %v3107, %v3120
        %v3122 = vpack.c.b16 %v3114, %v3114
        %v3123 = vpack.c.b16 %v3121, %v3121
        %s3126 = scalar_lea.vmem %s265, 8 [#allocation8]
        %3127 = vst.msk [vmem:[%s3126] sm:$0xf] %vm2543, %v3122
        %3128 = vst.msk [vmem:[%s3126 + $0x4] sm:$0xf] %vm2543, %v3123
        %v3129 = vld [vmem:[#allocation7 + $0x2] sm:$0x1]
        %v3130 = vperm.slane %v3129, 0
        %v3131 = vmul.f32 %v1884, %v3130
        %v3132 = vmul.f32 %v1885, %v3130
        %v3133 = vmul.f32 %v1886, %v3130
        %v3134 = vmul.f32 %v1887, %v3130
        %v3135 = vmul.f32 %v1888, %v3130
        %v3136 = vmul.f32 %v1889, %v3130
        %v3137 = vmul.f32 %v1890, %v3130
        %v3138 = vmul.f32 %v1891, %v3130
        %v3139 = vmul.f32 %v1892, %v3130
        %v3140 = vmul.f32 %v1893, %v3130
        %v3141 = vmul.f32 %v1894, %v3130
        %v3142 = vmul.f32 %v1895, %v3130
        %v3143 = vmul.f32 %v1896, %v3130
        %v3144 = vmul.f32 %v1897, %v3130
        %v3145 = vmul.f32 %v1898, %v3130
        %v3146 = vmul.f32 %v1899, %v3130
        %v3147 = vmul.f32 %v1900, %v3130
        %v3148 = vmul.f32 %v1901, %v3130
        %v3149 = vmul.f32 %v1902, %v3130
        %v3150 = vmul.f32 %v1903, %v3130
        %v3151 = vmul.f32 %v1904, %v3130
        %v3152 = vmul.f32 %v1905, %v3130
        %v3153 = vmul.f32 %v1906, %v3130
        %v3154 = vmul.f32 %v1907, %v3130
        %v3155 = vmul.f32 %v1908, %v3130
        %v3156 = vmul.f32 %v1909, %v3130
        %v3157 = vmul.f32 %v1910, %v3130
        %v3158 = vmul.f32 %v1911, %v3130
        %v3159 = vmul.f32 %v1912, %v3130
        %v3160 = vmul.f32 %v1913, %v3130
        %v3161 = vmul.f32 %v1914, %v3130
        %v3162 = vmul.f32 %v1915, %v3130
        %v3163 = vmul.f32 %v1916, %v3130
        %v3164 = vmul.f32 %v1917, %v3130
        %v3165 = vmul.f32 %v1918, %v3130
        %v3166 = vmul.f32 %v1919, %v3130
        %v3167 = vmul.f32 %v1920, %v3130
        %v3168 = vmul.f32 %v1921, %v3130
        %v3169 = vmul.f32 %v1922, %v3130
        %v3170 = vmul.f32 %v1923, %v3130
        %v3171 = vmul.f32 %v1924, %v3130
        %v3172 = vmul.f32 %v1925, %v3130
        %v3173 = vmul.f32 %v1926, %v3130
        %v3174 = vmul.f32 %v1927, %v3130
        %v3175 = vmul.f32 %v1928, %v3130
        %v3176 = vmul.f32 %v1929, %v3130
        %v3177 = vmul.f32 %v1930, %v3130
        %v3178 = vmul.f32 %v1931, %v3130
        %v3179 = vmul.f32 %v1932, %v3130
        %v3180 = vmul.f32 %v1933, %v3130
        %v3181 = vmul.f32 %v1934, %v3130
        %v3182 = vmul.f32 %v1935, %v3130
        %v3183 = vmul.f32 %v1936, %v3130
        %v3184 = vmul.f32 %v1937, %v3130
        %v3185 = vmul.f32 %v1938, %v3130
        %v3186 = vmul.f32 %v1939, %v3130
        %v3187 = vmul.f32 %v1940, %v3130
        %v3188 = vmul.f32 %v1941, %v3130
        %v3189 = vmul.f32 %v1942, %v3130
        %v3190 = vmul.f32 %v1943, %v3130
        %v3191 = vmul.f32 %v1944, %v3130
        %v3192 = vmul.f32 %v1945, %v3130
        %v3193 = vmul.f32 %v1946, %v3130
        %v3194 = vmul.f32 %v1947, %v3130
        %v3195 = vsel %vm398, %v3131, 0.0
        %3196 = vadd.xlane.f32.xlu0 %v3195
        %v3197 = vpop.xlane.xlu0 %3196
        %v3198 = vsel %vm398, %v3132, 0.0
        %3199 = vadd.xlane.f32.xlu0 %v3198
        %v3200 = vpop.xlane.xlu0 %3199
        %v3201 = vsel %vm398, %v3133, 0.0
        %3202 = vadd.xlane.f32.xlu0 %v3201
        %v3203 = vpop.xlane.xlu0 %3202
        %v3204 = vsel %vm398, %v3134, 0.0
        %3205 = vadd.xlane.f32.xlu0 %v3204
        %v3206 = vpop.xlane.xlu0 %3205
        %v3207 = vsel %vm398, %v3135, 0.0
        %3208 = vadd.xlane.f32.xlu0 %v3207
        %v3209 = vpop.xlane.xlu0 %3208
        %v3210 = vsel %vm398, %v3136, 0.0
        %3211 = vadd.xlane.f32.xlu0 %v3210
        %v3212 = vpop.xlane.xlu0 %3211
        %v3213 = vsel %vm398, %v3137, 0.0
        %3214 = vadd.xlane.f32.xlu0 %v3213
        %v3215 = vpop.xlane.xlu0 %3214
        %v3216 = vsel %vm398, %v3138, 0.0
        %3217 = vadd.xlane.f32.xlu0 %v3216
        %v3218 = vpop.xlane.xlu0 %3217
        %v3219 = vsel %vm398, %v3139, 0.0
        %3220 = vadd.xlane.f32.xlu0 %v3219
        %v3221 = vpop.xlane.xlu0 %3220
        %v3222 = vsel %vm398, %v3140, 0.0
        %3223 = vadd.xlane.f32.xlu0 %v3222
        %v3224 = vpop.xlane.xlu0 %3223
        %v3225 = vsel %vm398, %v3141, 0.0
        %3226 = vadd.xlane.f32.xlu0 %v3225
        %v3227 = vpop.xlane.xlu0 %3226
        %v3228 = vsel %vm398, %v3142, 0.0
        %3229 = vadd.xlane.f32.xlu0 %v3228
        %v3230 = vpop.xlane.xlu0 %3229
        %v3231 = vsel %vm398, %v3143, 0.0
        %3232 = vadd.xlane.f32.xlu0 %v3231
        %v3233 = vpop.xlane.xlu0 %3232
        %v3234 = vsel %vm398, %v3144, 0.0
        %3235 = vadd.xlane.f32.xlu0 %v3234
        %v3236 = vpop.xlane.xlu0 %3235
        %v3237 = vsel %vm398, %v3145, 0.0
        %3238 = vadd.xlane.f32.xlu0 %v3237
        %v3239 = vpop.xlane.xlu0 %3238
        %v3240 = vsel %vm398, %v3146, 0.0
        %3241 = vadd.xlane.f32.xlu0 %v3240
        %v3242 = vpop.xlane.xlu0 %3241
        %v3243 = vsel %vm398, %v3147, 0.0
        %3244 = vadd.xlane.f32.xlu0 %v3243
        %v3245 = vpop.xlane.xlu0 %3244
        %v3246 = vsel %vm398, %v3148, 0.0
        %3247 = vadd.xlane.f32.xlu0 %v3246
        %v3248 = vpop.xlane.xlu0 %3247
        %v3249 = vsel %vm398, %v3149, 0.0
        %3250 = vadd.xlane.f32.xlu0 %v3249
        %v3251 = vpop.xlane.xlu0 %3250
        %v3252 = vsel %vm398, %v3150, 0.0
        %3253 = vadd.xlane.f32.xlu0 %v3252
        %v3254 = vpop.xlane.xlu0 %3253
        %v3255 = vsel %vm398, %v3151, 0.0
        %3256 = vadd.xlane.f32.xlu0 %v3255
        %v3257 = vpop.xlane.xlu0 %3256
        %v3258 = vsel %vm398, %v3152, 0.0
        %3259 = vadd.xlane.f32.xlu0 %v3258
        %v3260 = vpop.xlane.xlu0 %3259
        %v3261 = vsel %vm398, %v3153, 0.0
        %3262 = vadd.xlane.f32.xlu0 %v3261
        %v3263 = vpop.xlane.xlu0 %3262
        %v3264 = vsel %vm398, %v3154, 0.0
        %3265 = vadd.xlane.f32.xlu0 %v3264
        %v3266 = vpop.xlane.xlu0 %3265
        %v3267 = vsel %vm398, %v3155, 0.0
        %3268 = vadd.xlane.f32.xlu0 %v3267
        %v3269 = vpop.xlane.xlu0 %3268
        %v3270 = vsel %vm398, %v3156, 0.0
        %3271 = vadd.xlane.f32.xlu0 %v3270
        %v3272 = vpop.xlane.xlu0 %3271
        %v3273 = vsel %vm398, %v3157, 0.0
        %3274 = vadd.xlane.f32.xlu0 %v3273
        %v3275 = vpop.xlane.xlu0 %3274
        %v3276 = vsel %vm398, %v3158, 0.0
        %3277 = vadd.xlane.f32.xlu0 %v3276
        %v3278 = vpop.xlane.xlu0 %3277
        %v3279 = vsel %vm398, %v3159, 0.0
        %3280 = vadd.xlane.f32.xlu0 %v3279
        %v3281 = vpop.xlane.xlu0 %3280
        %v3282 = vsel %vm398, %v3160, 0.0
        %3283 = vadd.xlane.f32.xlu0 %v3282
        %v3284 = vpop.xlane.xlu0 %3283
        %v3285 = vsel %vm398, %v3161, 0.0
        %3286 = vadd.xlane.f32.xlu0 %v3285
        %v3287 = vpop.xlane.xlu0 %3286
        %v3288 = vsel %vm398, %v3162, 0.0
        %3289 = vadd.xlane.f32.xlu0 %v3288
        %v3290 = vpop.xlane.xlu0 %3289
        %v3291 = vsel %vm398, %v3163, 0.0
        %3292 = vadd.xlane.f32.xlu0 %v3291
        %v3293 = vpop.xlane.xlu0 %3292
        %v3294 = vsel %vm398, %v3164, 0.0
        %3295 = vadd.xlane.f32.xlu0 %v3294
        %v3296 = vpop.xlane.xlu0 %3295
        %v3297 = vsel %vm398, %v3165, 0.0
        %3298 = vadd.xlane.f32.xlu0 %v3297
        %v3299 = vpop.xlane.xlu0 %3298
        %v3300 = vsel %vm398, %v3166, 0.0
        %3301 = vadd.xlane.f32.xlu0 %v3300
        %v3302 = vpop.xlane.xlu0 %3301
        %v3303 = vsel %vm398, %v3167, 0.0
        %3304 = vadd.xlane.f32.xlu0 %v3303
        %v3305 = vpop.xlane.xlu0 %3304
        %v3306 = vsel %vm398, %v3168, 0.0
        %3307 = vadd.xlane.f32.xlu0 %v3306
        %v3308 = vpop.xlane.xlu0 %3307
        %v3309 = vsel %vm398, %v3169, 0.0
        %3310 = vadd.xlane.f32.xlu0 %v3309
        %v3311 = vpop.xlane.xlu0 %3310
        %v3312 = vsel %vm398, %v3170, 0.0
        %3313 = vadd.xlane.f32.xlu0 %v3312
        %v3314 = vpop.xlane.xlu0 %3313
        %v3315 = vsel %vm398, %v3171, 0.0
        %3316 = vadd.xlane.f32.xlu0 %v3315
        %v3317 = vpop.xlane.xlu0 %3316
        %v3318 = vsel %vm398, %v3172, 0.0
        %3319 = vadd.xlane.f32.xlu0 %v3318
        %v3320 = vpop.xlane.xlu0 %3319
        %v3321 = vsel %vm398, %v3173, 0.0
        %3322 = vadd.xlane.f32.xlu0 %v3321
        %v3323 = vpop.xlane.xlu0 %3322
        %v3324 = vsel %vm398, %v3174, 0.0
        %3325 = vadd.xlane.f32.xlu0 %v3324
        %v3326 = vpop.xlane.xlu0 %3325
        %v3327 = vsel %vm398, %v3175, 0.0
        %3328 = vadd.xlane.f32.xlu0 %v3327
        %v3329 = vpop.xlane.xlu0 %3328
        %v3330 = vsel %vm398, %v3176, 0.0
        %3331 = vadd.xlane.f32.xlu0 %v3330
        %v3332 = vpop.xlane.xlu0 %3331
        %v3333 = vsel %vm398, %v3177, 0.0
        %3334 = vadd.xlane.f32.xlu0 %v3333
        %v3335 = vpop.xlane.xlu0 %3334
        %v3336 = vsel %vm398, %v3178, 0.0
        %3337 = vadd.xlane.f32.xlu0 %v3336
        %v3338 = vpop.xlane.xlu0 %3337
        %v3339 = vsel %vm398, %v3179, 0.0
        %3340 = vadd.xlane.f32.xlu0 %v3339
        %v3341 = vpop.xlane.xlu0 %3340
        %v3342 = vsel %vm398, %v3180, 0.0
        %3343 = vadd.xlane.f32.xlu0 %v3342
        %v3344 = vpop.xlane.xlu0 %3343
        %v3345 = vsel %vm398, %v3181, 0.0
        %3346 = vadd.xlane.f32.xlu0 %v3345
        %v3347 = vpop.xlane.xlu0 %3346
        %v3348 = vsel %vm398, %v3182, 0.0
        %3349 = vadd.xlane.f32.xlu0 %v3348
        %v3350 = vpop.xlane.xlu0 %3349
        %v3351 = vsel %vm398, %v3183, 0.0
        %3352 = vadd.xlane.f32.xlu0 %v3351
        %v3353 = vpop.xlane.xlu0 %3352
        %v3354 = vsel %vm398, %v3184, 0.0
        %3355 = vadd.xlane.f32.xlu0 %v3354
        %v3356 = vpop.xlane.xlu0 %3355
        %v3357 = vsel %vm398, %v3185, 0.0
        %3358 = vadd.xlane.f32.xlu0 %v3357
        %v3359 = vpop.xlane.xlu0 %3358
        %v3360 = vsel %vm398, %v3186, 0.0
        %3361 = vadd.xlane.f32.xlu0 %v3360
        %v3362 = vpop.xlane.xlu0 %3361
        %v3363 = vsel %vm398, %v3187, 0.0
        %3364 = vadd.xlane.f32.xlu0 %v3363
        %v3365 = vpop.xlane.xlu0 %3364
        %v3366 = vsel %vm398, %v3188, 0.0
        %3367 = vadd.xlane.f32.xlu0 %v3366
        %v3368 = vpop.xlane.xlu0 %3367
        %v3369 = vsel %vm398, %v3189, 0.0
        %3370 = vadd.xlane.f32.xlu0 %v3369
        %v3371 = vpop.xlane.xlu0 %3370
        %v3372 = vsel %vm398, %v3190, 0.0
        %3373 = vadd.xlane.f32.xlu0 %v3372
        %v3374 = vpop.xlane.xlu0 %3373
        %v3375 = vsel %vm398, %v3191, 0.0
        %3376 = vadd.xlane.f32.xlu0 %v3375
        %v3377 = vpop.xlane.xlu0 %3376
        %v3378 = vsel %vm398, %v3192, 0.0
        %3379 = vadd.xlane.f32.xlu0 %v3378
        %v3380 = vpop.xlane.xlu0 %3379
        %v3381 = vsel %vm398, %v3193, 0.0
        %3382 = vadd.xlane.f32.xlu0 %v3381
        %v3383 = vpop.xlane.xlu0 %3382
        %v3384 = vsel %vm398, %v3194, 0.0
        %3385 = vadd.xlane.f32.xlu0 %v3384
        %v3386 = vpop.xlane.xlu0 %3385
        %v3387 = vpack.c.bf16 %v3197, %v3197
        %v3388 = vpack.c.bf16 %v3200, %v3200
        %v3389 = vpack.c.bf16 %v3203, %v3203
        %v3390 = vpack.c.bf16 %v3206, %v3206
        %v3391 = vpack.c.bf16 %v3209, %v3209
        %v3392 = vpack.c.bf16 %v3212, %v3212
        %v3393 = vpack.c.bf16 %v3215, %v3215
        %v3394 = vpack.c.bf16 %v3218, %v3218
        %v3395 = vpack.c.bf16 %v3221, %v3221
        %v3396 = vpack.c.bf16 %v3224, %v3224
        %v3397 = vpack.c.bf16 %v3227, %v3227
        %v3398 = vpack.c.bf16 %v3230, %v3230
        %v3399 = vpack.c.bf16 %v3233, %v3233
        %v3400 = vpack.c.bf16 %v3236, %v3236
        %v3401 = vpack.c.bf16 %v3239, %v3239
        %v3402 = vpack.c.bf16 %v3242, %v3242
        %v3403 = vpack.c.bf16 %v3245, %v3245
        %v3404 = vpack.c.bf16 %v3248, %v3248
        %v3405 = vpack.c.bf16 %v3251, %v3251
        %v3406 = vpack.c.bf16 %v3254, %v3254
        %v3407 = vpack.c.bf16 %v3257, %v3257
        %v3408 = vpack.c.bf16 %v3260, %v3260
        %v3409 = vpack.c.bf16 %v3263, %v3263
        %v3410 = vpack.c.bf16 %v3266, %v3266
        %v3411 = vpack.c.bf16 %v3269, %v3269
        %v3412 = vpack.c.bf16 %v3272, %v3272
        %v3413 = vpack.c.bf16 %v3275, %v3275
        %v3414 = vpack.c.bf16 %v3278, %v3278
        %v3415 = vpack.c.bf16 %v3281, %v3281
        %v3416 = vpack.c.bf16 %v3284, %v3284
        %v3417 = vpack.c.bf16 %v3287, %v3287
        %v3418 = vpack.c.bf16 %v3290, %v3290
        %v3419 = vpack.c.bf16 %v3293, %v3293
        %v3420 = vpack.c.bf16 %v3296, %v3296
        %v3421 = vpack.c.bf16 %v3299, %v3299
        %v3422 = vpack.c.bf16 %v3302, %v3302
        %v3423 = vpack.c.bf16 %v3305, %v3305
        %v3424 = vpack.c.bf16 %v3308, %v3308
        %v3425 = vpack.c.bf16 %v3311, %v3311
        %v3426 = vpack.c.bf16 %v3314, %v3314
        %v3427 = vpack.c.bf16 %v3317, %v3317
        %v3428 = vpack.c.bf16 %v3320, %v3320
        %v3429 = vpack.c.bf16 %v3323, %v3323
        %v3430 = vpack.c.bf16 %v3326, %v3326
        %v3431 = vpack.c.bf16 %v3329, %v3329
        %v3432 = vpack.c.bf16 %v3332, %v3332
        %v3433 = vpack.c.bf16 %v3335, %v3335
        %v3434 = vpack.c.bf16 %v3338, %v3338
        %v3435 = vpack.c.bf16 %v3341, %v3341
        %v3436 = vpack.c.bf16 %v3344, %v3344
        %v3437 = vpack.c.bf16 %v3347, %v3347
        %v3438 = vpack.c.bf16 %v3350, %v3350
        %v3439 = vpack.c.bf16 %v3353, %v3353
        %v3440 = vpack.c.bf16 %v3356, %v3356
        %v3441 = vpack.c.bf16 %v3359, %v3359
        %v3442 = vpack.c.bf16 %v3362, %v3362
        %v3443 = vpack.c.bf16 %v3365, %v3365
        %v3444 = vpack.c.bf16 %v3368, %v3368
        %v3445 = vpack.c.bf16 %v3371, %v3371
        %v3446 = vpack.c.bf16 %v3374, %v3374
        %v3447 = vpack.c.bf16 %v3377, %v3377
        %v3448 = vpack.c.bf16 %v3380, %v3380
        %v3449 = vpack.c.bf16 %v3383, %v3383
        %v3450 = vpack.c.bf16 %v3386, %v3386
        %v3515 = vunpack.c.l.b16 %v3387
        %v3516 = vunpack.c.l.b16 %v3388
        %v3517 = vunpack.c.l.b16 %v3389
        %v3518 = vunpack.c.l.b16 %v3390
        %v3519 = vunpack.c.l.b16 %v3391
        %v3520 = vunpack.c.l.b16 %v3392
        %v3521 = vunpack.c.l.b16 %v3393
        %v3522 = vunpack.c.l.b16 %v3394
        %v3523 = vunpack.c.l.b16 %v3395
        %v3524 = vunpack.c.l.b16 %v3396
        %v3525 = vunpack.c.l.b16 %v3397
        %v3526 = vunpack.c.l.b16 %v3398
        %v3527 = vunpack.c.l.b16 %v3399
        %v3528 = vunpack.c.l.b16 %v3400
        %v3529 = vunpack.c.l.b16 %v3401
        %v3530 = vunpack.c.l.b16 %v3402
        %v3531 = vunpack.c.l.b16 %v3403
        %v3532 = vunpack.c.l.b16 %v3404
        %v3533 = vunpack.c.l.b16 %v3405
        %v3534 = vunpack.c.l.b16 %v3406
        %v3535 = vunpack.c.l.b16 %v3407
        %v3536 = vunpack.c.l.b16 %v3408
        %v3537 = vunpack.c.l.b16 %v3409
        %v3538 = vunpack.c.l.b16 %v3410
        %v3539 = vunpack.c.l.b16 %v3411
        %v3540 = vunpack.c.l.b16 %v3412
        %v3541 = vunpack.c.l.b16 %v3413
        %v3542 = vunpack.c.l.b16 %v3414
        %v3543 = vunpack.c.l.b16 %v3415
        %v3544 = vunpack.c.l.b16 %v3416
        %v3545 = vunpack.c.l.b16 %v3417
        %v3546 = vunpack.c.l.b16 %v3418
        %v3547 = vunpack.c.l.b16 %v3419
        %v3548 = vunpack.c.l.b16 %v3420
        %v3549 = vunpack.c.l.b16 %v3421
        %v3550 = vunpack.c.l.b16 %v3422
        %v3551 = vunpack.c.l.b16 %v3423
        %v3552 = vunpack.c.l.b16 %v3424
        %v3553 = vunpack.c.l.b16 %v3425
        %v3554 = vunpack.c.l.b16 %v3426
        %v3555 = vunpack.c.l.b16 %v3427
        %v3556 = vunpack.c.l.b16 %v3428
        %v3557 = vunpack.c.l.b16 %v3429
        %v3558 = vunpack.c.l.b16 %v3430
        %v3559 = vunpack.c.l.b16 %v3431
        %v3560 = vunpack.c.l.b16 %v3432
        %v3561 = vunpack.c.l.b16 %v3433
        %v3562 = vunpack.c.l.b16 %v3434
        %v3563 = vunpack.c.l.b16 %v3435
        %v3564 = vunpack.c.l.b16 %v3436
        %v3565 = vunpack.c.l.b16 %v3437
        %v3566 = vunpack.c.l.b16 %v3438
        %v3567 = vunpack.c.l.b16 %v3439
        %v3568 = vunpack.c.l.b16 %v3440
        %v3569 = vunpack.c.l.b16 %v3441
        %v3570 = vunpack.c.l.b16 %v3442
        %v3571 = vunpack.c.l.b16 %v3443
        %v3572 = vunpack.c.l.b16 %v3444
        %v3573 = vunpack.c.l.b16 %v3445
        %v3574 = vunpack.c.l.b16 %v3446
        %v3575 = vunpack.c.l.b16 %v3447
        %v3576 = vunpack.c.l.b16 %v3448
        %v3577 = vunpack.c.l.b16 %v3449
        %v3578 = vunpack.c.l.b16 %v3450
        %v3579 = vperm.slane %v3515, %v2399
        %v3580 = vperm.slane %v3516, %v2401
        %v3581 = vsel %vm2403, %v3580, %v3579
        %v3582 = vperm.slane %v3517, %v2405
        %v3583 = vsel %vm2407, %v3582, %v3581
        %v3584 = vperm.slane %v3518, %v2409
        %v3585 = vsel %vm2411, %v3584, %v3583
        %v3586 = vperm.slane %v3519, %v2399
        %v3587 = vperm.slane %v3520, %v2401
        %v3588 = vsel %vm2403, %v3587, %v3586
        %v3589 = vperm.slane %v3521, %v2405
        %v3590 = vsel %vm2407, %v3589, %v3588
        %v3591 = vperm.slane %v3522, %v2409
        %v3592 = vsel %vm2411, %v3591, %v3590
        %v3593 = vperm.slane %v3523, %v2399
        %v3594 = vperm.slane %v3524, %v2401
        %v3595 = vsel %vm2403, %v3594, %v3593
        %v3596 = vperm.slane %v3525, %v2405
        %v3597 = vsel %vm2407, %v3596, %v3595
        %v3598 = vperm.slane %v3526, %v2409
        %v3599 = vsel %vm2411, %v3598, %v3597
        %v3600 = vperm.slane %v3527, %v2399
        %v3601 = vperm.slane %v3528, %v2401
        %v3602 = vsel %vm2403, %v3601, %v3600
        %v3603 = vperm.slane %v3529, %v2405
        %v3604 = vsel %vm2407, %v3603, %v3602
        %v3605 = vperm.slane %v3530, %v2409
        %v3606 = vsel %vm2411, %v3605, %v3604
        %v3607 = vperm.slane %v3531, %v2399
        %v3608 = vperm.slane %v3532, %v2401
        %v3609 = vsel %vm2403, %v3608, %v3607
        %v3610 = vperm.slane %v3533, %v2405
        %v3611 = vsel %vm2407, %v3610, %v3609
        %v3612 = vperm.slane %v3534, %v2409
        %v3613 = vsel %vm2411, %v3612, %v3611
        %v3614 = vperm.slane %v3535, %v2399
        %v3615 = vperm.slane %v3536, %v2401
        %v3616 = vsel %vm2403, %v3615, %v3614
        %v3617 = vperm.slane %v3537, %v2405
        %v3618 = vsel %vm2407, %v3617, %v3616
        %v3619 = vperm.slane %v3538, %v2409
        %v3620 = vsel %vm2411, %v3619, %v3618
        %v3621 = vperm.slane %v3539, %v2399
        %v3622 = vperm.slane %v3540, %v2401
        %v3623 = vsel %vm2403, %v3622, %v3621
        %v3624 = vperm.slane %v3541, %v2405
        %v3625 = vsel %vm2407, %v3624, %v3623
        %v3626 = vperm.slane %v3542, %v2409
        %v3627 = vsel %vm2411, %v3626, %v3625
        %v3628 = vperm.slane %v3543, %v2399
        %v3629 = vperm.slane %v3544, %v2401
        %v3630 = vsel %vm2403, %v3629, %v3628
        %v3631 = vperm.slane %v3545, %v2405
        %v3632 = vsel %vm2407, %v3631, %v3630
        %v3633 = vperm.slane %v3546, %v2409
        %v3634 = vsel %vm2411, %v3633, %v3632
        %v3635 = vperm.slane %v3547, %v2399
        %v3636 = vperm.slane %v3548, %v2401
        %v3637 = vsel %vm2403, %v3636, %v3635
        %v3638 = vperm.slane %v3549, %v2405
        %v3639 = vsel %vm2407, %v3638, %v3637
        %v3640 = vperm.slane %v3550, %v2409
        %v3641 = vsel %vm2411, %v3640, %v3639
        %v3642 = vperm.slane %v3551, %v2399
        %v3643 = vperm.slane %v3552, %v2401
        %v3644 = vsel %vm2403, %v3643, %v3642
        %v3645 = vperm.slane %v3553, %v2405
        %v3646 = vsel %vm2407, %v3645, %v3644
        %v3647 = vperm.slane %v3554, %v2409
        %v3648 = vsel %vm2411, %v3647, %v3646
        %v3649 = vperm.slane %v3555, %v2399
        %v3650 = vperm.slane %v3556, %v2401
        %v3651 = vsel %vm2403, %v3650, %v3649
        %v3652 = vperm.slane %v3557, %v2405
        %v3653 = vsel %vm2407, %v3652, %v3651
        %v3654 = vperm.slane %v3558, %v2409
        %v3655 = vsel %vm2411, %v3654, %v3653
        %v3656 = vperm.slane %v3559, %v2399
        %v3657 = vperm.slane %v3560, %v2401
        %v3658 = vsel %vm2403, %v3657, %v3656
        %v3659 = vperm.slane %v3561, %v2405
        %v3660 = vsel %vm2407, %v3659, %v3658
        %v3661 = vperm.slane %v3562, %v2409
        %v3662 = vsel %vm2411, %v3661, %v3660
        %v3663 = vperm.slane %v3563, %v2399
        %v3664 = vperm.slane %v3564, %v2401
        %v3665 = vsel %vm2403, %v3664, %v3663
        %v3666 = vperm.slane %v3565, %v2405
        %v3667 = vsel %vm2407, %v3666, %v3665
        %v3668 = vperm.slane %v3566, %v2409
        %v3669 = vsel %vm2411, %v3668, %v3667
        %v3670 = vperm.slane %v3567, %v2399
        %v3671 = vperm.slane %v3568, %v2401
        %v3672 = vsel %vm2403, %v3671, %v3670
        %v3673 = vperm.slane %v3569, %v2405
        %v3674 = vsel %vm2407, %v3673, %v3672
        %v3675 = vperm.slane %v3570, %v2409
        %v3676 = vsel %vm2411, %v3675, %v3674
        %v3677 = vperm.slane %v3571, %v2399
        %v3678 = vperm.slane %v3572, %v2401
        %v3679 = vsel %vm2403, %v3678, %v3677
        %v3680 = vperm.slane %v3573, %v2405
        %v3681 = vsel %vm2407, %v3680, %v3679
        %v3682 = vperm.slane %v3574, %v2409
        %v3683 = vsel %vm2411, %v3682, %v3681
        %v3684 = vperm.slane %v3575, %v2399
        %v3685 = vperm.slane %v3576, %v2401
        %v3686 = vsel %vm2403, %v3685, %v3684
        %v3687 = vperm.slane %v3577, %v2405
        %v3688 = vsel %vm2407, %v3687, %v3686
        %v3689 = vperm.slane %v3578, %v2409
        %v3690 = vsel %vm2411, %v3689, %v3688
        %v3691 = vsel %vm2518, %v3592, %v3585
        %v3692 = vsel %vm2520, %v3599, %v3691
        %v3693 = vsel %vm2522, %v3606, %v3692
        %v3694 = vsel %vm2524, %v3613, %v3693
        %v3695 = vsel %vm2526, %v3620, %v3694
        %v3696 = vsel %vm2528, %v3627, %v3695
        %v3697 = vsel %vm2530, %v3634, %v3696
        %v3698 = vsel %vm2518, %v3648, %v3641
        %v3699 = vsel %vm2520, %v3655, %v3698
        %v3700 = vsel %vm2522, %v3662, %v3699
        %v3701 = vsel %vm2524, %v3669, %v3700
        %v3702 = vsel %vm2526, %v3676, %v3701
        %v3703 = vsel %vm2528, %v3683, %v3702
        %v3704 = vsel %vm2530, %v3690, %v3703
        %v3705 = vpack.c.b16 %v3697, %v3697
        %v3706 = vpack.c.b16 %v3704, %v3704
        %s3709 = scalar_lea.vmem %s265, 16 [#allocation8]
        %3710 = vst.msk [vmem:[%s3709] sm:$0xf] %vm2543, %v3705
        %3711 = vst.msk [vmem:[%s3709 + $0x4] sm:$0xf] %vm2543, %v3706
        %v3712 = vld [vmem:[#allocation7 + $0x3] sm:$0x1]
        %v3713 = vperm.slane %v3712, 0
        %v3714 = vmul.f32 %v1884, %v3713
        %v3715 = vmul.f32 %v1885, %v3713
        %v3716 = vmul.f32 %v1886, %v3713
        %v3717 = vmul.f32 %v1887, %v3713
        %v3718 = vmul.f32 %v1888, %v3713
        %v3719 = vmul.f32 %v1889, %v3713
        %v3720 = vmul.f32 %v1890, %v3713
        %v3721 = vmul.f32 %v1891, %v3713
        %v3722 = vmul.f32 %v1892, %v3713
        %v3723 = vmul.f32 %v1893, %v3713
        %v3724 = vmul.f32 %v1894, %v3713
        %v3725 = vmul.f32 %v1895, %v3713
        %v3726 = vmul.f32 %v1896, %v3713
        %v3727 = vmul.f32 %v1897, %v3713
        %v3728 = vmul.f32 %v1898, %v3713
        %v3729 = vmul.f32 %v1899, %v3713
        %v3730 = vmul.f32 %v1900, %v3713
        %v3731 = vmul.f32 %v1901, %v3713
        %v3732 = vmul.f32 %v1902, %v3713
        %v3733 = vmul.f32 %v1903, %v3713
        %v3734 = vmul.f32 %v1904, %v3713
        %v3735 = vmul.f32 %v1905, %v3713
        %v3736 = vmul.f32 %v1906, %v3713
        %v3737 = vmul.f32 %v1907, %v3713
        %v3738 = vmul.f32 %v1908, %v3713
        %v3739 = vmul.f32 %v1909, %v3713
        %v3740 = vmul.f32 %v1910, %v3713
        %v3741 = vmul.f32 %v1911, %v3713
        %v3742 = vmul.f32 %v1912, %v3713
        %v3743 = vmul.f32 %v1913, %v3713
        %v3744 = vmul.f32 %v1914, %v3713
        %v3745 = vmul.f32 %v1915, %v3713
        %v3746 = vmul.f32 %v1916, %v3713
        %v3747 = vmul.f32 %v1917, %v3713
        %v3748 = vmul.f32 %v1918, %v3713
        %v3749 = vmul.f32 %v1919, %v3713
        %v3750 = vmul.f32 %v1920, %v3713
        %v3751 = vmul.f32 %v1921, %v3713
        %v3752 = vmul.f32 %v1922, %v3713
        %v3753 = vmul.f32 %v1923, %v3713
        %v3754 = vmul.f32 %v1924, %v3713
        %v3755 = vmul.f32 %v1925, %v3713
        %v3756 = vmul.f32 %v1926, %v3713
        %v3757 = vmul.f32 %v1927, %v3713
        %v3758 = vmul.f32 %v1928, %v3713
        %v3759 = vmul.f32 %v1929, %v3713
        %v3760 = vmul.f32 %v1930, %v3713
        %v3761 = vmul.f32 %v1931, %v3713
        %v3762 = vmul.f32 %v1932, %v3713
        %v3763 = vmul.f32 %v1933, %v3713
        %v3764 = vmul.f32 %v1934, %v3713
        %v3765 = vmul.f32 %v1935, %v3713
        %v3766 = vmul.f32 %v1936, %v3713
        %v3767 = vmul.f32 %v1937, %v3713
        %v3768 = vmul.f32 %v1938, %v3713
        %v3769 = vmul.f32 %v1939, %v3713
        %v3770 = vmul.f32 %v1940, %v3713
        %v3771 = vmul.f32 %v1941, %v3713
        %v3772 = vmul.f32 %v1942, %v3713
        %v3773 = vmul.f32 %v1943, %v3713
        %v3774 = vmul.f32 %v1944, %v3713
        %v3775 = vmul.f32 %v1945, %v3713
        %v3776 = vmul.f32 %v1946, %v3713
        %v3777 = vmul.f32 %v1947, %v3713
        %v3778 = vsel %vm398, %v3714, 0.0
        %3779 = vadd.xlane.f32.xlu0 %v3778
        %v3780 = vpop.xlane.xlu0 %3779
        %v3781 = vsel %vm398, %v3715, 0.0
        %3782 = vadd.xlane.f32.xlu0 %v3781
        %v3783 = vpop.xlane.xlu0 %3782
        %v3784 = vsel %vm398, %v3716, 0.0
        %3785 = vadd.xlane.f32.xlu0 %v3784
        %v3786 = vpop.xlane.xlu0 %3785
        %v3787 = vsel %vm398, %v3717, 0.0
        %3788 = vadd.xlane.f32.xlu0 %v3787
        %v3789 = vpop.xlane.xlu0 %3788
        %v3790 = vsel %vm398, %v3718, 0.0
        %3791 = vadd.xlane.f32.xlu0 %v3790
        %v3792 = vpop.xlane.xlu0 %3791
        %v3793 = vsel %vm398, %v3719, 0.0
        %3794 = vadd.xlane.f32.xlu0 %v3793
        %v3795 = vpop.xlane.xlu0 %3794
        %v3796 = vsel %vm398, %v3720, 0.0
        %3797 = vadd.xlane.f32.xlu0 %v3796
        %v3798 = vpop.xlane.xlu0 %3797
        %v3799 = vsel %vm398, %v3721, 0.0
        %3800 = vadd.xlane.f32.xlu0 %v3799
        %v3801 = vpop.xlane.xlu0 %3800
        %v3802 = vsel %vm398, %v3722, 0.0
        %3803 = vadd.xlane.f32.xlu0 %v3802
        %v3804 = vpop.xlane.xlu0 %3803
        %v3805 = vsel %vm398, %v3723, 0.0
        %3806 = vadd.xlane.f32.xlu0 %v3805
        %v3807 = vpop.xlane.xlu0 %3806
        %v3808 = vsel %vm398, %v3724, 0.0
        %3809 = vadd.xlane.f32.xlu0 %v3808
        %v3810 = vpop.xlane.xlu0 %3809
        %v3811 = vsel %vm398, %v3725, 0.0
        %3812 = vadd.xlane.f32.xlu0 %v3811
        %v3813 = vpop.xlane.xlu0 %3812
        %v3814 = vsel %vm398, %v3726, 0.0
        %3815 = vadd.xlane.f32.xlu0 %v3814
        %v3816 = vpop.xlane.xlu0 %3815
        %v3817 = vsel %vm398, %v3727, 0.0
        %3818 = vadd.xlane.f32.xlu0 %v3817
        %v3819 = vpop.xlane.xlu0 %3818
        %v3820 = vsel %vm398, %v3728, 0.0
        %3821 = vadd.xlane.f32.xlu0 %v3820
        %v3822 = vpop.xlane.xlu0 %3821
        %v3823 = vsel %vm398, %v3729, 0.0
        %3824 = vadd.xlane.f32.xlu0 %v3823
        %v3825 = vpop.xlane.xlu0 %3824
        %v3826 = vsel %vm398, %v3730, 0.0
        %3827 = vadd.xlane.f32.xlu0 %v3826
        %v3828 = vpop.xlane.xlu0 %3827
        %v3829 = vsel %vm398, %v3731, 0.0
        %3830 = vadd.xlane.f32.xlu0 %v3829
        %v3831 = vpop.xlane.xlu0 %3830
        %v3832 = vsel %vm398, %v3732, 0.0
        %3833 = vadd.xlane.f32.xlu0 %v3832
        %v3834 = vpop.xlane.xlu0 %3833
        %v3835 = vsel %vm398, %v3733, 0.0
        %3836 = vadd.xlane.f32.xlu0 %v3835
        %v3837 = vpop.xlane.xlu0 %3836
        %v3838 = vsel %vm398, %v3734, 0.0
        %3839 = vadd.xlane.f32.xlu0 %v3838
        %v3840 = vpop.xlane.xlu0 %3839
        %v3841 = vsel %vm398, %v3735, 0.0
        %3842 = vadd.xlane.f32.xlu0 %v3841
        %v3843 = vpop.xlane.xlu0 %3842
        %v3844 = vsel %vm398, %v3736, 0.0
        %3845 = vadd.xlane.f32.xlu0 %v3844
        %v3846 = vpop.xlane.xlu0 %3845
        %v3847 = vsel %vm398, %v3737, 0.0
        %3848 = vadd.xlane.f32.xlu0 %v3847
        %v3849 = vpop.xlane.xlu0 %3848
        %v3850 = vsel %vm398, %v3738, 0.0
        %3851 = vadd.xlane.f32.xlu0 %v3850
        %v3852 = vpop.xlane.xlu0 %3851
        %v3853 = vsel %vm398, %v3739, 0.0
        %3854 = vadd.xlane.f32.xlu0 %v3853
        %v3855 = vpop.xlane.xlu0 %3854
        %v3856 = vsel %vm398, %v3740, 0.0
        %3857 = vadd.xlane.f32.xlu0 %v3856
        %v3858 = vpop.xlane.xlu0 %3857
        %v3859 = vsel %vm398, %v3741, 0.0
        %3860 = vadd.xlane.f32.xlu0 %v3859
        %v3861 = vpop.xlane.xlu0 %3860
        %v3862 = vsel %vm398, %v3742, 0.0
        %3863 = vadd.xlane.f32.xlu0 %v3862
        %v3864 = vpop.xlane.xlu0 %3863
        %v3865 = vsel %vm398, %v3743, 0.0
        %3866 = vadd.xlane.f32.xlu0 %v3865
        %v3867 = vpop.xlane.xlu0 %3866
        %v3868 = vsel %vm398, %v3744, 0.0
        %3869 = vadd.xlane.f32.xlu0 %v3868
        %v3870 = vpop.xlane.xlu0 %3869
        %v3871 = vsel %vm398, %v3745, 0.0
        %3872 = vadd.xlane.f32.xlu0 %v3871
        %v3873 = vpop.xlane.xlu0 %3872
        %v3874 = vsel %vm398, %v3746, 0.0
        %3875 = vadd.xlane.f32.xlu0 %v3874
        %v3876 = vpop.xlane.xlu0 %3875
        %v3877 = vsel %vm398, %v3747, 0.0
        %3878 = vadd.xlane.f32.xlu0 %v3877
        %v3879 = vpop.xlane.xlu0 %3878
        %v3880 = vsel %vm398, %v3748, 0.0
        %3881 = vadd.xlane.f32.xlu0 %v3880
        %v3882 = vpop.xlane.xlu0 %3881
        %v3883 = vsel %vm398, %v3749, 0.0
        %3884 = vadd.xlane.f32.xlu0 %v3883
        %v3885 = vpop.xlane.xlu0 %3884
        %v3886 = vsel %vm398, %v3750, 0.0
        %3887 = vadd.xlane.f32.xlu0 %v3886
        %v3888 = vpop.xlane.xlu0 %3887
        %v3889 = vsel %vm398, %v3751, 0.0
        %3890 = vadd.xlane.f32.xlu0 %v3889
        %v3891 = vpop.xlane.xlu0 %3890
        %v3892 = vsel %vm398, %v3752, 0.0
        %3893 = vadd.xlane.f32.xlu0 %v3892
        %v3894 = vpop.xlane.xlu0 %3893
        %v3895 = vsel %vm398, %v3753, 0.0
        %3896 = vadd.xlane.f32.xlu0 %v3895
        %v3897 = vpop.xlane.xlu0 %3896
        %v3898 = vsel %vm398, %v3754, 0.0
        %3899 = vadd.xlane.f32.xlu0 %v3898
        %v3900 = vpop.xlane.xlu0 %3899
        %v3901 = vsel %vm398, %v3755, 0.0
        %3902 = vadd.xlane.f32.xlu0 %v3901
        %v3903 = vpop.xlane.xlu0 %3902
        %v3904 = vsel %vm398, %v3756, 0.0
        %3905 = vadd.xlane.f32.xlu0 %v3904
        %v3906 = vpop.xlane.xlu0 %3905
        %v3907 = vsel %vm398, %v3757, 0.0
        %3908 = vadd.xlane.f32.xlu0 %v3907
        %v3909 = vpop.xlane.xlu0 %3908
        %v3910 = vsel %vm398, %v3758, 0.0
        %3911 = vadd.xlane.f32.xlu0 %v3910
        %v3912 = vpop.xlane.xlu0 %3911
        %v3913 = vsel %vm398, %v3759, 0.0
        %3914 = vadd.xlane.f32.xlu0 %v3913
        %v3915 = vpop.xlane.xlu0 %3914
        %v3916 = vsel %vm398, %v3760, 0.0
        %3917 = vadd.xlane.f32.xlu0 %v3916
        %v3918 = vpop.xlane.xlu0 %3917
        %v3919 = vsel %vm398, %v3761, 0.0
        %3920 = vadd.xlane.f32.xlu0 %v3919
        %v3921 = vpop.xlane.xlu0 %3920
        %v3922 = vsel %vm398, %v3762, 0.0
        %3923 = vadd.xlane.f32.xlu0 %v3922
        %v3924 = vpop.xlane.xlu0 %3923
        %v3925 = vsel %vm398, %v3763, 0.0
        %3926 = vadd.xlane.f32.xlu0 %v3925
        %v3927 = vpop.xlane.xlu0 %3926
        %v3928 = vsel %vm398, %v3764, 0.0
        %3929 = vadd.xlane.f32.xlu0 %v3928
        %v3930 = vpop.xlane.xlu0 %3929
        %v3931 = vsel %vm398, %v3765, 0.0
        %3932 = vadd.xlane.f32.xlu0 %v3931
        %v3933 = vpop.xlane.xlu0 %3932
        %v3934 = vsel %vm398, %v3766, 0.0
        %3935 = vadd.xlane.f32.xlu0 %v3934
        %v3936 = vpop.xlane.xlu0 %3935
        %v3937 = vsel %vm398, %v3767, 0.0
        %3938 = vadd.xlane.f32.xlu0 %v3937
        %v3939 = vpop.xlane.xlu0 %3938
        %v3940 = vsel %vm398, %v3768, 0.0
        %3941 = vadd.xlane.f32.xlu0 %v3940
        %v3942 = vpop.xlane.xlu0 %3941
        %v3943 = vsel %vm398, %v3769, 0.0
        %3944 = vadd.xlane.f32.xlu0 %v3943
        %v3945 = vpop.xlane.xlu0 %3944
        %v3946 = vsel %vm398, %v3770, 0.0
        %3947 = vadd.xlane.f32.xlu0 %v3946
        %v3948 = vpop.xlane.xlu0 %3947
        %v3949 = vsel %vm398, %v3771, 0.0
        %3950 = vadd.xlane.f32.xlu0 %v3949
        %v3951 = vpop.xlane.xlu0 %3950
        %v3952 = vsel %vm398, %v3772, 0.0
        %3953 = vadd.xlane.f32.xlu0 %v3952
        %v3954 = vpop.xlane.xlu0 %3953
        %v3955 = vsel %vm398, %v3773, 0.0
        %3956 = vadd.xlane.f32.xlu0 %v3955
        %v3957 = vpop.xlane.xlu0 %3956
        %v3958 = vsel %vm398, %v3774, 0.0
        %3959 = vadd.xlane.f32.xlu0 %v3958
        %v3960 = vpop.xlane.xlu0 %3959
        %v3961 = vsel %vm398, %v3775, 0.0
        %3962 = vadd.xlane.f32.xlu0 %v3961
        %v3963 = vpop.xlane.xlu0 %3962
        %v3964 = vsel %vm398, %v3776, 0.0
        %3965 = vadd.xlane.f32.xlu0 %v3964
        %v3966 = vpop.xlane.xlu0 %3965
        %v3967 = vsel %vm398, %v3777, 0.0
        %3968 = vadd.xlane.f32.xlu0 %v3967
        %v3969 = vpop.xlane.xlu0 %3968
        %v3970 = vpack.c.bf16 %v3780, %v3780
        %v3971 = vpack.c.bf16 %v3783, %v3783
        %v3972 = vpack.c.bf16 %v3786, %v3786
        %v3973 = vpack.c.bf16 %v3789, %v3789
        %v3974 = vpack.c.bf16 %v3792, %v3792
        %v3975 = vpack.c.bf16 %v3795, %v3795
        %v3976 = vpack.c.bf16 %v3798, %v3798
        %v3977 = vpack.c.bf16 %v3801, %v3801
        %v3978 = vpack.c.bf16 %v3804, %v3804
        %v3979 = vpack.c.bf16 %v3807, %v3807
        %v3980 = vpack.c.bf16 %v3810, %v3810
        %v3981 = vpack.c.bf16 %v3813, %v3813
        %v3982 = vpack.c.bf16 %v3816, %v3816
        %v3983 = vpack.c.bf16 %v3819, %v3819
        %v3984 = vpack.c.bf16 %v3822, %v3822
        %v3985 = vpack.c.bf16 %v3825, %v3825
        %v3986 = vpack.c.bf16 %v3828, %v3828
        %v3987 = vpack.c.bf16 %v3831, %v3831
        %v3988 = vpack.c.bf16 %v3834, %v3834
        %v3989 = vpack.c.bf16 %v3837, %v3837
        %v3990 = vpack.c.bf16 %v3840, %v3840
        %v3991 = vpack.c.bf16 %v3843, %v3843
        %v3992 = vpack.c.bf16 %v3846, %v3846
        %v3993 = vpack.c.bf16 %v3849, %v3849
        %v3994 = vpack.c.bf16 %v3852, %v3852
        %v3995 = vpack.c.bf16 %v3855, %v3855
        %v3996 = vpack.c.bf16 %v3858, %v3858
        %v3997 = vpack.c.bf16 %v3861, %v3861
        %v3998 = vpack.c.bf16 %v3864, %v3864
        %v3999 = vpack.c.bf16 %v3867, %v3867
        %v4000 = vpack.c.bf16 %v3870, %v3870
        %v4001 = vpack.c.bf16 %v3873, %v3873
        %v4002 = vpack.c.bf16 %v3876, %v3876
        %v4003 = vpack.c.bf16 %v3879, %v3879
        %v4004 = vpack.c.bf16 %v3882, %v3882
        %v4005 = vpack.c.bf16 %v3885, %v3885
        %v4006 = vpack.c.bf16 %v3888, %v3888
        %v4007 = vpack.c.bf16 %v3891, %v3891
        %v4008 = vpack.c.bf16 %v3894, %v3894
        %v4009 = vpack.c.bf16 %v3897, %v3897
        %v4010 = vpack.c.bf16 %v3900, %v3900
        %v4011 = vpack.c.bf16 %v3903, %v3903
        %v4012 = vpack.c.bf16 %v3906, %v3906
        %v4013 = vpack.c.bf16 %v3909, %v3909
        %v4014 = vpack.c.bf16 %v3912, %v3912
        %v4015 = vpack.c.bf16 %v3915, %v3915
        %v4016 = vpack.c.bf16 %v3918, %v3918
        %v4017 = vpack.c.bf16 %v3921, %v3921
        %v4018 = vpack.c.bf16 %v3924, %v3924
        %v4019 = vpack.c.bf16 %v3927, %v3927
        %v4020 = vpack.c.bf16 %v3930, %v3930
        %v4021 = vpack.c.bf16 %v3933, %v3933
        %v4022 = vpack.c.bf16 %v3936, %v3936
        %v4023 = vpack.c.bf16 %v3939, %v3939
        %v4024 = vpack.c.bf16 %v3942, %v3942
        %v4025 = vpack.c.bf16 %v3945, %v3945
        %v4026 = vpack.c.bf16 %v3948, %v3948
        %v4027 = vpack.c.bf16 %v3951, %v3951
        %v4028 = vpack.c.bf16 %v3954, %v3954
        %v4029 = vpack.c.bf16 %v3957, %v3957
        %v4030 = vpack.c.bf16 %v3960, %v3960
        %v4031 = vpack.c.bf16 %v3963, %v3963
        %v4032 = vpack.c.bf16 %v3966, %v3966
        %v4033 = vpack.c.bf16 %v3969, %v3969
        %v4098 = vunpack.c.l.b16 %v3970
        %v4099 = vunpack.c.l.b16 %v3971
        %v4100 = vunpack.c.l.b16 %v3972
        %v4101 = vunpack.c.l.b16 %v3973
        %v4102 = vunpack.c.l.b16 %v3974
        %v4103 = vunpack.c.l.b16 %v3975
        %v4104 = vunpack.c.l.b16 %v3976
        %v4105 = vunpack.c.l.b16 %v3977
        %v4106 = vunpack.c.l.b16 %v3978
        %v4107 = vunpack.c.l.b16 %v3979
        %v4108 = vunpack.c.l.b16 %v3980
        %v4109 = vunpack.c.l.b16 %v3981
        %v4110 = vunpack.c.l.b16 %v3982
        %v4111 = vunpack.c.l.b16 %v3983
        %v4112 = vunpack.c.l.b16 %v3984
        %v4113 = vunpack.c.l.b16 %v3985
        %v4114 = vunpack.c.l.b16 %v3986
        %v4115 = vunpack.c.l.b16 %v3987
        %v4116 = vunpack.c.l.b16 %v3988
        %v4117 = vunpack.c.l.b16 %v3989
        %v4118 = vunpack.c.l.b16 %v3990
        %v4119 = vunpack.c.l.b16 %v3991
        %v4120 = vunpack.c.l.b16 %v3992
        %v4121 = vunpack.c.l.b16 %v3993
        %v4122 = vunpack.c.l.b16 %v3994
        %v4123 = vunpack.c.l.b16 %v3995
        %v4124 = vunpack.c.l.b16 %v3996
        %v4125 = vunpack.c.l.b16 %v3997
        %v4126 = vunpack.c.l.b16 %v3998
        %v4127 = vunpack.c.l.b16 %v3999
        %v4128 = vunpack.c.l.b16 %v4000
        %v4129 = vunpack.c.l.b16 %v4001
        %v4130 = vunpack.c.l.b16 %v4002
        %v4131 = vunpack.c.l.b16 %v4003
        %v4132 = vunpack.c.l.b16 %v4004
        %v4133 = vunpack.c.l.b16 %v4005
        %v4134 = vunpack.c.l.b16 %v4006
        %v4135 = vunpack.c.l.b16 %v4007
        %v4136 = vunpack.c.l.b16 %v4008
        %v4137 = vunpack.c.l.b16 %v4009
        %v4138 = vunpack.c.l.b16 %v4010
        %v4139 = vunpack.c.l.b16 %v4011
        %v4140 = vunpack.c.l.b16 %v4012
        %v4141 = vunpack.c.l.b16 %v4013
        %v4142 = vunpack.c.l.b16 %v4014
        %v4143 = vunpack.c.l.b16 %v4015
        %v4144 = vunpack.c.l.b16 %v4016
        %v4145 = vunpack.c.l.b16 %v4017
        %v4146 = vunpack.c.l.b16 %v4018
        %v4147 = vunpack.c.l.b16 %v4019
        %v4148 = vunpack.c.l.b16 %v4020
        %v4149 = vunpack.c.l.b16 %v4021
        %v4150 = vunpack.c.l.b16 %v4022
        %v4151 = vunpack.c.l.b16 %v4023
        %v4152 = vunpack.c.l.b16 %v4024
        %v4153 = vunpack.c.l.b16 %v4025
        %v4154 = vunpack.c.l.b16 %v4026
        %v4155 = vunpack.c.l.b16 %v4027
        %v4156 = vunpack.c.l.b16 %v4028
        %v4157 = vunpack.c.l.b16 %v4029
        %v4158 = vunpack.c.l.b16 %v4030
        %v4159 = vunpack.c.l.b16 %v4031
        %v4160 = vunpack.c.l.b16 %v4032
        %v4161 = vunpack.c.l.b16 %v4033
        %v4162 = vperm.slane %v4098, %v2399
        %v4163 = vperm.slane %v4099, %v2401
        %v4164 = vsel %vm2403, %v4163, %v4162
        %v4165 = vperm.slane %v4100, %v2405
        %v4166 = vsel %vm2407, %v4165, %v4164
        %v4167 = vperm.slane %v4101, %v2409
        %v4168 = vsel %vm2411, %v4167, %v4166
        %v4169 = vperm.slane %v4102, %v2399
        %v4170 = vperm.slane %v4103, %v2401
        %v4171 = vsel %vm2403, %v4170, %v4169
        %v4172 = vperm.slane %v4104, %v2405
        %v4173 = vsel %vm2407, %v4172, %v4171
        %v4174 = vperm.slane %v4105, %v2409
        %v4175 = vsel %vm2411, %v4174, %v4173
        %v4176 = vperm.slane %v4106, %v2399
        %v4177 = vperm.slane %v4107, %v2401
        %v4178 = vsel %vm2403, %v4177, %v4176
        %v4179 = vperm.slane %v4108, %v2405
        %v4180 = vsel %vm2407, %v4179, %v4178
        %v4181 = vperm.slane %v4109, %v2409
        %v4182 = vsel %vm2411, %v4181, %v4180
        %v4183 = vperm.slane %v4110, %v2399
        %v4184 = vperm.slane %v4111, %v2401
        %v4185 = vsel %vm2403, %v4184, %v4183
        %v4186 = vperm.slane %v4112, %v2405
        %v4187 = vsel %vm2407, %v4186, %v4185
        %v4188 = vperm.slane %v4113, %v2409
        %v4189 = vsel %vm2411, %v4188, %v4187
        %v4190 = vperm.slane %v4114, %v2399
        %v4191 = vperm.slane %v4115, %v2401
        %v4192 = vsel %vm2403, %v4191, %v4190
        %v4193 = vperm.slane %v4116, %v2405
        %v4194 = vsel %vm2407, %v4193, %v4192
        %v4195 = vperm.slane %v4117, %v2409
        %v4196 = vsel %vm2411, %v4195, %v4194
        %v4197 = vperm.slane %v4118, %v2399
        %v4198 = vperm.slane %v4119, %v2401
        %v4199 = vsel %vm2403, %v4198, %v4197
        %v4200 = vperm.slane %v4120, %v2405
        %v4201 = vsel %vm2407, %v4200, %v4199
        %v4202 = vperm.slane %v4121, %v2409
        %v4203 = vsel %vm2411, %v4202, %v4201
        %v4204 = vperm.slane %v4122, %v2399
        %v4205 = vperm.slane %v4123, %v2401
        %v4206 = vsel %vm2403, %v4205, %v4204
        %v4207 = vperm.slane %v4124, %v2405
        %v4208 = vsel %vm2407, %v4207, %v4206
        %v4209 = vperm.slane %v4125, %v2409
        %v4210 = vsel %vm2411, %v4209, %v4208
        %v4211 = vperm.slane %v4126, %v2399
        %v4212 = vperm.slane %v4127, %v2401
        %v4213 = vsel %vm2403, %v4212, %v4211
        %v4214 = vperm.slane %v4128, %v2405
        %v4215 = vsel %vm2407, %v4214, %v4213
        %v4216 = vperm.slane %v4129, %v2409
        %v4217 = vsel %vm2411, %v4216, %v4215
        %v4218 = vperm.slane %v4130, %v2399
        %v4219 = vperm.slane %v4131, %v2401
        %v4220 = vsel %vm2403, %v4219, %v4218
        %v4221 = vperm.slane %v4132, %v2405
        %v4222 = vsel %vm2407, %v4221, %v4220
        %v4223 = vperm.slane %v4133, %v2409
        %v4224 = vsel %vm2411, %v4223, %v4222
        %v4225 = vperm.slane %v4134, %v2399
        %v4226 = vperm.slane %v4135, %v2401
        %v4227 = vsel %vm2403, %v4226, %v4225
        %v4228 = vperm.slane %v4136, %v2405
        %v4229 = vsel %vm2407, %v4228, %v4227
        %v4230 = vperm.slane %v4137, %v2409
        %v4231 = vsel %vm2411, %v4230, %v4229
        %v4232 = vperm.slane %v4138, %v2399
        %v4233 = vperm.slane %v4139, %v2401
        %v4234 = vsel %vm2403, %v4233, %v4232
        %v4235 = vperm.slane %v4140, %v2405
        %v4236 = vsel %vm2407, %v4235, %v4234
        %v4237 = vperm.slane %v4141, %v2409
        %v4238 = vsel %vm2411, %v4237, %v4236
        %v4239 = vperm.slane %v4142, %v2399
        %v4240 = vperm.slane %v4143, %v2401
        %v4241 = vsel %vm2403, %v4240, %v4239
        %v4242 = vperm.slane %v4144, %v2405
        %v4243 = vsel %vm2407, %v4242, %v4241
        %v4244 = vperm.slane %v4145, %v2409
        %v4245 = vsel %vm2411, %v4244, %v4243
        %v4246 = vperm.slane %v4146, %v2399
        %v4247 = vperm.slane %v4147, %v2401
        %v4248 = vsel %vm2403, %v4247, %v4246
        %v4249 = vperm.slane %v4148, %v2405
        %v4250 = vsel %vm2407, %v4249, %v4248
        %v4251 = vperm.slane %v4149, %v2409
        %v4252 = vsel %vm2411, %v4251, %v4250
        %v4253 = vperm.slane %v4150, %v2399
        %v4254 = vperm.slane %v4151, %v2401
        %v4255 = vsel %vm2403, %v4254, %v4253
        %v4256 = vperm.slane %v4152, %v2405
        %v4257 = vsel %vm2407, %v4256, %v4255
        %v4258 = vperm.slane %v4153, %v2409
        %v4259 = vsel %vm2411, %v4258, %v4257
        %v4260 = vperm.slane %v4154, %v2399
        %v4261 = vperm.slane %v4155, %v2401
        %v4262 = vsel %vm2403, %v4261, %v4260
        %v4263 = vperm.slane %v4156, %v2405
        %v4264 = vsel %vm2407, %v4263, %v4262
        %v4265 = vperm.slane %v4157, %v2409
        %v4266 = vsel %vm2411, %v4265, %v4264
        %v4267 = vperm.slane %v4158, %v2399
        %v4268 = vperm.slane %v4159, %v2401
        %v4269 = vsel %vm2403, %v4268, %v4267
        %v4270 = vperm.slane %v4160, %v2405
        %v4271 = vsel %vm2407, %v4270, %v4269
        %v4272 = vperm.slane %v4161, %v2409
        %v4273 = vsel %vm2411, %v4272, %v4271
        %v4274 = vsel %vm2518, %v4175, %v4168
        %v4275 = vsel %vm2520, %v4182, %v4274
        %v4276 = vsel %vm2522, %v4189, %v4275
        %v4277 = vsel %vm2524, %v4196, %v4276
        %v4278 = vsel %vm2526, %v4203, %v4277
        %v4279 = vsel %vm2528, %v4210, %v4278
        %v4280 = vsel %vm2530, %v4217, %v4279
        %v4281 = vsel %vm2518, %v4231, %v4224
        %v4282 = vsel %vm2520, %v4238, %v4281
        %v4283 = vsel %vm2522, %v4245, %v4282
        %v4284 = vsel %vm2524, %v4252, %v4283
        %v4285 = vsel %vm2526, %v4259, %v4284
        %v4286 = vsel %vm2528, %v4266, %v4285
        %v4287 = vsel %vm2530, %v4273, %v4286
        %v4288 = vpack.c.b16 %v4280, %v4280
        %v4289 = vpack.c.b16 %v4287, %v4287
        %s4292 = scalar_lea.vmem %s265, 24 [#allocation8]
        %4293 = vst.msk [vmem:[%s4292] sm:$0xf] %vm2543, %v4288
        %4294 = vst.msk [vmem:[%s4292 + $0x4] sm:$0xf] %vm2543, %v4289
        %s4295 = sand.u32 %s135, 1
        %s4296 = scalar_lea.sflag [#allocation4], %s4295
        %s4297 = sand.u32 %s135, 1
        %s4298 = smul.addr %s4297, 32
        %s4299 = scalar_lea.vmem [#allocation8], %s4298
        // Predicated region
        $region49: #{tpu_custom_call.1} parent=35 // pred_check
          %p4300 = pneg %p145
        $region50: #{tpu_custom_call.1} parent=35 // pred_check_branch
          %4302 = sbr.rel (%p4300) target = $region52
        $region51: #{tpu_custom_call.1} parent=35 // pred_region
          #allocation10 [shape = 'u32[6]{0}', space=smem, size = 0x18, scoped, tag = 'DMA stride descriptor']
          %s4303 = smul.u32 2, %s27
          %4305 = vsyncadd %s4296, 0
          %s4306 = smul.addr %s26, 16
          %s4307 = sadd.s32 %s4303, %s4306
          %s4308 = smul.addr %s4307, 4
          %s4309 = scalar_lea.hbm %s4, %s4308
          %s4311 = sshll.u32 1, 14
          %s4312 = sxor.u32 4294967295, %s4311
          %s4315 = sshll.u32 7, 18
          %s4316 = sxor.u32 4294967295, %s4315
          %s4317 = sand.u32 0, %s4316
          %s4319 = sor.u32 %s4317, 0
          %s4320 = sshll.u32 %s4299, 4
          %s4321 = int_to_ptr.vmem [resolvable:$true] %s4320
          %s4322 = sshll.u32 %s4309, 4
          %s4323 = int_to_ptr.hbm [resolvable:$true] %s4322
          %4329 = sst [smem:[#allocation10]] 128
          %s4330 = scalar_lea.smem [#allocation10], 1
          %4331 = sst [smem:[%s4330]] 256
          %s4332 = scalar_lea.smem [#allocation10], 2
          %4333 = sst [smem:[%s4332]] 2
          %s4334 = scalar_lea.smem [#allocation10], 3
          %4335 = sst [smem:[%s4334]] 64
          %s4336 = scalar_lea.smem [#allocation10], 4
          %4337 = sst [smem:[%s4336]] 64
          %s4338 = scalar_lea.smem [#allocation10], 5
          %4339 = sst [smem:[%s4338]] 4
          %4341 = dma.general %s4321, 512, %s4323, %s4296, [#allocation9], [#allocation10], %s4319, 0
        $region52: #{tpu_custom_call.1} parent=35 // pred_fallthru
          _
      $region36: #{tpu_custom_call.1} parent=5 // pred_fallthru
        _
      %p4342 = scmp.le.s32.totalorder 2, %s17
      // Predicated region
      $region53: #{tpu_custom_call.1} parent=5 // pred_check
        %p4343 = pneg %p4342
      $region54: #{tpu_custom_call.1} parent=5 // pred_check_branch
        %4345 = sbr.rel (%p4343) target = $region56
      $region55: #{tpu_custom_call.1} parent=5 // pred_region
        %s4346 = ssub.s32 %s17, 2
        // Predicated region
        $region57: #{tpu_custom_call.1} parent=55 // pred_check
          %p4347 = pneg %p151
        $region58: #{tpu_custom_call.1} parent=55 // pred_check_branch
          %4349 = sbr.rel (%p4347) target = $region60
        $region59: #{tpu_custom_call.1} parent=55 // pred_region
          %s4350 = sand.u32 %s136, 1
          %s4351 = scalar_lea.sflag [#allocation4], %s4350
          %s4352 = sand.u32 %s136, 1
          %s4353 = smul.addr %s4352, 32
          %s4354 = scalar_lea.vmem [#allocation8], %s4353
          %4356 = dma.done %s4351, 512
        $region60: #{tpu_custom_call.1} parent=55 // pred_fallthru
          _
      $region56: #{tpu_custom_call.1} parent=5 // pred_fallthru
        _
    $region6: #{tpu_custom_call.1} parent=1 // loop_footer
      %s21 = sadd.s32 1, %s17
    $region7: #{tpu_custom_call.1} parent=1 // loop_footer_branch
      %16 = sbr.rel target = $region3
    $region8: #{tpu_custom_call.1} parent=1 // loop_exit
      _
    %4357 = vsyncpa [#allocation3], 1
    %s4358 = scalar_lea.sflag [#allocation3], 1
    %4359 = vsyncpa %s4358, 1
    %4360 = vsyncpa [#allocation6], 1
    %4361 = vsyncpa [#allocation4], 1
    %s4362 = scalar_lea.sflag [#allocation4], 1
    %4363 = vsyncpa %s4362, 1

</llo_original>
